<compile_context>
chip_gen: v7x
topology: tpu7x:2x2x1
jax: 0.10.0
libtpu: 0.0.40
codegen_flags: <defaults>
</compile_context>

<pallas_src>
import functools

import jax
import jax.numpy as jnp
from jax.experimental import pallas as pl
from jax.experimental.pallas import tpu as pltpu


# ---------------------------------------------------------------------------
# Fused kernel: per-chunk input projection + bidirectional LSTM recurrence.
# ---------------------------------------------------------------------------
def _bilstm_fused_kernel(xf_ref, xb_ref,
                         wih_f_ref, wih_b_ref,
                         whh_f_ref, whh_b_ref,
                         bf_ref, bb_ref,
                         of_ref, ob_ref,
                         gxf, gxb, hf, cf, hb, cb,
                         *, hidden_size, t_chunk, batch):
    H = hidden_size
    B = batch

    # Initialize recurrent state once (scratch persists across grid steps).
    @pl.when(pl.program_id(0) == 0)
    def _():
        hf[...] = jnp.zeros_like(hf)
        cf[...] = jnp.zeros_like(cf)
        hb[...] = jnp.zeros_like(hb)
        cb[...] = jnp.zeros_like(cb)

    # Hoisted, MXU-dense input projection for the whole chunk (both dirs),
    # bias folded in. Off the serial recurrent chain.
    gxf[...] = (jnp.dot(xf_ref[...], wih_f_ref[...],
                        preferred_element_type=jnp.float32) + bf_ref[...])
    gxb[...] = (jnp.dot(xb_ref[...], wih_b_ref[...],
                        preferred_element_type=jnp.float32) + bb_ref[...])

    w_f = whh_f_ref[...]
    w_b = whh_b_ref[...]

    def cell(gates_x, h, c, w_hh):
        # gates_x already contains x @ W_ih + b; only the recurrent matmul here.
        gates = gates_x + jnp.dot(h, w_hh, preferred_element_type=jnp.float32)
        i_g = jax.nn.sigmoid(gates[:, 0:H])
        f_g = jax.nn.sigmoid(gates[:, H:2 * H])
        g_g = jnp.tanh(gates[:, 2 * H:3 * H])
        o_g = jax.nn.sigmoid(gates[:, 3 * H:4 * H])
        c_new = f_g * c + i_g * g_g
        h_new = o_g * jnp.tanh(c_new)
        return h_new, c_new

    def body(k, carry):
        h_f, c_f, h_b, c_b = carry
        # Forward direction: local time k within this chunk.
        h_f, c_f = cell(gxf[pl.ds(k * B, B), :], h_f, c_f, w_f)
        of_ref[k] = h_f
        # Backward direction: local time t_chunk-1-k of the mirrored chunk.
        rk = t_chunk - 1 - k
        h_b, c_b = cell(gxb[pl.ds(rk * B, B), :], h_b, c_b, w_b)
        ob_ref[rk] = h_b
        return (h_f, c_f, h_b, c_b)

    h_f, c_f, h_b, c_b = jax.lax.fori_loop(
        0, t_chunk, body, (hf[...], cf[...], hb[...], cb[...]), unroll=True)

    # Carry recurrent state to the next grid step.
    hf[...] = h_f
    cf[...] = c_f
    hb[...] = h_b
    cb[...] = c_b


def _pick_time_chunk(T, B, cap=64):
    """Largest divisor d of T with d <= cap and (d*B) % 8 == 0 (sublane-clean
    block of the flattened (T*B, F) input). Falls back to T (full sequence)."""
    best = None
    for d in range(1, min(T, cap) + 1):
        if T % d == 0 and ((d * B) % 8 == 0 or d == T):
            best = d
    return best if best is not None else T


def rnn_sequential_encoder(x, params, hidden_size):
    """x: (T, B, F) float32 -> (T, B, 2*hidden_size) float32."""
    T, B, F = x.shape
    H = hidden_size
    wih_f, wih_b, whh_f, whh_b, b_f, b_b = params

    tc = _pick_time_chunk(T, B)          # timesteps per grid step
    G = T // tc                          # number of sequential chunks

    x2d = x.reshape(T * B, F)            # flattened time-major input

    kernel = functools.partial(_bilstm_fused_kernel,
                               hidden_size=H, t_chunk=tc, batch=B)

    out_fwd, out_bwd = pl.pallas_call(
        kernel,
        out_shape=(jax.ShapeDtypeStruct((T, B, H), jnp.float32),
                   jax.ShapeDtypeStruct((T, B, H), jnp.float32)),
        grid_spec=pltpu.PrefetchScalarGridSpec(
            num_scalar_prefetch=0,
            grid=(G,),
            in_specs=[
                # forward-direction input rows: chunk g in natural time order
                pl.BlockSpec((tc * B, F), lambda g: (g, 0)),
                # backward-direction input rows: mirrored chunk (time reversal
                # purely via index_map; local reversal happens in-kernel)
                pl.BlockSpec((tc * B, F), lambda g: (G - 1 - g, 0)),
                pl.BlockSpec((F, 4 * H), lambda g: (0, 0)),   # W_ih forward
                pl.BlockSpec((F, 4 * H), lambda g: (0, 0)),   # W_ih backward
                pl.BlockSpec((H, 4 * H), lambda g: (0, 0)),   # W_hh forward
                pl.BlockSpec((H, 4 * H), lambda g: (0, 0)),   # W_hh backward
                pl.BlockSpec((1, 4 * H), lambda g: (0, 0)),   # bias forward
                pl.BlockSpec((1, 4 * H), lambda g: (0, 0)),   # bias backward
            ],
            out_specs=[
                pl.BlockSpec((tc, B, H), lambda g: (g, 0, 0)),
                pl.BlockSpec((tc, B, H), lambda g: (G - 1 - g, 0, 0)),
            ],
            scratch_shapes=[
                pltpu.VMEM((tc * B, 4 * H), jnp.float32),  # fwd gate chunk
                pltpu.VMEM((tc * B, 4 * H), jnp.float32),  # bwd gate chunk
                pltpu.VMEM((B, H), jnp.float32),           # h forward
                pltpu.VMEM((B, H), jnp.float32),           # c forward
                pltpu.VMEM((B, H), jnp.float32),           # h backward
                pltpu.VMEM((B, H), jnp.float32),           # c backward
            ],
        ),
        compiler_params=pltpu.CompilerParams(
            dimension_semantics=("arbitrary",)),   # time chunks are sequential
    )(x2d, x2d, wih_f, wih_b, whh_f, whh_b, b_f, b_b)

    # PyTorch bidirectional output: concat [forward, backward] on feature axis.
    return jnp.concatenate([out_fwd, out_bwd], axis=-1)


def init_lstm_params(key, feature_size, hidden_size):
    """Deterministic PyTorch-style init: U(-1/sqrt(H), 1/sqrt(H)).

    Returns kernel-friendly (transposed) params:
      wih_f, wih_b: (F, 4H)   gate order (i, f, g, o) along columns
      whh_f, whh_b: (H, 4H)
      b_f,  b_b:    (1, 4H)   (b_ih + b_hh) per direction
    """
    H, F = hidden_size, feature_size
    bound = 1.0 / jnp.sqrt(jnp.float32(H))
    keys = jax.random.split(key, 8)

    def u(k, shape):
        return jax.random.uniform(k, shape, jnp.float32, -bound, bound)

    # PyTorch shapes: weight_ih (4H, F), weight_hh (4H, H), biases (4H,)
    w_ih_f = u(keys[0], (4 * H, F))
    w_hh_f = u(keys[1], (4 * H, H))
    b_ih_f = u(keys[2], (4 * H,))
    b_hh_f = u(keys[3], (4 * H,))
    w_ih_b = u(keys[4], (4 * H, F))
    w_hh_b = u(keys[5], (4 * H, H))
    b_ih_b = u(keys[6], (4 * H,))
    b_hh_b = u(keys[7], (4 * H,))

    return (w_ih_f.T, w_ih_b.T, w_hh_f.T, w_hh_b.T,
            (b_ih_f + b_hh_f)[None, :], (b_ih_b + b_hh_b)[None, :])


def _lstm_scan_ref(x, w_ih, w_hh, b, H):
    """Pure-JAX reference single-direction LSTM over (T, B, F)."""
    B = x.shape[1]

    def step(carry, xt):
        h, c = carry
        gates = xt @ w_ih + h @ w_hh + b
        i_g = jax.nn.sigmoid(gates[:, :H])
        f_g = jax.nn.sigmoid(gates[:, H:2 * H])
        g_g = jnp.tanh(gates[:, 2 * H:3 * H])
        o_g = jax.nn.sigmoid(gates[:, 3 * H:])
        c = f_g * c + i_g * g_g
        h = o_g * jnp.tanh(c)
        return (h, c), h

    init = (jnp.zeros((B, H), jnp.float32), jnp.zeros((B, H), jnp.float32))
    _, hs = jax.lax.scan(step, init, x)
    return hs


if __name__ == "__main__":
    # Small shapes consistent with the module's forward:
    #   x: (seq, batch, feature_size), hidden_size=32, bidirectional LSTM.
    T, B, F, H = 8, 2, 16, 32

    key = jax.random.PRNGKey(0)
    k_x, k_p = jax.random.split(key)
    x = jax.random.normal(k_x, (T, B, F), dtype=jnp.float32)
    params = init_lstm_params(k_p, feature_size=F, hidden_size=H)

    encoder = jax.jit(functools.partial(rnn_sequential_encoder, hidden_size=H))
    out = encoder(x, params)
    out = jax.block_until_ready(out)
    assert out.shape == (T, B, 2 * H)

    # Pure-JAX reference check (same math as nn.LSTM bidirectional, 1 layer).
    wih_f, wih_b, whh_f, whh_b, b_f, b_b = params
    ref_fwd = _lstm_scan_ref(x, wih_f, whh_f, b_f, H)
    ref_bwd = _lstm_scan_ref(x[::-1], wih_b, whh_b, b_b, H)[::-1]
    ref = jnp.concatenate([ref_fwd, ref_bwd], axis=-1)
    assert jnp.allclose(out, ref, atol=1e-5, rtol=1e-5), (
        float(jnp.max(jnp.abs(out - ref))))

    print("KERNEL_OK")
</pallas_src>

<mosaic_0001>
module attributes {stable_mosaic.version = 11 : i64} {
  func.func @_bilstm_fused_kernel(%arg0: i32, %arg1: memref<16x16xf32, #tpu.memory_space<vmem>>, %arg2: memref<16x16xf32, #tpu.memory_space<vmem>>, %arg3: memref<16x128xf32, #tpu.memory_space<vmem>>, %arg4: memref<16x128xf32, #tpu.memory_space<vmem>>, %arg5: memref<32x128xf32, #tpu.memory_space<vmem>>, %arg6: memref<32x128xf32, #tpu.memory_space<vmem>>, %arg7: memref<1x128xf32, #tpu.memory_space<vmem>>, %arg8: memref<1x128xf32, #tpu.memory_space<vmem>>, %arg9: memref<8x2x32xf32, #tpu.memory_space<vmem>>, %arg10: memref<8x2x32xf32, #tpu.memory_space<vmem>>, %arg11: memref<16x128xf32, #tpu.memory_space<vmem>>, %arg12: memref<16x128xf32, #tpu.memory_space<vmem>>, %arg13: memref<2x32xf32, #tpu.memory_space<vmem>>, %arg14: memref<2x32xf32, #tpu.memory_space<vmem>>, %arg15: memref<2x32xf32, #tpu.memory_space<vmem>>, %arg16: memref<2x32xf32, #tpu.memory_space<vmem>>) attributes {dimension_semantics = [#tpu.dimension_semantics<arbitrary>], iteration_bounds = array<i64: 1>, scalar_prefetch = 0 : i64, scratch_operands = 6 : i64, tpu.core_type = #tpu.core_type<tc>, window_params = [{transform_indices = @transform_0, window_bounds = array<i64: 16, 16>}, {transform_indices = @transform_1, window_bounds = array<i64: 16, 16>}, {pipeline_mode = #tpu.pipeline_mode<synchronous>, transform_indices = @transform_2, window_bounds = array<i64: 16, 128>}, {pipeline_mode = #tpu.pipeline_mode<synchronous>, transform_indices = @transform_3, window_bounds = array<i64: 16, 128>}, {pipeline_mode = #tpu.pipeline_mode<synchronous>, transform_indices = @transform_4, window_bounds = array<i64: 32, 128>}, {pipeline_mode = #tpu.pipeline_mode<synchronous>, transform_indices = @transform_5, window_bounds = array<i64: 32, 128>}, {pipeline_mode = #tpu.pipeline_mode<synchronous>, transform_indices = @transform_6, window_bounds = array<i64: 1, 128>}, {pipeline_mode = #tpu.pipeline_mode<synchronous>, transform_indices = @transform_7, window_bounds = array<i64: 1, 128>}, {transform_indices = @transform_8, window_bounds = array<i64: 8, 2, 32>}, {transform_indices = @transform_9, window_bounds = array<i64: 8, 2, 32>}]} {
    %c0_i32 = arith.constant 0 : i32
    %0 = arith.cmpi eq, %arg0, %c0_i32 : i32
    %1 = arith.extui %0 : i1 to i32
    %c0_i32_0 = arith.constant 0 : i32
    %2 = arith.cmpi ne, %1, %c0_i32_0 : i32
    scf.if %2 {
      %cst_174 = arith.constant 0.000000e+00 : f32
      %579 = vector.broadcast %cst_174 : f32 to vector<2x32xf32>
      %c0_175 = arith.constant 0 : index
      %c0_176 = arith.constant 0 : index
      %580 = vector.load %arg13[%c0_175, %c0_176] : memref<2x32xf32, #tpu.memory_space<vmem>>, vector<2x32xf32>
      tpu.vector_store %arg13[%c0_175, %c0_176], %579 {strides = array<i32>} : memref<2x32xf32, #tpu.memory_space<vmem>>, vector<2x32xf32>,
      %cst_177 = arith.constant 0.000000e+00 : f32
      %581 = vector.broadcast %cst_177 : f32 to vector<2x32xf32>
      %c0_178 = arith.constant 0 : index
      %c0_179 = arith.constant 0 : index
      %582 = vector.load %arg14[%c0_178, %c0_179] : memref<2x32xf32, #tpu.memory_space<vmem>>, vector<2x32xf32>
      tpu.vector_store %arg14[%c0_178, %c0_179], %581 {strides = array<i32>} : memref<2x32xf32, #tpu.memory_space<vmem>>, vector<2x32xf32>,
      %cst_180 = arith.constant 0.000000e+00 : f32
      %583 = vector.broadcast %cst_180 : f32 to vector<2x32xf32>
      %c0_181 = arith.constant 0 : index
      %c0_182 = arith.constant 0 : index
      %584 = vector.load %arg15[%c0_181, %c0_182] : memref<2x32xf32, #tpu.memory_space<vmem>>, vector<2x32xf32>
      tpu.vector_store %arg15[%c0_181, %c0_182], %583 {strides = array<i32>} : memref<2x32xf32, #tpu.memory_space<vmem>>, vector<2x32xf32>,
      %cst_183 = arith.constant 0.000000e+00 : f32
      %585 = vector.broadcast %cst_183 : f32 to vector<2x32xf32>
      %c0_184 = arith.constant 0 : index
      %c0_185 = arith.constant 0 : index
      %586 = vector.load %arg16[%c0_184, %c0_185] : memref<2x32xf32, #tpu.memory_space<vmem>>, vector<2x32xf32>
      tpu.vector_store %arg16[%c0_184, %c0_185], %585 {strides = array<i32>} : memref<2x32xf32, #tpu.memory_space<vmem>>, vector<2x32xf32>,
    } else {
    }
    %c0 = arith.constant 0 : index
    %c0_1 = arith.constant 0 : index
    %3 = vector.load %arg1[%c0, %c0_1] : memref<16x16xf32, #tpu.memory_space<vmem>>, vector<16x16xf32>
    %c0_2 = arith.constant 0 : index
    %c0_3 = arith.constant 0 : index
    %4 = vector.load %arg3[%c0_2, %c0_3] : memref<16x128xf32, #tpu.memory_space<vmem>>, vector<16x128xf32>
    %cst = arith.constant dense<0.000000e+00> : vector<16x128xf32>
    %5 = tpu.matmul %3, %4, %cst {dimension_numbers = #tpu.dot_dimension_numbers<[1], [0], [0], [1], [0, 0, 1, 1], [], []>} : vector<16x16xf32>, vector<16x128xf32>, vector<16x128xf32> -> vector<16x128xf32>
    %c0_4 = arith.constant 0 : index
    %c0_5 = arith.constant 0 : index
    %6 = vector.load %arg7[%c0_4, %c0_5] : memref<1x128xf32, #tpu.memory_space<vmem>>, vector<1x128xf32>
    %7 = vector.broadcast %6 : vector<1x128xf32> to vector<16x128xf32>
    %8 = arith.addf %5, %7 : vector<16x128xf32>
    %c0_6 = arith.constant 0 : index
    %c0_7 = arith.constant 0 : index
    %9 = vector.load %arg11[%c0_6, %c0_7] : memref<16x128xf32, #tpu.memory_space<vmem>>, vector<16x128xf32>
    tpu.vector_store %arg11[%c0_6, %c0_7], %8 {strides = array<i32>} : memref<16x128xf32, #tpu.memory_space<vmem>>, vector<16x128xf32>,
    %c0_8 = arith.constant 0 : index
    %c0_9 = arith.constant 0 : index
    %10 = vector.load %arg2[%c0_8, %c0_9] : memref<16x16xf32, #tpu.memory_space<vmem>>, vector<16x16xf32>
    %c0_10 = arith.constant 0 : index
    %c0_11 = arith.constant 0 : index
    %11 = vector.load %arg4[%c0_10, %c0_11] : memref<16x128xf32, #tpu.memory_space<vmem>>, vector<16x128xf32>
    %cst_12 = arith.constant dense<0.000000e+00> : vector<16x128xf32>
    %12 = tpu.matmul %10, %11, %cst_12 {dimension_numbers = #tpu.dot_dimension_numbers<[1], [0], [0], [1], [0, 0, 1, 1], [], []>} : vector<16x16xf32>, vector<16x128xf32>, vector<16x128xf32> -> vector<16x128xf32>
    %c0_13 = arith.constant 0 : index
    %c0_14 = arith.constant 0 : index
    %13 = vector.load %arg8[%c0_13, %c0_14] : memref<1x128xf32, #tpu.memory_space<vmem>>, vector<1x128xf32>
    %14 = vector.broadcast %13 : vector<1x128xf32> to vector<16x128xf32>
    %15 = arith.addf %12, %14 : vector<16x128xf32>
    %c0_15 = arith.constant 0 : index
    %c0_16 = arith.constant 0 : index
    %16 = vector.load %arg12[%c0_15, %c0_16] : memref<16x128xf32, #tpu.memory_space<vmem>>, vector<16x128xf32>
    tpu.vector_store %arg12[%c0_15, %c0_16], %15 {strides = array<i32>} : memref<16x128xf32, #tpu.memory_space<vmem>>, vector<16x128xf32>,
    %c0_17 = arith.constant 0 : index
    %c0_18 = arith.constant 0 : index
    %17 = vector.load %arg5[%c0_17, %c0_18] : memref<32x128xf32, #tpu.memory_space<vmem>>, vector<32x128xf32>
    %c0_19 = arith.constant 0 : index
    %c0_20 = arith.constant 0 : index
    %18 = vector.load %arg6[%c0_19, %c0_20] : memref<32x128xf32, #tpu.memory_space<vmem>>, vector<32x128xf32>
    %c0_21 = arith.constant 0 : index
    %c0_22 = arith.constant 0 : index
    %19 = vector.load %arg13[%c0_21, %c0_22] : memref<2x32xf32, #tpu.memory_space<vmem>>, vector<2x32xf32>
    %c0_23 = arith.constant 0 : index
    %c0_24 = arith.constant 0 : index
    %20 = vector.load %arg14[%c0_23, %c0_24] : memref<2x32xf32, #tpu.memory_space<vmem>>, vector<2x32xf32>
    %c0_25 = arith.constant 0 : index
    %c0_26 = arith.constant 0 : index
    %21 = vector.load %arg15[%c0_25, %c0_26] : memref<2x32xf32, #tpu.memory_space<vmem>>, vector<2x32xf32>
    %c0_27 = arith.constant 0 : index
    %c0_28 = arith.constant 0 : index
    %22 = vector.load %arg16[%c0_27, %c0_28] : memref<2x32xf32, #tpu.memory_space<vmem>>, vector<2x32xf32>
    %c0_i32_29 = arith.constant 0 : i32
    %c2_i32 = arith.constant 2 : i32
    %23 = arith.muli %c0_i32_29, %c2_i32 : i32
    %24 = arith.index_cast %23 : i32 to index
    %c0_30 = arith.constant 0 : index
    %25 = vector.load %arg11[%24, %c0_30] : memref<16x128xf32, #tpu.memory_space<vmem>>, vector<2x128xf32>
    %cst_31 = arith.constant dense<0.000000e+00> : vector<2x128xf32>
    %26 = tpu.matmul %19, %17, %cst_31 {dimension_numbers = #tpu.dot_dimension_numbers<[1], [0], [0], [1], [0, 0, 1, 1], [], []>} : vector<2x32xf32>, vector<32x128xf32>, vector<2x128xf32> -> vector<2x128xf32>
    %27 = arith.addf %25, %26 : vector<2x128xf32>
    %28 = vector.extract_strided_slice %27 {offsets = [0, 0], sizes = [2, 32], strides = [1, 1]} : vector<2x128xf32> to vector<2x32xf32>
    %29 = arith.negf %28 : vector<2x32xf32>
    %30 = math.exp %29 : vector<2x32xf32>
    %cst_32 = arith.constant 1.000000e+00 : f32
    %31 = vector.broadcast %cst_32 : f32 to vector<2x32xf32>
    %32 = arith.addf %31, %30 : vector<2x32xf32>
    %33 = arith.divf %31, %32 : vector<2x32xf32>
    %34 = vector.extract_strided_slice %27 {offsets = [0, 32], sizes = [2, 32], strides = [1, 1]} : vector<2x128xf32> to vector<2x32xf32>
    %35 = arith.negf %34 : vector<2x32xf32>
    %36 = math.exp %35 : vector<2x32xf32>
    %cst_33 = arith.constant 1.000000e+00 : f32
    %37 = vector.broadcast %cst_33 : f32 to vector<2x32xf32>
    %38 = arith.addf %37, %36 : vector<2x32xf32>
    %39 = arith.divf %37, %38 : vector<2x32xf32>
    %40 = vector.extract_strided_slice %27 {offsets = [0, 64], sizes = [2, 32], strides = [1, 1]} : vector<2x128xf32> to vector<2x32xf32>
    %41 = math.tanh %40 : vector<2x32xf32>
    %42 = vector.extract_strided_slice %27 {offsets = [0, 96], sizes = [2, 32], strides = [1, 1]} : vector<2x128xf32> to vector<2x32xf32>
    %43 = arith.negf %42 : vector<2x32xf32>
    %44 = math.exp %43 : vector<2x32xf32>
    %cst_34 = arith.constant 1.000000e+00 : f32
    %45 = vector.broadcast %cst_34 : f32 to vector<2x32xf32>
    %46 = arith.addf %45, %44 : vector<2x32xf32>
    %47 = arith.divf %45, %46 : vector<2x32xf32>
    %48 = arith.mulf %39, %20 : vector<2x32xf32>
    %49 = arith.mulf %33, %41 : vector<2x32xf32>
    %50 = arith.addf %48, %49 : vector<2x32xf32>
    %51 = math.tanh %50 : vector<2x32xf32>
    %52 = arith.mulf %47, %51 : vector<2x32xf32>
    %53 = arith.index_cast %c0_i32_29 : i32 to index
    %c0_35 = arith.constant 0 : index
    %c0_36 = arith.constant 0 : index
    %54 = vector.load %arg9[%53, %c0_35, %c0_36] : memref<8x2x32xf32, #tpu.memory_space<vmem>>, vector<1x2x32xf32>
    %55 = vector.shape_cast %54 : vector<1x2x32xf32> to vector<2x32xf32>
    %56 = vector.shape_cast %52 : vector<2x32xf32> to vector<1x2x32xf32>
    tpu.vector_store %arg9[%53, %c0_35, %c0_36], %56 {strides = array<i32>} : memref<8x2x32xf32, #tpu.memory_space<vmem>>, vector<1x2x32xf32>,
    %c7_i32 = arith.constant 7 : i32
    %57 = arith.subi %c7_i32, %c0_i32_29 : i32
    %c2_i32_37 = arith.constant 2 : i32
    %58 = arith.muli %57, %c2_i32_37 : i32
    %59 = arith.index_cast %58 : i32 to index
    %c0_38 = arith.constant 0 : index
    %60 = vector.load %arg12[%59, %c0_38] : memref<16x128xf32, #tpu.memory_space<vmem>>, vector<2x128xf32>
    %cst_39 = arith.constant dense<0.000000e+00> : vector<2x128xf32>
    %61 = tpu.matmul %21, %18, %cst_39 {dimension_numbers = #tpu.dot_dimension_numbers<[1], [0], [0], [1], [0, 0, 1, 1], [], []>} : vector<2x32xf32>, vector<32x128xf32>, vector<2x128xf32> -> vector<2x128xf32>
    %62 = arith.addf %60, %61 : vector<2x128xf32>
    %63 = vector.extract_strided_slice %62 {offsets = [0, 0], sizes = [2, 32], strides = [1, 1]} : vector<2x128xf32> to vector<2x32xf32>
    %64 = arith.negf %63 : vector<2x32xf32>
    %65 = math.exp %64 : vector<2x32xf32>
    %cst_40 = arith.constant 1.000000e+00 : f32
    %66 = vector.broadcast %cst_40 : f32 to vector<2x32xf32>
    %67 = arith.addf %66, %65 : vector<2x32xf32>
    %68 = arith.divf %66, %67 : vector<2x32xf32>
    %69 = vector.extract_strided_slice %62 {offsets = [0, 32], sizes = [2, 32], strides = [1, 1]} : vector<2x128xf32> to vector<2x32xf32>
    %70 = arith.negf %69 : vector<2x32xf32>
    %71 = math.exp %70 : vector<2x32xf32>
    %cst_41 = arith.constant 1.000000e+00 : f32
    %72 = vector.broadcast %cst_41 : f32 to vector<2x32xf32>
    %73 = arith.addf %72, %71 : vector<2x32xf32>
    %74 = arith.divf %72, %73 : vector<2x32xf32>
    %75 = vector.extract_strided_slice %62 {offsets = [0, 64], sizes = [2, 32], strides = [1, 1]} : vector<2x128xf32> to vector<2x32xf32>
    %76 = math.tanh %75 : vector<2x32xf32>
    %77 = vector.extract_strided_slice %62 {offsets = [0, 96], sizes = [2, 32], strides = [1, 1]} : vector<2x128xf32> to vector<2x32xf32>
    %78 = arith.negf %77 : vector<2x32xf32>
    %79 = math.exp %78 : vector<2x32xf32>
    %cst_42 = arith.constant 1.000000e+00 : f32
    %80 = vector.broadcast %cst_42 : f32 to vector<2x32xf32>
    %81 = arith.addf %80, %79 : vector<2x32xf32>
    %82 = arith.divf %80, %81 : vector<2x32xf32>
    %83 = arith.mulf %74, %22 : vector<2x32xf32>
    %84 = arith.mulf %68, %76 : vector<2x32xf32>
    %85 = arith.addf %83, %84 : vector<2x32xf32>
    %86 = math.tanh %85 : vector<2x32xf32>
    %87 = arith.mulf %82, %86 : vector<2x32xf32>
    %88 = arith.index_cast %57 : i32 to index
    %c0_43 = arith.constant 0 : index
    %c0_44 = arith.constant 0 : index
    %89 = vector.load %arg10[%88, %c0_43, %c0_44] : memref<8x2x32xf32, #tpu.memory_space<vmem>>, vector<1x2x32xf32>
    %90 = vector.shape_cast %89 : vector<1x2x32xf32> to vector<2x32xf32>
    %91 = vector.shape_cast %87 : vector<2x32xf32> to vector<1x2x32xf32>
    tpu.vector_store %arg10[%88, %c0_43, %c0_44], %91 {strides = array<i32>} : memref<8x2x32xf32, #tpu.memory_space<vmem>>, vector<1x2x32xf32>,
    %c1_i32 = arith.constant 1 : i32
    %c2_i32_45 = arith.constant 2 : i32
    %92 = arith.muli %c1_i32, %c2_i32_45 : i32
    %93 = arith.index_cast %92 : i32 to index
    %c0_46 = arith.constant 0 : index
    %94 = vector.load %arg11[%93, %c0_46] : memref<16x128xf32, #tpu.memory_space<vmem>>, vector<2x128xf32>
    %cst_47 = arith.constant dense<0.000000e+00> : vector<2x128xf32>
    %95 = tpu.matmul %52, %17, %cst_47 {dimension_numbers = #tpu.dot_dimension_numbers<[1], [0], [0], [1], [0, 0, 1, 1], [], []>} : vector<2x32xf32>, vector<32x128xf32>, vector<2x128xf32> -> vector<2x128xf32>
    %96 = arith.addf %94, %95 : vector<2x128xf32>
    %97 = vector.extract_strided_slice %96 {offsets = [0, 0], sizes = [2, 32], strides = [1, 1]} : vector<2x128xf32> to vector<2x32xf32>
    %98 = arith.negf %97 : vector<2x32xf32>
    %99 = math.exp %98 : vector<2x32xf32>
    %cst_48 = arith.constant 1.000000e+00 : f32
    %100 = vector.broadcast %cst_48 : f32 to vector<2x32xf32>
    %101 = arith.addf %100, %99 : vector<2x32xf32>
    %102 = arith.divf %100, %101 : vector<2x32xf32>
    %103 = vector.extract_strided_slice %96 {offsets = [0, 32], sizes = [2, 32], strides = [1, 1]} : vector<2x128xf32> to vector<2x32xf32>
    %104 = arith.negf %103 : vector<2x32xf32>
    %105 = math.exp %104 : vector<2x32xf32>
    %cst_49 = arith.constant 1.000000e+00 : f32
    %106 = vector.broadcast %cst_49 : f32 to vector<2x32xf32>
    %107 = arith.addf %106, %105 : vector<2x32xf32>
    %108 = arith.divf %106, %107 : vector<2x32xf32>
    %109 = vector.extract_strided_slice %96 {offsets = [0, 64], sizes = [2, 32], strides = [1, 1]} : vector<2x128xf32> to vector<2x32xf32>
    %110 = math.tanh %109 : vector<2x32xf32>
    %111 = vector.extract_strided_slice %96 {offsets = [0, 96], sizes = [2, 32], strides = [1, 1]} : vector<2x128xf32> to vector<2x32xf32>
    %112 = arith.negf %111 : vector<2x32xf32>
    %113 = math.exp %112 : vector<2x32xf32>
    %cst_50 = arith.constant 1.000000e+00 : f32
    %114 = vector.broadcast %cst_50 : f32 to vector<2x32xf32>
    %115 = arith.addf %114, %113 : vector<2x32xf32>
    %116 = arith.divf %114, %115 : vector<2x32xf32>
    %117 = arith.mulf %108, %50 : vector<2x32xf32>
    %118 = arith.mulf %102, %110 : vector<2x32xf32>
    %119 = arith.addf %117, %118 : vector<2x32xf32>
    %120 = math.tanh %119 : vector<2x32xf32>
    %121 = arith.mulf %116, %120 : vector<2x32xf32>
    %122 = arith.index_cast %c1_i32 : i32 to index
    %c0_51 = arith.constant 0 : index
    %c0_52 = arith.constant 0 : index
    %123 = vector.load %arg9[%122, %c0_51, %c0_52] : memref<8x2x32xf32, #tpu.memory_space<vmem>>, vector<1x2x32xf32>
    %124 = vector.shape_cast %123 : vector<1x2x32xf32> to vector<2x32xf32>
    %125 = vector.shape_cast %121 : vector<2x32xf32> to vector<1x2x32xf32>
    tpu.vector_store %arg9[%122, %c0_51, %c0_52], %125 {strides = array<i32>} : memref<8x2x32xf32, #tpu.memory_space<vmem>>, vector<1x2x32xf32>,
    %c7_i32_53 = arith.constant 7 : i32
    %126 = arith.subi %c7_i32_53, %c1_i32 : i32
    %c2_i32_54 = arith.constant 2 : i32
    %127 = arith.muli %126, %c2_i32_54 : i32
    %128 = arith.index_cast %127 : i32 to index
    %c0_55 = arith.constant 0 : index
    %129 = vector.load %arg12[%128, %c0_55] : memref<16x128xf32, #tpu.memory_space<vmem>>, vector<2x128xf32>
    %cst_56 = arith.constant dense<0.000000e+00> : vector<2x128xf32>
    %130 = tpu.matmul %87, %18, %cst_56 {dimension_numbers = #tpu.dot_dimension_numbers<[1], [0], [0], [1], [0, 0, 1, 1], [], []>} : vector<2x32xf32>, vector<32x128xf32>, vector<2x128xf32> -> vector<2x128xf32>
    %131 = arith.addf %129, %130 : vector<2x128xf32>
    %132 = vector.extract_strided_slice %131 {offsets = [0, 0], sizes = [2, 32], strides = [1, 1]} : vector<2x128xf32> to vector<2x32xf32>
    %133 = arith.negf %132 : vector<2x32xf32>
    %134 = math.exp %133 : vector<2x32xf32>
    %cst_57 = arith.constant 1.000000e+00 : f32
    %135 = vector.broadcast %cst_57 : f32 to vector<2x32xf32>
    %136 = arith.addf %135, %134 : vector<2x32xf32>
    %137 = arith.divf %135, %136 : vector<2x32xf32>
    %138 = vector.extract_strided_slice %131 {offsets = [0, 32], sizes = [2, 32], strides = [1, 1]} : vector<2x128xf32> to vector<2x32xf32>
    %139 = arith.negf %138 : vector<2x32xf32>
    %140 = math.exp %139 : vector<2x32xf32>
    %cst_58 = arith.constant 1.000000e+00 : f32
    %141 = vector.broadcast %cst_58 : f32 to vector<2x32xf32>
    %142 = arith.addf %141, %140 : vector<2x32xf32>
    %143 = arith.divf %141, %142 : vector<2x32xf32>
    %144 = vector.extract_strided_slice %131 {offsets = [0, 64], sizes = [2, 32], strides = [1, 1]} : vector<2x128xf32> to vector<2x32xf32>
    %145 = math.tanh %144 : vector<2x32xf32>
    %146 = vector.extract_strided_slice %131 {offsets = [0, 96], sizes = [2, 32], strides = [1, 1]} : vector<2x128xf32> to vector<2x32xf32>
    %147 = arith.negf %146 : vector<2x32xf32>
    %148 = math.exp %147 : vector<2x32xf32>
    %cst_59 = arith.constant 1.000000e+00 : f32
    %149 = vector.broadcast %cst_59 : f32 to vector<2x32xf32>
    %150 = arith.addf %149, %148 : vector<2x32xf32>
    %151 = arith.divf %149, %150 : vector<2x32xf32>
    %152 = arith.mulf %143, %85 : vector<2x32xf32>
    %153 = arith.mulf %137, %145 : vector<2x32xf32>
    %154 = arith.addf %152, %153 : vector<2x32xf32>
    %155 = math.tanh %154 : vector<2x32xf32>
    %156 = arith.mulf %151, %155 : vector<2x32xf32>
    %157 = arith.index_cast %126 : i32 to index
    %c0_60 = arith.constant 0 : index
    %c0_61 = arith.constant 0 : index
    %158 = vector.load %arg10[%157, %c0_60, %c0_61] : memref<8x2x32xf32, #tpu.memory_space<vmem>>, vector<1x2x32xf32>
    %159 = vector.shape_cast %158 : vector<1x2x32xf32> to vector<2x32xf32>
    %160 = vector.shape_cast %156 : vector<2x32xf32> to vector<1x2x32xf32>
    tpu.vector_store %arg10[%157, %c0_60, %c0_61], %160 {strides = array<i32>} : memref<8x2x32xf32, #tpu.memory_space<vmem>>, vector<1x2x32xf32>,
    %c2_i32_62 = arith.constant 2 : i32
    %c2_i32_63 = arith.constant 2 : i32
    %161 = arith.muli %c2_i32_62, %c2_i32_63 : i32
    %162 = arith.index_cast %161 : i32 to index
    %c0_64 = arith.constant 0 : index
    %163 = vector.load %arg11[%162, %c0_64] : memref<16x128xf32, #tpu.memory_space<vmem>>, vector<2x128xf32>
    %cst_65 = arith.constant dense<0.000000e+00> : vector<2x128xf32>
    %164 = tpu.matmul %121, %17, %cst_65 {dimension_numbers = #tpu.dot_dimension_numbers<[1], [0], [0], [1], [0, 0, 1, 1], [], []>} : vector<2x32xf32>, vector<32x128xf32>, vector<2x128xf32> -> vector<2x128xf32>
    %165 = arith.addf %163, %164 : vector<2x128xf32>
    %166 = vector.extract_strided_slice %165 {offsets = [0, 0], sizes = [2, 32], strides = [1, 1]} : vector<2x128xf32> to vector<2x32xf32>
    %167 = arith.negf %166 : vector<2x32xf32>
    %168 = math.exp %167 : vector<2x32xf32>
    %cst_66 = arith.constant 1.000000e+00 : f32
    %169 = vector.broadcast %cst_66 : f32 to vector<2x32xf32>
    %170 = arith.addf %169, %168 : vector<2x32xf32>
    %171 = arith.divf %169, %170 : vector<2x32xf32>
    %172 = vector.extract_strided_slice %165 {offsets = [0, 32], sizes = [2, 32], strides = [1, 1]} : vector<2x128xf32> to vector<2x32xf32>
    %173 = arith.negf %172 : vector<2x32xf32>
    %174 = math.exp %173 : vector<2x32xf32>
    %cst_67 = arith.constant 1.000000e+00 : f32
    %175 = vector.broadcast %cst_67 : f32 to vector<2x32xf32>
    %176 = arith.addf %175, %174 : vector<2x32xf32>
    %177 = arith.divf %175, %176 : vector<2x32xf32>
    %178 = vector.extract_strided_slice %165 {offsets = [0, 64], sizes = [2, 32], strides = [1, 1]} : vector<2x128xf32> to vector<2x32xf32>
    %179 = math.tanh %178 : vector<2x32xf32>
    %180 = vector.extract_strided_slice %165 {offsets = [0, 96], sizes = [2, 32], strides = [1, 1]} : vector<2x128xf32> to vector<2x32xf32>
    %181 = arith.negf %180 : vector<2x32xf32>
    %182 = math.exp %181 : vector<2x32xf32>
    %cst_68 = arith.constant 1.000000e+00 : f32
    %183 = vector.broadcast %cst_68 : f32 to vector<2x32xf32>
    %184 = arith.addf %183, %182 : vector<2x32xf32>
    %185 = arith.divf %183, %184 : vector<2x32xf32>
    %186 = arith.mulf %177, %119 : vector<2x32xf32>
    %187 = arith.mulf %171, %179 : vector<2x32xf32>
    %188 = arith.addf %186, %187 : vector<2x32xf32>
    %189 = math.tanh %188 : vector<2x32xf32>
    %190 = arith.mulf %185, %189 : vector<2x32xf32>
    %191 = arith.index_cast %c2_i32_62 : i32 to index
    %c0_69 = arith.constant 0 : index
    %c0_70 = arith.constant 0 : index
    %192 = vector.load %arg9[%191, %c0_69, %c0_70] : memref<8x2x32xf32, #tpu.memory_space<vmem>>, vector<1x2x32xf32>
    %193 = vector.shape_cast %192 : vector<1x2x32xf32> to vector<2x32xf32>
    %194 = vector.shape_cast %190 : vector<2x32xf32> to vector<1x2x32xf32>
    tpu.vector_store %arg9[%191, %c0_69, %c0_70], %194 {strides = array<i32>} : memref<8x2x32xf32, #tpu.memory_space<vmem>>, vector<1x2x32xf32>,
    %c7_i32_71 = arith.constant 7 : i32
    %195 = arith.subi %c7_i32_71, %c2_i32_62 : i32
    %c2_i32_72 = arith.constant 2 : i32
    %196 = arith.muli %195, %c2_i32_72 : i32
    %197 = arith.index_cast %196 : i32 to index
    %c0_73 = arith.constant 0 : index
    %198 = vector.load %arg12[%197, %c0_73] : memref<16x128xf32, #tpu.memory_space<vmem>>, vector<2x128xf32>
    %cst_74 = arith.constant dense<0.000000e+00> : vector<2x128xf32>
    %199 = tpu.matmul %156, %18, %cst_74 {dimension_numbers = #tpu.dot_dimension_numbers<[1], [0], [0], [1], [0, 0, 1, 1], [], []>} : vector<2x32xf32>, vector<32x128xf32>, vector<2x128xf32> -> vector<2x128xf32>
    %200 = arith.addf %198, %199 : vector<2x128xf32>
    %201 = vector.extract_strided_slice %200 {offsets = [0, 0], sizes = [2, 32], strides = [1, 1]} : vector<2x128xf32> to vector<2x32xf32>
    %202 = arith.negf %201 : vector<2x32xf32>
    %203 = math.exp %202 : vector<2x32xf32>
    %cst_75 = arith.constant 1.000000e+00 : f32
    %204 = vector.broadcast %cst_75 : f32 to vector<2x32xf32>
    %205 = arith.addf %204, %203 : vector<2x32xf32>
    %206 = arith.divf %204, %205 : vector<2x32xf32>
    %207 = vector.extract_strided_slice %200 {offsets = [0, 32], sizes = [2, 32], strides = [1, 1]} : vector<2x128xf32> to vector<2x32xf32>
    %208 = arith.negf %207 : vector<2x32xf32>
    %209 = math.exp %208 : vector<2x32xf32>
    %cst_76 = arith.constant 1.000000e+00 : f32
    %210 = vector.broadcast %cst_76 : f32 to vector<2x32xf32>
    %211 = arith.addf %210, %209 : vector<2x32xf32>
    %212 = arith.divf %210, %211 : vector<2x32xf32>
    %213 = vector.extract_strided_slice %200 {offsets = [0, 64], sizes = [2, 32], strides = [1, 1]} : vector<2x128xf32> to vector<2x32xf32>
    %214 = math.tanh %213 : vector<2x32xf32>
    %215 = vector.extract_strided_slice %200 {offsets = [0, 96], sizes = [2, 32], strides = [1, 1]} : vector<2x128xf32> to vector<2x32xf32>
    %216 = arith.negf %215 : vector<2x32xf32>
    %217 = math.exp %216 : vector<2x32xf32>
    %cst_77 = arith.constant 1.000000e+00 : f32
    %218 = vector.broadcast %cst_77 : f32 to vector<2x32xf32>
    %219 = arith.addf %218, %217 : vector<2x32xf32>
    %220 = arith.divf %218, %219 : vector<2x32xf32>
    %221 = arith.mulf %212, %154 : vector<2x32xf32>
    %222 = arith.mulf %206, %214 : vector<2x32xf32>
    %223 = arith.addf %221, %222 : vector<2x32xf32>
    %224 = math.tanh %223 : vector<2x32xf32>
    %225 = arith.mulf %220, %224 : vector<2x32xf32>
    %226 = arith.index_cast %195 : i32 to index
    %c0_78 = arith.constant 0 : index
    %c0_79 = arith.constant 0 : index
    %227 = vector.load %arg10[%226, %c0_78, %c0_79] : memref<8x2x32xf32, #tpu.memory_space<vmem>>, vector<1x2x32xf32>
    %228 = vector.shape_cast %227 : vector<1x2x32xf32> to vector<2x32xf32>
    %229 = vector.shape_cast %225 : vector<2x32xf32> to vector<1x2x32xf32>
    tpu.vector_store %arg10[%226, %c0_78, %c0_79], %229 {strides = array<i32>} : memref<8x2x32xf32, #tpu.memory_space<vmem>>, vector<1x2x32xf32>,
    %c3_i32 = arith.constant 3 : i32
    %c2_i32_80 = arith.constant 2 : i32
    %230 = arith.muli %c3_i32, %c2_i32_80 : i32
    %231 = arith.index_cast %230 : i32 to index
    %c0_81 = arith.constant 0 : index
    %232 = vector.load %arg11[%231, %c0_81] : memref<16x128xf32, #tpu.memory_space<vmem>>, vector<2x128xf32>
    %cst_82 = arith.constant dense<0.000000e+00> : vector<2x128xf32>
    %233 = tpu.matmul %190, %17, %cst_82 {dimension_numbers = #tpu.dot_dimension_numbers<[1], [0], [0], [1], [0, 0, 1, 1], [], []>} : vector<2x32xf32>, vector<32x128xf32>, vector<2x128xf32> -> vector<2x128xf32>
    %234 = arith.addf %232, %233 : vector<2x128xf32>
    %235 = vector.extract_strided_slice %234 {offsets = [0, 0], sizes = [2, 32], strides = [1, 1]} : vector<2x128xf32> to vector<2x32xf32>
    %236 = arith.negf %235 : vector<2x32xf32>
    %237 = math.exp %236 : vector<2x32xf32>
    %cst_83 = arith.constant 1.000000e+00 : f32
    %238 = vector.broadcast %cst_83 : f32 to vector<2x32xf32>
    %239 = arith.addf %238, %237 : vector<2x32xf32>
    %240 = arith.divf %238, %239 : vector<2x32xf32>
    %241 = vector.extract_strided_slice %234 {offsets = [0, 32], sizes = [2, 32], strides = [1, 1]} : vector<2x128xf32> to vector<2x32xf32>
    %242 = arith.negf %241 : vector<2x32xf32>
    %243 = math.exp %242 : vector<2x32xf32>
    %cst_84 = arith.constant 1.000000e+00 : f32
    %244 = vector.broadcast %cst_84 : f32 to vector<2x32xf32>
    %245 = arith.addf %244, %243 : vector<2x32xf32>
    %246 = arith.divf %244, %245 : vector<2x32xf32>
    %247 = vector.extract_strided_slice %234 {offsets = [0, 64], sizes = [2, 32], strides = [1, 1]} : vector<2x128xf32> to vector<2x32xf32>
    %248 = math.tanh %247 : vector<2x32xf32>
    %249 = vector.extract_strided_slice %234 {offsets = [0, 96], sizes = [2, 32], strides = [1, 1]} : vector<2x128xf32> to vector<2x32xf32>
    %250 = arith.negf %249 : vector<2x32xf32>
    %251 = math.exp %250 : vector<2x32xf32>
    %cst_85 = arith.constant 1.000000e+00 : f32
    %252 = vector.broadcast %cst_85 : f32 to vector<2x32xf32>
    %253 = arith.addf %252, %251 : vector<2x32xf32>
    %254 = arith.divf %252, %253 : vector<2x32xf32>
    %255 = arith.mulf %246, %188 : vector<2x32xf32>
    %256 = arith.mulf %240, %248 : vector<2x32xf32>
    %257 = arith.addf %255, %256 : vector<2x32xf32>
    %258 = math.tanh %257 : vector<2x32xf32>
    %259 = arith.mulf %254, %258 : vector<2x32xf32>
    %260 = arith.index_cast %c3_i32 : i32 to index
    %c0_86 = arith.constant 0 : index
    %c0_87 = arith.constant 0 : index
    %261 = vector.load %arg9[%260, %c0_86, %c0_87] : memref<8x2x32xf32, #tpu.memory_space<vmem>>, vector<1x2x32xf32>
    %262 = vector.shape_cast %261 : vector<1x2x32xf32> to vector<2x32xf32>
    %263 = vector.shape_cast %259 : vector<2x32xf32> to vector<1x2x32xf32>
    tpu.vector_store %arg9[%260, %c0_86, %c0_87], %263 {strides = array<i32>} : memref<8x2x32xf32, #tpu.memory_space<vmem>>, vector<1x2x32xf32>,
    %c7_i32_88 = arith.constant 7 : i32
    %264 = arith.subi %c7_i32_88, %c3_i32 : i32
    %c2_i32_89 = arith.constant 2 : i32
    %265 = arith.muli %264, %c2_i32_89 : i32
    %266 = arith.index_cast %265 : i32 to index
    %c0_90 = arith.constant 0 : index
    %267 = vector.load %arg12[%266, %c0_90] : memref<16x128xf32, #tpu.memory_space<vmem>>, vector<2x128xf32>
    %cst_91 = arith.constant dense<0.000000e+00> : vector<2x128xf32>
    %268 = tpu.matmul %225, %18, %cst_91 {dimension_numbers = #tpu.dot_dimension_numbers<[1], [0], [0], [1], [0, 0, 1, 1], [], []>} : vector<2x32xf32>, vector<32x128xf32>, vector<2x128xf32> -> vector<2x128xf32>
    %269 = arith.addf %267, %268 : vector<2x128xf32>
    %270 = vector.extract_strided_slice %269 {offsets = [0, 0], sizes = [2, 32], strides = [1, 1]} : vector<2x128xf32> to vector<2x32xf32>
    %271 = arith.negf %270 : vector<2x32xf32>
    %272 = math.exp %271 : vector<2x32xf32>
    %cst_92 = arith.constant 1.000000e+00 : f32
    %273 = vector.broadcast %cst_92 : f32 to vector<2x32xf32>
    %274 = arith.addf %273, %272 : vector<2x32xf32>
    %275 = arith.divf %273, %274 : vector<2x32xf32>
    %276 = vector.extract_strided_slice %269 {offsets = [0, 32], sizes = [2, 32], strides = [1, 1]} : vector<2x128xf32> to vector<2x32xf32>
    %277 = arith.negf %276 : vector<2x32xf32>
    %278 = math.exp %277 : vector<2x32xf32>
    %cst_93 = arith.constant 1.000000e+00 : f32
    %279 = vector.broadcast %cst_93 : f32 to vector<2x32xf32>
    %280 = arith.addf %279, %278 : vector<2x32xf32>
    %281 = arith.divf %279, %280 : vector<2x32xf32>
    %282 = vector.extract_strided_slice %269 {offsets = [0, 64], sizes = [2, 32], strides = [1, 1]} : vector<2x128xf32> to vector<2x32xf32>
    %283 = math.tanh %282 : vector<2x32xf32>
    %284 = vector.extract_strided_slice %269 {offsets = [0, 96], sizes = [2, 32], strides = [1, 1]} : vector<2x128xf32> to vector<2x32xf32>
    %285 = arith.negf %284 : vector<2x32xf32>
    %286 = math.exp %285 : vector<2x32xf32>
    %cst_94 = arith.constant 1.000000e+00 : f32
    %287 = vector.broadcast %cst_94 : f32 to vector<2x32xf32>
    %288 = arith.addf %287, %286 : vector<2x32xf32>
    %289 = arith.divf %287, %288 : vector<2x32xf32>
    %290 = arith.mulf %281, %223 : vector<2x32xf32>
    %291 = arith.mulf %275, %283 : vector<2x32xf32>
    %292 = arith.addf %290, %291 : vector<2x32xf32>
    %293 = math.tanh %292 : vector<2x32xf32>
    %294 = arith.mulf %289, %293 : vector<2x32xf32>
    %295 = arith.index_cast %264 : i32 to index
    %c0_95 = arith.constant 0 : index
    %c0_96 = arith.constant 0 : index
    %296 = vector.load %arg10[%295, %c0_95, %c0_96] : memref<8x2x32xf32, #tpu.memory_space<vmem>>, vector<1x2x32xf32>
    %297 = vector.shape_cast %296 : vector<1x2x32xf32> to vector<2x32xf32>
    %298 = vector.shape_cast %294 : vector<2x32xf32> to vector<1x2x32xf32>
    tpu.vector_store %arg10[%295, %c0_95, %c0_96], %298 {strides = array<i32>} : memref<8x2x32xf32, #tpu.memory_space<vmem>>, vector<1x2x32xf32>,
    %c4_i32 = arith.constant 4 : i32
    %c2_i32_97 = arith.constant 2 : i32
    %299 = arith.muli %c4_i32, %c2_i32_97 : i32
    %300 = arith.index_cast %299 : i32 to index
    %c0_98 = arith.constant 0 : index
    %301 = vector.load %arg11[%300, %c0_98] : memref<16x128xf32, #tpu.memory_space<vmem>>, vector<2x128xf32>
    %cst_99 = arith.constant dense<0.000000e+00> : vector<2x128xf32>
    %302 = tpu.matmul %259, %17, %cst_99 {dimension_numbers = #tpu.dot_dimension_numbers<[1], [0], [0], [1], [0, 0, 1, 1], [], []>} : vector<2x32xf32>, vector<32x128xf32>, vector<2x128xf32> -> vector<2x128xf32>
    %303 = arith.addf %301, %302 : vector<2x128xf32>
    %304 = vector.extract_strided_slice %303 {offsets = [0, 0], sizes = [2, 32], strides = [1, 1]} : vector<2x128xf32> to vector<2x32xf32>
    %305 = arith.negf %304 : vector<2x32xf32>
    %306 = math.exp %305 : vector<2x32xf32>
    %cst_100 = arith.constant 1.000000e+00 : f32
    %307 = vector.broadcast %cst_100 : f32 to vector<2x32xf32>
    %308 = arith.addf %307, %306 : vector<2x32xf32>
    %309 = arith.divf %307, %308 : vector<2x32xf32>
    %310 = vector.extract_strided_slice %303 {offsets = [0, 32], sizes = [2, 32], strides = [1, 1]} : vector<2x128xf32> to vector<2x32xf32>
    %311 = arith.negf %310 : vector<2x32xf32>
    %312 = math.exp %311 : vector<2x32xf32>
    %cst_101 = arith.constant 1.000000e+00 : f32
    %313 = vector.broadcast %cst_101 : f32 to vector<2x32xf32>
    %314 = arith.addf %313, %312 : vector<2x32xf32>
    %315 = arith.divf %313, %314 : vector<2x32xf32>
    %316 = vector.extract_strided_slice %303 {offsets = [0, 64], sizes = [2, 32], strides = [1, 1]} : vector<2x128xf32> to vector<2x32xf32>
    %317 = math.tanh %316 : vector<2x32xf32>
    %318 = vector.extract_strided_slice %303 {offsets = [0, 96], sizes = [2, 32], strides = [1, 1]} : vector<2x128xf32> to vector<2x32xf32>
    %319 = arith.negf %318 : vector<2x32xf32>
    %320 = math.exp %319 : vector<2x32xf32>
    %cst_102 = arith.constant 1.000000e+00 : f32
    %321 = vector.broadcast %cst_102 : f32 to vector<2x32xf32>
    %322 = arith.addf %321, %320 : vector<2x32xf32>
    %323 = arith.divf %321, %322 : vector<2x32xf32>
    %324 = arith.mulf %315, %257 : vector<2x32xf32>
    %325 = arith.mulf %309, %317 : vector<2x32xf32>
    %326 = arith.addf %324, %325 : vector<2x32xf32>
    %327 = math.tanh %326 : vector<2x32xf32>
    %328 = arith.mulf %323, %327 : vector<2x32xf32>
    %329 = arith.index_cast %c4_i32 : i32 to index
    %c0_103 = arith.constant 0 : index
    %c0_104 = arith.constant 0 : index
    %330 = vector.load %arg9[%329, %c0_103, %c0_104] : memref<8x2x32xf32, #tpu.memory_space<vmem>>, vector<1x2x32xf32>
    %331 = vector.shape_cast %330 : vector<1x2x32xf32> to vector<2x32xf32>
    %332 = vector.shape_cast %328 : vector<2x32xf32> to vector<1x2x32xf32>
    tpu.vector_store %arg9[%329, %c0_103, %c0_104], %332 {strides = array<i32>} : memref<8x2x32xf32, #tpu.memory_space<vmem>>, vector<1x2x32xf32>,
    %c7_i32_105 = arith.constant 7 : i32
    %333 = arith.subi %c7_i32_105, %c4_i32 : i32
    %c2_i32_106 = arith.constant 2 : i32
    %334 = arith.muli %333, %c2_i32_106 : i32
    %335 = arith.index_cast %334 : i32 to index
    %c0_107 = arith.constant 0 : index
    %336 = vector.load %arg12[%335, %c0_107] : memref<16x128xf32, #tpu.memory_space<vmem>>, vector<2x128xf32>
    %cst_108 = arith.constant dense<0.000000e+00> : vector<2x128xf32>
    %337 = tpu.matmul %294, %18, %cst_108 {dimension_numbers = #tpu.dot_dimension_numbers<[1], [0], [0], [1], [0, 0, 1, 1], [], []>} : vector<2x32xf32>, vector<32x128xf32>, vector<2x128xf32> -> vector<2x128xf32>
    %338 = arith.addf %336, %337 : vector<2x128xf32>
    %339 = vector.extract_strided_slice %338 {offsets = [0, 0], sizes = [2, 32], strides = [1, 1]} : vector<2x128xf32> to vector<2x32xf32>
    %340 = arith.negf %339 : vector<2x32xf32>
    %341 = math.exp %340 : vector<2x32xf32>
    %cst_109 = arith.constant 1.000000e+00 : f32
    %342 = vector.broadcast %cst_109 : f32 to vector<2x32xf32>
    %343 = arith.addf %342, %341 : vector<2x32xf32>
    %344 = arith.divf %342, %343 : vector<2x32xf32>
    %345 = vector.extract_strided_slice %338 {offsets = [0, 32], sizes = [2, 32], strides = [1, 1]} : vector<2x128xf32> to vector<2x32xf32>
    %346 = arith.negf %345 : vector<2x32xf32>
    %347 = math.exp %346 : vector<2x32xf32>
    %cst_110 = arith.constant 1.000000e+00 : f32
    %348 = vector.broadcast %cst_110 : f32 to vector<2x32xf32>
    %349 = arith.addf %348, %347 : vector<2x32xf32>
    %350 = arith.divf %348, %349 : vector<2x32xf32>
    %351 = vector.extract_strided_slice %338 {offsets = [0, 64], sizes = [2, 32], strides = [1, 1]} : vector<2x128xf32> to vector<2x32xf32>
    %352 = math.tanh %351 : vector<2x32xf32>
    %353 = vector.extract_strided_slice %338 {offsets = [0, 96], sizes = [2, 32], strides = [1, 1]} : vector<2x128xf32> to vector<2x32xf32>
    %354 = arith.negf %353 : vector<2x32xf32>
    %355 = math.exp %354 : vector<2x32xf32>
    %cst_111 = arith.constant 1.000000e+00 : f32
    %356 = vector.broadcast %cst_111 : f32 to vector<2x32xf32>
    %357 = arith.addf %356, %355 : vector<2x32xf32>
    %358 = arith.divf %356, %357 : vector<2x32xf32>
    %359 = arith.mulf %350, %292 : vector<2x32xf32>
    %360 = arith.mulf %344, %352 : vector<2x32xf32>
    %361 = arith.addf %359, %360 : vector<2x32xf32>
    %362 = math.tanh %361 : vector<2x32xf32>
    %363 = arith.mulf %358, %362 : vector<2x32xf32>
    %364 = arith.index_cast %333 : i32 to index
    %c0_112 = arith.constant 0 : index
    %c0_113 = arith.constant 0 : index
    %365 = vector.load %arg10[%364, %c0_112, %c0_113] : memref<8x2x32xf32, #tpu.memory_space<vmem>>, vector<1x2x32xf32>
    %366 = vector.shape_cast %365 : vector<1x2x32xf32> to vector<2x32xf32>
    %367 = vector.shape_cast %363 : vector<2x32xf32> to vector<1x2x32xf32>
    tpu.vector_store %arg10[%364, %c0_112, %c0_113], %367 {strides = array<i32>} : memref<8x2x32xf32, #tpu.memory_space<vmem>>, vector<1x2x32xf32>,
    %c5_i32 = arith.constant 5 : i32
    %c2_i32_114 = arith.constant 2 : i32
    %368 = arith.muli %c5_i32, %c2_i32_114 : i32
    %369 = arith.index_cast %368 : i32 to index
    %c0_115 = arith.constant 0 : index
    %370 = vector.load %arg11[%369, %c0_115] : memref<16x128xf32, #tpu.memory_space<vmem>>, vector<2x128xf32>
    %cst_116 = arith.constant dense<0.000000e+00> : vector<2x128xf32>
    %371 = tpu.matmul %328, %17, %cst_116 {dimension_numbers = #tpu.dot_dimension_numbers<[1], [0], [0], [1], [0, 0, 1, 1], [], []>} : vector<2x32xf32>, vector<32x128xf32>, vector<2x128xf32> -> vector<2x128xf32>
    %372 = arith.addf %370, %371 : vector<2x128xf32>
    %373 = vector.extract_strided_slice %372 {offsets = [0, 0], sizes = [2, 32], strides = [1, 1]} : vector<2x128xf32> to vector<2x32xf32>
    %374 = arith.negf %373 : vector<2x32xf32>
    %375 = math.exp %374 : vector<2x32xf32>
    %cst_117 = arith.constant 1.000000e+00 : f32
    %376 = vector.broadcast %cst_117 : f32 to vector<2x32xf32>
    %377 = arith.addf %376, %375 : vector<2x32xf32>
    %378 = arith.divf %376, %377 : vector<2x32xf32>
    %379 = vector.extract_strided_slice %372 {offsets = [0, 32], sizes = [2, 32], strides = [1, 1]} : vector<2x128xf32> to vector<2x32xf32>
    %380 = arith.negf %379 : vector<2x32xf32>
    %381 = math.exp %380 : vector<2x32xf32>
    %cst_118 = arith.constant 1.000000e+00 : f32
    %382 = vector.broadcast %cst_118 : f32 to vector<2x32xf32>
    %383 = arith.addf %382, %381 : vector<2x32xf32>
    %384 = arith.divf %382, %383 : vector<2x32xf32>
    %385 = vector.extract_strided_slice %372 {offsets = [0, 64], sizes = [2, 32], strides = [1, 1]} : vector<2x128xf32> to vector<2x32xf32>
    %386 = math.tanh %385 : vector<2x32xf32>
    %387 = vector.extract_strided_slice %372 {offsets = [0, 96], sizes = [2, 32], strides = [1, 1]} : vector<2x128xf32> to vector<2x32xf32>
    %388 = arith.negf %387 : vector<2x32xf32>
    %389 = math.exp %388 : vector<2x32xf32>
    %cst_119 = arith.constant 1.000000e+00 : f32
    %390 = vector.broadcast %cst_119 : f32 to vector<2x32xf32>
    %391 = arith.addf %390, %389 : vector<2x32xf32>
    %392 = arith.divf %390, %391 : vector<2x32xf32>
    %393 = arith.mulf %384, %326 : vector<2x32xf32>
    %394 = arith.mulf %378, %386 : vector<2x32xf32>
    %395 = arith.addf %393, %394 : vector<2x32xf32>
    %396 = math.tanh %395 : vector<2x32xf32>
    %397 = arith.mulf %392, %396 : vector<2x32xf32>
    %398 = arith.index_cast %c5_i32 : i32 to index
    %c0_120 = arith.constant 0 : index
    %c0_121 = arith.constant 0 : index
    %399 = vector.load %arg9[%398, %c0_120, %c0_121] : memref<8x2x32xf32, #tpu.memory_space<vmem>>, vector<1x2x32xf32>
    %400 = vector.shape_cast %399 : vector<1x2x32xf32> to vector<2x32xf32>
    %401 = vector.shape_cast %397 : vector<2x32xf32> to vector<1x2x32xf32>
    tpu.vector_store %arg9[%398, %c0_120, %c0_121], %401 {strides = array<i32>} : memref<8x2x32xf32, #tpu.memory_space<vmem>>, vector<1x2x32xf32>,
    %c7_i32_122 = arith.constant 7 : i32
    %402 = arith.subi %c7_i32_122, %c5_i32 : i32
    %c2_i32_123 = arith.constant 2 : i32
    %403 = arith.muli %402, %c2_i32_123 : i32
    %404 = arith.index_cast %403 : i32 to index
    %c0_124 = arith.constant 0 : index
    %405 = vector.load %arg12[%404, %c0_124] : memref<16x128xf32, #tpu.memory_space<vmem>>, vector<2x128xf32>
    %cst_125 = arith.constant dense<0.000000e+00> : vector<2x128xf32>
    %406 = tpu.matmul %363, %18, %cst_125 {dimension_numbers = #tpu.dot_dimension_numbers<[1], [0], [0], [1], [0, 0, 1, 1], [], []>} : vector<2x32xf32>, vector<32x128xf32>, vector<2x128xf32> -> vector<2x128xf32>
    %407 = arith.addf %405, %406 : vector<2x128xf32>
    %408 = vector.extract_strided_slice %407 {offsets = [0, 0], sizes = [2, 32], strides = [1, 1]} : vector<2x128xf32> to vector<2x32xf32>
    %409 = arith.negf %408 : vector<2x32xf32>
    %410 = math.exp %409 : vector<2x32xf32>
    %cst_126 = arith.constant 1.000000e+00 : f32
    %411 = vector.broadcast %cst_126 : f32 to vector<2x32xf32>
    %412 = arith.addf %411, %410 : vector<2x32xf32>
    %413 = arith.divf %411, %412 : vector<2x32xf32>
    %414 = vector.extract_strided_slice %407 {offsets = [0, 32], sizes = [2, 32], strides = [1, 1]} : vector<2x128xf32> to vector<2x32xf32>
    %415 = arith.negf %414 : vector<2x32xf32>
    %416 = math.exp %415 : vector<2x32xf32>
    %cst_127 = arith.constant 1.000000e+00 : f32
    %417 = vector.broadcast %cst_127 : f32 to vector<2x32xf32>
    %418 = arith.addf %417, %416 : vector<2x32xf32>
    %419 = arith.divf %417, %418 : vector<2x32xf32>
    %420 = vector.extract_strided_slice %407 {offsets = [0, 64], sizes = [2, 32], strides = [1, 1]} : vector<2x128xf32> to vector<2x32xf32>
    %421 = math.tanh %420 : vector<2x32xf32>
    %422 = vector.extract_strided_slice %407 {offsets = [0, 96], sizes = [2, 32], strides = [1, 1]} : vector<2x128xf32> to vector<2x32xf32>
    %423 = arith.negf %422 : vector<2x32xf32>
    %424 = math.exp %423 : vector<2x32xf32>
    %cst_128 = arith.constant 1.000000e+00 : f32
    %425 = vector.broadcast %cst_128 : f32 to vector<2x32xf32>
    %426 = arith.addf %425, %424 : vector<2x32xf32>
    %427 = arith.divf %425, %426 : vector<2x32xf32>
    %428 = arith.mulf %419, %361 : vector<2x32xf32>
    %429 = arith.mulf %413, %421 : vector<2x32xf32>
    %430 = arith.addf %428, %429 : vector<2x32xf32>
    %431 = math.tanh %430 : vector<2x32xf32>
    %432 = arith.mulf %427, %431 : vector<2x32xf32>
    %433 = arith.index_cast %402 : i32 to index
    %c0_129 = arith.constant 0 : index
    %c0_130 = arith.constant 0 : index
    %434 = vector.load %arg10[%433, %c0_129, %c0_130] : memref<8x2x32xf32, #tpu.memory_space<vmem>>, vector<1x2x32xf32>
    %435 = vector.shape_cast %434 : vector<1x2x32xf32> to vector<2x32xf32>
    %436 = vector.shape_cast %432 : vector<2x32xf32> to vector<1x2x32xf32>
    tpu.vector_store %arg10[%433, %c0_129, %c0_130], %436 {strides = array<i32>} : memref<8x2x32xf32, #tpu.memory_space<vmem>>, vector<1x2x32xf32>,
    %c6_i32 = arith.constant 6 : i32
    %c2_i32_131 = arith.constant 2 : i32
    %437 = arith.muli %c6_i32, %c2_i32_131 : i32
    %438 = arith.index_cast %437 : i32 to index
    %c0_132 = arith.constant 0 : index
    %439 = vector.load %arg11[%438, %c0_132] : memref<16x128xf32, #tpu.memory_space<vmem>>, vector<2x128xf32>
    %cst_133 = arith.constant dense<0.000000e+00> : vector<2x128xf32>
    %440 = tpu.matmul %397, %17, %cst_133 {dimension_numbers = #tpu.dot_dimension_numbers<[1], [0], [0], [1], [0, 0, 1, 1], [], []>} : vector<2x32xf32>, vector<32x128xf32>, vector<2x128xf32> -> vector<2x128xf32>
    %441 = arith.addf %439, %440 : vector<2x128xf32>
    %442 = vector.extract_strided_slice %441 {offsets = [0, 0], sizes = [2, 32], strides = [1, 1]} : vector<2x128xf32> to vector<2x32xf32>
    %443 = arith.negf %442 : vector<2x32xf32>
    %444 = math.exp %443 : vector<2x32xf32>
    %cst_134 = arith.constant 1.000000e+00 : f32
    %445 = vector.broadcast %cst_134 : f32 to vector<2x32xf32>
    %446 = arith.addf %445, %444 : vector<2x32xf32>
    %447 = arith.divf %445, %446 : vector<2x32xf32>
    %448 = vector.extract_strided_slice %441 {offsets = [0, 32], sizes = [2, 32], strides = [1, 1]} : vector<2x128xf32> to vector<2x32xf32>
    %449 = arith.negf %448 : vector<2x32xf32>
    %450 = math.exp %449 : vector<2x32xf32>
    %cst_135 = arith.constant 1.000000e+00 : f32
    %451 = vector.broadcast %cst_135 : f32 to vector<2x32xf32>
    %452 = arith.addf %451, %450 : vector<2x32xf32>
    %453 = arith.divf %451, %452 : vector<2x32xf32>
    %454 = vector.extract_strided_slice %441 {offsets = [0, 64], sizes = [2, 32], strides = [1, 1]} : vector<2x128xf32> to vector<2x32xf32>
    %455 = math.tanh %454 : vector<2x32xf32>
    %456 = vector.extract_strided_slice %441 {offsets = [0, 96], sizes = [2, 32], strides = [1, 1]} : vector<2x128xf32> to vector<2x32xf32>
    %457 = arith.negf %456 : vector<2x32xf32>
    %458 = math.exp %457 : vector<2x32xf32>
    %cst_136 = arith.constant 1.000000e+00 : f32
    %459 = vector.broadcast %cst_136 : f32 to vector<2x32xf32>
    %460 = arith.addf %459, %458 : vector<2x32xf32>
    %461 = arith.divf %459, %460 : vector<2x32xf32>
    %462 = arith.mulf %453, %395 : vector<2x32xf32>
    %463 = arith.mulf %447, %455 : vector<2x32xf32>
    %464 = arith.addf %462, %463 : vector<2x32xf32>
    %465 = math.tanh %464 : vector<2x32xf32>
    %466 = arith.mulf %461, %465 : vector<2x32xf32>
    %467 = arith.index_cast %c6_i32 : i32 to index
    %c0_137 = arith.constant 0 : index
    %c0_138 = arith.constant 0 : index
    %468 = vector.load %arg9[%467, %c0_137, %c0_138] : memref<8x2x32xf32, #tpu.memory_space<vmem>>, vector<1x2x32xf32>
    %469 = vector.shape_cast %468 : vector<1x2x32xf32> to vector<2x32xf32>
    %470 = vector.shape_cast %466 : vector<2x32xf32> to vector<1x2x32xf32>
    tpu.vector_store %arg9[%467, %c0_137, %c0_138], %470 {strides = array<i32>} : memref<8x2x32xf32, #tpu.memory_space<vmem>>, vector<1x2x32xf32>,
    %c7_i32_139 = arith.constant 7 : i32
    %471 = arith.subi %c7_i32_139, %c6_i32 : i32
    %c2_i32_140 = arith.constant 2 : i32
    %472 = arith.muli %471, %c2_i32_140 : i32
    %473 = arith.index_cast %472 : i32 to index
    %c0_141 = arith.constant 0 : index
    %474 = vector.load %arg12[%473, %c0_141] : memref<16x128xf32, #tpu.memory_space<vmem>>, vector<2x128xf32>
    %cst_142 = arith.constant dense<0.000000e+00> : vector<2x128xf32>
    %475 = tpu.matmul %432, %18, %cst_142 {dimension_numbers = #tpu.dot_dimension_numbers<[1], [0], [0], [1], [0, 0, 1, 1], [], []>} : vector<2x32xf32>, vector<32x128xf32>, vector<2x128xf32> -> vector<2x128xf32>
    %476 = arith.addf %474, %475 : vector<2x128xf32>
    %477 = vector.extract_strided_slice %476 {offsets = [0, 0], sizes = [2, 32], strides = [1, 1]} : vector<2x128xf32> to vector<2x32xf32>
    %478 = arith.negf %477 : vector<2x32xf32>
    %479 = math.exp %478 : vector<2x32xf32>
    %cst_143 = arith.constant 1.000000e+00 : f32
    %480 = vector.broadcast %cst_143 : f32 to vector<2x32xf32>
    %481 = arith.addf %480, %479 : vector<2x32xf32>
    %482 = arith.divf %480, %481 : vector<2x32xf32>
    %483 = vector.extract_strided_slice %476 {offsets = [0, 32], sizes = [2, 32], strides = [1, 1]} : vector<2x128xf32> to vector<2x32xf32>
    %484 = arith.negf %483 : vector<2x32xf32>
    %485 = math.exp %484 : vector<2x32xf32>
    %cst_144 = arith.constant 1.000000e+00 : f32
    %486 = vector.broadcast %cst_144 : f32 to vector<2x32xf32>
    %487 = arith.addf %486, %485 : vector<2x32xf32>
    %488 = arith.divf %486, %487 : vector<2x32xf32>
    %489 = vector.extract_strided_slice %476 {offsets = [0, 64], sizes = [2, 32], strides = [1, 1]} : vector<2x128xf32> to vector<2x32xf32>
    %490 = math.tanh %489 : vector<2x32xf32>
    %491 = vector.extract_strided_slice %476 {offsets = [0, 96], sizes = [2, 32], strides = [1, 1]} : vector<2x128xf32> to vector<2x32xf32>
    %492 = arith.negf %491 : vector<2x32xf32>
    %493 = math.exp %492 : vector<2x32xf32>
    %cst_145 = arith.constant 1.000000e+00 : f32
    %494 = vector.broadcast %cst_145 : f32 to vector<2x32xf32>
    %495 = arith.addf %494, %493 : vector<2x32xf32>
    %496 = arith.divf %494, %495 : vector<2x32xf32>
    %497 = arith.mulf %488, %430 : vector<2x32xf32>
    %498 = arith.mulf %482, %490 : vector<2x32xf32>
    %499 = arith.addf %497, %498 : vector<2x32xf32>
    %500 = math.tanh %499 : vector<2x32xf32>
    %501 = arith.mulf %496, %500 : vector<2x32xf32>
    %502 = arith.index_cast %471 : i32 to index
    %c0_146 = arith.constant 0 : index
    %c0_147 = arith.constant 0 : index
    %503 = vector.load %arg10[%502, %c0_146, %c0_147] : memref<8x2x32xf32, #tpu.memory_space<vmem>>, vector<1x2x32xf32>
    %504 = vector.shape_cast %503 : vector<1x2x32xf32> to vector<2x32xf32>
    %505 = vector.shape_cast %501 : vector<2x32xf32> to vector<1x2x32xf32>
    tpu.vector_store %arg10[%502, %c0_146, %c0_147], %505 {strides = array<i32>} : memref<8x2x32xf32, #tpu.memory_space<vmem>>, vector<1x2x32xf32>,
    %c7_i32_148 = arith.constant 7 : i32
    %c2_i32_149 = arith.constant 2 : i32
    %506 = arith.muli %c7_i32_148, %c2_i32_149 : i32
    %507 = arith.index_cast %506 : i32 to index
    %c0_150 = arith.constant 0 : index
    %508 = vector.load %arg11[%507, %c0_150] : memref<16x128xf32, #tpu.memory_space<vmem>>, vector<2x128xf32>
    %cst_151 = arith.constant dense<0.000000e+00> : vector<2x128xf32>
    %509 = tpu.matmul %466, %17, %cst_151 {dimension_numbers = #tpu.dot_dimension_numbers<[1], [0], [0], [1], [0, 0, 1, 1], [], []>} : vector<2x32xf32>, vector<32x128xf32>, vector<2x128xf32> -> vector<2x128xf32>
    %510 = arith.addf %508, %509 : vector<2x128xf32>
    %511 = vector.extract_strided_slice %510 {offsets = [0, 0], sizes = [2, 32], strides = [1, 1]} : vector<2x128xf32> to vector<2x32xf32>
    %512 = arith.negf %511 : vector<2x32xf32>
    %513 = math.exp %512 : vector<2x32xf32>
    %cst_152 = arith.constant 1.000000e+00 : f32
    %514 = vector.broadcast %cst_152 : f32 to vector<2x32xf32>
    %515 = arith.addf %514, %513 : vector<2x32xf32>
    %516 = arith.divf %514, %515 : vector<2x32xf32>
    %517 = vector.extract_strided_slice %510 {offsets = [0, 32], sizes = [2, 32], strides = [1, 1]} : vector<2x128xf32> to vector<2x32xf32>
    %518 = arith.negf %517 : vector<2x32xf32>
    %519 = math.exp %518 : vector<2x32xf32>
    %cst_153 = arith.constant 1.000000e+00 : f32
    %520 = vector.broadcast %cst_153 : f32 to vector<2x32xf32>
    %521 = arith.addf %520, %519 : vector<2x32xf32>
    %522 = arith.divf %520, %521 : vector<2x32xf32>
    %523 = vector.extract_strided_slice %510 {offsets = [0, 64], sizes = [2, 32], strides = [1, 1]} : vector<2x128xf32> to vector<2x32xf32>
    %524 = math.tanh %523 : vector<2x32xf32>
    %525 = vector.extract_strided_slice %510 {offsets = [0, 96], sizes = [2, 32], strides = [1, 1]} : vector<2x128xf32> to vector<2x32xf32>
    %526 = arith.negf %525 : vector<2x32xf32>
    %527 = math.exp %526 : vector<2x32xf32>
    %cst_154 = arith.constant 1.000000e+00 : f32
    %528 = vector.broadcast %cst_154 : f32 to vector<2x32xf32>
    %529 = arith.addf %528, %527 : vector<2x32xf32>
    %530 = arith.divf %528, %529 : vector<2x32xf32>
    %531 = arith.mulf %522, %464 : vector<2x32xf32>
    %532 = arith.mulf %516, %524 : vector<2x32xf32>
    %533 = arith.addf %531, %532 : vector<2x32xf32>
    %534 = math.tanh %533 : vector<2x32xf32>
    %535 = arith.mulf %530, %534 : vector<2x32xf32>
    %536 = arith.index_cast %c7_i32_148 : i32 to index
    %c0_155 = arith.constant 0 : index
    %c0_156 = arith.constant 0 : index
    %537 = vector.load %arg9[%536, %c0_155, %c0_156] : memref<8x2x32xf32, #tpu.memory_space<vmem>>, vector<1x2x32xf32>
    %538 = vector.shape_cast %537 : vector<1x2x32xf32> to vector<2x32xf32>
    %539 = vector.shape_cast %535 : vector<2x32xf32> to vector<1x2x32xf32>
    tpu.vector_store %arg9[%536, %c0_155, %c0_156], %539 {strides = array<i32>} : memref<8x2x32xf32, #tpu.memory_space<vmem>>, vector<1x2x32xf32>,
    %c7_i32_157 = arith.constant 7 : i32
    %540 = arith.subi %c7_i32_157, %c7_i32_148 : i32
    %c2_i32_158 = arith.constant 2 : i32
    %541 = arith.muli %540, %c2_i32_158 : i32
    %542 = arith.index_cast %541 : i32 to index
    %c0_159 = arith.constant 0 : index
    %543 = vector.load %arg12[%542, %c0_159] : memref<16x128xf32, #tpu.memory_space<vmem>>, vector<2x128xf32>
    %cst_160 = arith.constant dense<0.000000e+00> : vector<2x128xf32>
    %544 = tpu.matmul %501, %18, %cst_160 {dimension_numbers = #tpu.dot_dimension_numbers<[1], [0], [0], [1], [0, 0, 1, 1], [], []>} : vector<2x32xf32>, vector<32x128xf32>, vector<2x128xf32> -> vector<2x128xf32>
    %545 = arith.addf %543, %544 : vector<2x128xf32>
    %546 = vector.extract_strided_slice %545 {offsets = [0, 0], sizes = [2, 32], strides = [1, 1]} : vector<2x128xf32> to vector<2x32xf32>
    %547 = arith.negf %546 : vector<2x32xf32>
    %548 = math.exp %547 : vector<2x32xf32>
    %cst_161 = arith.constant 1.000000e+00 : f32
    %549 = vector.broadcast %cst_161 : f32 to vector<2x32xf32>
    %550 = arith.addf %549, %548 : vector<2x32xf32>
    %551 = arith.divf %549, %550 : vector<2x32xf32>
    %552 = vector.extract_strided_slice %545 {offsets = [0, 32], sizes = [2, 32], strides = [1, 1]} : vector<2x128xf32> to vector<2x32xf32>
    %553 = arith.negf %552 : vector<2x32xf32>
    %554 = math.exp %553 : vector<2x32xf32>
    %cst_162 = arith.constant 1.000000e+00 : f32
    %555 = vector.broadcast %cst_162 : f32 to vector<2x32xf32>
    %556 = arith.addf %555, %554 : vector<2x32xf32>
    %557 = arith.divf %555, %556 : vector<2x32xf32>
    %558 = vector.extract_strided_slice %545 {offsets = [0, 64], sizes = [2, 32], strides = [1, 1]} : vector<2x128xf32> to vector<2x32xf32>
    %559 = math.tanh %558 : vector<2x32xf32>
    %560 = vector.extract_strided_slice %545 {offsets = [0, 96], sizes = [2, 32], strides = [1, 1]} : vector<2x128xf32> to vector<2x32xf32>
    %561 = arith.negf %560 : vector<2x32xf32>
    %562 = math.exp %561 : vector<2x32xf32>
    %cst_163 = arith.constant 1.000000e+00 : f32
    %563 = vector.broadcast %cst_163 : f32 to vector<2x32xf32>
    %564 = arith.addf %563, %562 : vector<2x32xf32>
    %565 = arith.divf %563, %564 : vector<2x32xf32>
    %566 = arith.mulf %557, %499 : vector<2x32xf32>
    %567 = arith.mulf %551, %559 : vector<2x32xf32>
    %568 = arith.addf %566, %567 : vector<2x32xf32>
    %569 = math.tanh %568 : vector<2x32xf32>
    %570 = arith.mulf %565, %569 : vector<2x32xf32>
    %571 = arith.index_cast %540 : i32 to index
    %c0_164 = arith.constant 0 : index
    %c0_165 = arith.constant 0 : index
    %572 = vector.load %arg10[%571, %c0_164, %c0_165] : memref<8x2x32xf32, #tpu.memory_space<vmem>>, vector<1x2x32xf32>
    %573 = vector.shape_cast %572 : vector<1x2x32xf32> to vector<2x32xf32>
    %574 = vector.shape_cast %570 : vector<2x32xf32> to vector<1x2x32xf32>
    tpu.vector_store %arg10[%571, %c0_164, %c0_165], %574 {strides = array<i32>} : memref<8x2x32xf32, #tpu.memory_space<vmem>>, vector<1x2x32xf32>,
    %c8_i32 = arith.constant 8 : i32
    %c0_166 = arith.constant 0 : index
    %c0_167 = arith.constant 0 : index
    %575 = vector.load %arg13[%c0_166, %c0_167] : memref<2x32xf32, #tpu.memory_space<vmem>>, vector<2x32xf32>
    tpu.vector_store %arg13[%c0_166, %c0_167], %535 {strides = array<i32>} : memref<2x32xf32, #tpu.memory_space<vmem>>, vector<2x32xf32>,
    %c0_168 = arith.constant 0 : index
    %c0_169 = arith.constant 0 : index
    %576 = vector.load %arg14[%c0_168, %c0_169] : memref<2x32xf32, #tpu.memory_space<vmem>>, vector<2x32xf32>
    tpu.vector_store %arg14[%c0_168, %c0_169], %533 {strides = array<i32>} : memref<2x32xf32, #tpu.memory_space<vmem>>, vector<2x32xf32>,
    %c0_170 = arith.constant 0 : index
    %c0_171 = arith.constant 0 : index
    %577 = vector.load %arg15[%c0_170, %c0_171] : memref<2x32xf32, #tpu.memory_space<vmem>>, vector<2x32xf32>
    tpu.vector_store %arg15[%c0_170, %c0_171], %570 {strides = array<i32>} : memref<2x32xf32, #tpu.memory_space<vmem>>, vector<2x32xf32>,
    %c0_172 = arith.constant 0 : index
    %c0_173 = arith.constant 0 : index
    %578 = vector.load %arg16[%c0_172, %c0_173] : memref<2x32xf32, #tpu.memory_space<vmem>>, vector<2x32xf32>
    tpu.vector_store %arg16[%c0_172, %c0_173], %568 {strides = array<i32>} : memref<2x32xf32, #tpu.memory_space<vmem>>, vector<2x32xf32>,
    return
  }
  func.func @transform_0(%arg0: i32) -> (i32, i32) {
    %c0_i32 = arith.constant 0 : i32
    %c0_i32_0 = arith.constant 0 : i32
    return %arg0, %c0_i32 : i32, i32
  }
  func.func @transform_1(%arg0: i32) -> (i32, i32) {
    %c0_i32 = arith.constant 0 : i32
    %0 = arith.subi %c0_i32, %arg0 : i32
    %c0_i32_0 = arith.constant 0 : i32
    %c0_i32_1 = arith.constant 0 : i32
    return %0, %c0_i32_0 : i32, i32
  }
  func.func @transform_2(%arg0: i32) -> (i32, i32) {
    %c0_i32 = arith.constant 0 : i32
    %c0_i32_0 = arith.constant 0 : i32
    %c0_i32_1 = arith.constant 0 : i32
    return %c0_i32, %c0_i32_0 : i32, i32
  }
  func.func @transform_3(%arg0: i32) -> (i32, i32) {
    %c0_i32 = arith.constant 0 : i32
    %c0_i32_0 = arith.constant 0 : i32
    %c0_i32_1 = arith.constant 0 : i32
    return %c0_i32, %c0_i32_0 : i32, i32
  }
  func.func @transform_4(%arg0: i32) -> (i32, i32) {
    %c0_i32 = arith.constant 0 : i32
    %c0_i32_0 = arith.constant 0 : i32
    %c0_i32_1 = arith.constant 0 : i32
    return %c0_i32, %c0_i32_0 : i32, i32
  }
  func.func @transform_5(%arg0: i32) -> (i32, i32) {
    %c0_i32 = arith.constant 0 : i32
    %c0_i32_0 = arith.constant 0 : i32
    %c0_i32_1 = arith.constant 0 : i32
    return %c0_i32, %c0_i32_0 : i32, i32
  }
  func.func @transform_6(%arg0: i32) -> (i32, i32) {
    %c0_i32 = arith.constant 0 : i32
    %c0_i32_0 = arith.constant 0 : i32
    %c0_i32_1 = arith.constant 0 : i32
    return %c0_i32, %c0_i32_0 : i32, i32
  }
  func.func @transform_7(%arg0: i32) -> (i32, i32) {
    %c0_i32 = arith.constant 0 : i32
    %c0_i32_0 = arith.constant 0 : i32
    %c0_i32_1 = arith.constant 0 : i32
    return %c0_i32, %c0_i32_0 : i32, i32
  }
  func.func @transform_8(%arg0: i32) -> (i32, i32, i32) {
    %c0_i32 = arith.constant 0 : i32
    %c0_i32_0 = arith.constant 0 : i32
    %c0_i32_1 = arith.constant 0 : i32
    return %arg0, %c0_i32, %c0_i32_0 : i32, i32, i32
  }
  func.func @transform_9(%arg0: i32) -> (i32, i32, i32) {
    %c0_i32 = arith.constant 0 : i32
    %0 = arith.subi %c0_i32, %arg0 : i32
    %c0_i32_0 = arith.constant 0 : i32
    %c0_i32_1 = arith.constant 0 : i32
    %c0_i32_2 = arith.constant 0 : i32
    return %0, %c0_i32_0, %c0_i32_1 : i32, i32, i32
  }
}

</mosaic_0001>

<llo_original>
// kernel: rnn_sequential_encoder.1
$region0: #{rnn_sequential_encoder.1}
  #allocation0 [shape = 'u32[]', space=smem, size = 0x4, offset = 0x4, fixed_abs, tag = 'smem constant byte address 0x4 - core index']
  #allocation1 [shape = 'u32[144,128]{1,0:T(1,128)}', space=vmem, size = 0x12000, scoped, tag = 'internal scratch']
  #allocation2 [shape = 'f32[16,128]{1,0:T(8,128)}', space=vmem, size = 0x2000, scoped, tag = 'scratch operand']
  #allocation3 [shape = 'f32[16,128]{1,0:T(8,128)}', space=vmem, size = 0x2000, scoped, tag = 'scratch operand']
  #allocation4 [shape = 'f32[2,32]{1,0:T(2,128)}', space=vmem, size = 0x400, scoped, tag = 'scratch operand']
  #allocation5 [shape = 'f32[2,32]{1,0:T(2,128)}', space=vmem, size = 0x400, scoped, tag = 'scratch operand']
  #allocation6 [shape = 'f32[2,32]{1,0:T(2,128)}', space=vmem, size = 0x400, scoped, tag = 'scratch operand']
  #allocation7 [shape = 'f32[2,32]{1,0:T(2,128)}', space=vmem, size = 0x400, scoped, tag = 'scratch operand']
  %s0 = inlined_call_operand.hbm [shape: f32[16,16], index: 0, kind: input, shape index: {}, may-alias: {0,1}]
  %s1 = inlined_call_operand.hbm [shape: f32[16,16], index: 1, kind: input, shape index: {}, may-alias: {0,1}]
  %s2 = inlined_call_operand.hbm [shape: f32[16,128], index: 2, kind: input, shape index: {}]
  %s3 = inlined_call_operand.hbm [shape: f32[16,128], index: 3, kind: input, shape index: {}]
  %s4 = inlined_call_operand.hbm [shape: f32[32,128], index: 4, kind: input, shape index: {}]
  %s5 = inlined_call_operand.hbm [shape: f32[32,128], index: 5, kind: input, shape index: {}]
  %s6 = inlined_call_operand.vmem [shape: f32[1,128], index: 6, kind: input, shape index: {}]
  %s7 = inlined_call_operand.vmem [shape: f32[1,128], index: 7, kind: input, shape index: {}]
  %s8 = inlined_call_operand.vmem [shape: f32[8,2,32], index: 8, kind: output, shape index: {0}]
  %s9 = inlined_call_operand.vmem [shape: f32[8,2,32], index: 9, kind: output, shape index: {1}]
  %10 = xla_tuple %s8, %s9
  %s11 = sld [smem:[#allocation0]]
  $region78: #{rnn_sequential_encoder.1} parent=0
    _
  %s13 = ssub.s32 1, %s11
  %s14 = scalar_select 0, %s13, %s11
  $region1: #{rnn_sequential_encoder.1} parent=0
    #allocation8 [shape = 'u8[8192]{0}', space=vmem, size = 0x2000, scoped, tag = 'input window, operand 0, single buffered']
    #allocation9 [shape = 's32[1]{0}', space=sflag, size = 0x4, scoped, tag = 'scoped memory for rnn_sequential_encoder.1']
    #allocation10 [shape = 'u8[8192]{0}', space=vmem, size = 0x2000, scoped, tag = 'input window, operand 1, single buffered']
    #allocation11 [shape = 's32[1]{0}', space=sflag, size = 0x4, scoped, tag = 'scoped memory for rnn_sequential_encoder.1']
    #allocation12 [shape = 'u8[8192]{0}', space=vmem, size = 0x2000, scoped, tag = 'input window, operand 2, single buffered']
    #allocation13 [shape = 'u8[8192]{0}', space=vmem, size = 0x2000, scoped, tag = 'input window, operand 3, single buffered']
    #allocation14 [shape = 's32[1]{0}', space=sflag, size = 0x4, scoped, tag = 'scoped memory for rnn_sequential_encoder.1']
    #allocation15 [shape = 'u8[16384]{0}', space=vmem, size = 0x4000, scoped, tag = 'input window, operand 4, single buffered']
    #allocation16 [shape = 'u8[16384]{0}', space=vmem, size = 0x4000, scoped, tag = 'input window, operand 5, single buffered']
    #allocation17 [shape = 's32[1]{0}', space=sflag, size = 0x4, scoped, tag = 'scoped memory for rnn_sequential_encoder.1']
    %15 = vsyncpa [#allocation9], 0
    %16 = vsyncpa [#allocation11], 0
    %17 = vsyncpa [#allocation14], 0
    %18 = vsyncpa [#allocation17], 0
    // Predicated region
    $region2: #{rnn_sequential_encoder.1} parent=1 // pred_check
      _
    $region3: #{rnn_sequential_encoder.1} parent=1 // pred_check_branch
      %20 = sbr.rel (0) target = $region5
    $region4: #{rnn_sequential_encoder.1} parent=1 // pred_region
      %s22 = ssub.s32 256, 256
      %23 = vsyncadd [#allocation9], %s22
      %s24 = sshll.u32 [#allocation8], 4
      %s25 = int_to_ptr.vmem [resolvable:$true] %s24
      %30 = dma.hbm_to_vmem [thread:$0]  %s0, 256, %s25, [#allocation9], 128, 128, 8
    $region5: #{rnn_sequential_encoder.1} parent=1 // pred_fallthru
      _
    // Predicated region
    $region6: #{rnn_sequential_encoder.1} parent=1 // pred_check
      _
    $region7: #{rnn_sequential_encoder.1} parent=1 // pred_check_branch
      %32 = sbr.rel (0) target = $region9
    $region8: #{rnn_sequential_encoder.1} parent=1 // pred_region
      %s33 = ssub.s32 0, 0
      %s34 = smul.u32 2, %s33
      %s36 = ssub.s32 256, 256
      %37 = vsyncadd [#allocation11], %s36
      %s38 = smul.addr %s34, 128
      %s39 = scalar_lea.hbm %s1, %s38
      %s40 = sshll.u32 [#allocation10], 4
      %s41 = int_to_ptr.vmem [resolvable:$true] %s40
      %46 = dma.hbm_to_vmem [thread:$0]  %s39, 256, %s41, [#allocation11], 128, 128, 8
    $region9: #{rnn_sequential_encoder.1} parent=1 // pred_fallthru
      _
    // Predicated region
    $region10: #{rnn_sequential_encoder.1} parent=1 // pred_check
      _
    $region11: #{rnn_sequential_encoder.1} parent=1 // pred_check_branch
      %48 = sbr.rel (0) target = $region13
    $region12: #{rnn_sequential_encoder.1} parent=1 // pred_region
      %s50 = ssub.s32 256, 256
      %51 = vsyncadd [#allocation11], %s50
      %s52 = sshll.u32 [#allocation12], 4
      %s53 = int_to_ptr.vmem [resolvable:$true] %s52
      %58 = dma.hbm_to_vmem [thread:$0]  %s2, 256, %s53, [#allocation11], 128, 128, 8
    $region13: #{rnn_sequential_encoder.1} parent=1 // pred_fallthru
      _
    // Predicated region
    $region14: #{rnn_sequential_encoder.1} parent=1 // pred_check
      _
    $region15: #{rnn_sequential_encoder.1} parent=1 // pred_check_branch
      %60 = sbr.rel (0) target = $region17
    $region16: #{rnn_sequential_encoder.1} parent=1 // pred_region
      %s62 = ssub.s32 256, 256
      %63 = vsyncadd [#allocation14], %s62
      %s64 = sshll.u32 [#allocation13], 4
      %s65 = int_to_ptr.vmem [resolvable:$true] %s64
      %70 = dma.hbm_to_vmem [thread:$0]  %s3, 256, %s65, [#allocation14], 128, 128, 8
    $region17: #{rnn_sequential_encoder.1} parent=1 // pred_fallthru
      _
    // Predicated region
    $region18: #{rnn_sequential_encoder.1} parent=1 // pred_check
      _
    $region19: #{rnn_sequential_encoder.1} parent=1 // pred_check_branch
      %72 = sbr.rel (0) target = $region21
    $region20: #{rnn_sequential_encoder.1} parent=1 // pred_region
      %s74 = ssub.s32 512, 512
      %75 = vsyncadd [#allocation14], %s74
      %s76 = sshll.u32 [#allocation15], 4
      %s77 = int_to_ptr.vmem [resolvable:$true] %s76
      %82 = dma.hbm_to_vmem [thread:$0]  %s4, 512, %s77, [#allocation14], 128, 128, 8
    $region21: #{rnn_sequential_encoder.1} parent=1 // pred_fallthru
      _
    // Predicated region
    $region22: #{rnn_sequential_encoder.1} parent=1 // pred_check
      _
    $region23: #{rnn_sequential_encoder.1} parent=1 // pred_check_branch
      %84 = sbr.rel (0) target = $region25
    $region24: #{rnn_sequential_encoder.1} parent=1 // pred_region
      %s86 = ssub.s32 512, 512
      %87 = vsyncadd [#allocation17], %s86
      %s88 = sshll.u32 [#allocation16], 4
      %s89 = int_to_ptr.vmem [resolvable:$true] %s88
      %94 = dma.hbm_to_vmem [thread:$0]  %s5, 512, %s89, [#allocation17], 128, 128, 8
    $region25: #{rnn_sequential_encoder.1} parent=1 // pred_fallthru
      _
    // Predicated region
    $region26: #{rnn_sequential_encoder.1} parent=1 // pred_check
      _
    $region27: #{rnn_sequential_encoder.1} parent=1 // pred_check_branch
      %96 = sbr.rel (0) target = $region29
    $region28: #{rnn_sequential_encoder.1} parent=1 // pred_region
      _
    $region29: #{rnn_sequential_encoder.1} parent=1 // pred_fallthru
      _
    // Predicated region
    $region30: #{rnn_sequential_encoder.1} parent=1 // pred_check
      _
    $region31: #{rnn_sequential_encoder.1} parent=1 // pred_check_branch
      %98 = sbr.rel (0) target = $region33
    $region32: #{rnn_sequential_encoder.1} parent=1 // pred_region
      _
    $region33: #{rnn_sequential_encoder.1} parent=1 // pred_fallthru
      _
    // Predicated region
    $region34: #{rnn_sequential_encoder.1} parent=1 // pred_check
      _
    $region35: #{rnn_sequential_encoder.1} parent=1 // pred_check_branch
      %100 = sbr.rel (0) target = $region37
    $region36: #{rnn_sequential_encoder.1} parent=1 // pred_region
      %101 = dma.done [#allocation9], 256
    $region37: #{rnn_sequential_encoder.1} parent=1 // pred_fallthru
      _
    // Predicated region
    $region38: #{rnn_sequential_encoder.1} parent=1 // pred_check
      _
    $region39: #{rnn_sequential_encoder.1} parent=1 // pred_check_branch
      %103 = sbr.rel (0) target = $region41
    $region40: #{rnn_sequential_encoder.1} parent=1 // pred_region
      %104 = dma.done [#allocation11], 256
    $region41: #{rnn_sequential_encoder.1} parent=1 // pred_fallthru
      _
    // Predicated region
    $region42: #{rnn_sequential_encoder.1} parent=1 // pred_check
      _
    $region43: #{rnn_sequential_encoder.1} parent=1 // pred_check_branch
      %106 = sbr.rel (0) target = $region45
    $region44: #{rnn_sequential_encoder.1} parent=1 // pred_region
      %107 = dma.done [#allocation11], 256
    $region45: #{rnn_sequential_encoder.1} parent=1 // pred_fallthru
      _
    // Predicated region
    $region46: #{rnn_sequential_encoder.1} parent=1 // pred_check
      _
    $region47: #{rnn_sequential_encoder.1} parent=1 // pred_check_branch
      %109 = sbr.rel (0) target = $region49
    $region48: #{rnn_sequential_encoder.1} parent=1 // pred_region
      %110 = dma.done [#allocation14], 256
    $region49: #{rnn_sequential_encoder.1} parent=1 // pred_fallthru
      _
    // Predicated region
    $region50: #{rnn_sequential_encoder.1} parent=1 // pred_check
      _
    $region51: #{rnn_sequential_encoder.1} parent=1 // pred_check_branch
      %112 = sbr.rel (0) target = $region53
    $region52: #{rnn_sequential_encoder.1} parent=1 // pred_region
      %113 = dma.done [#allocation14], 512
    $region53: #{rnn_sequential_encoder.1} parent=1 // pred_fallthru
      _
    // Predicated region
    $region54: #{rnn_sequential_encoder.1} parent=1 // pred_check
      _
    $region55: #{rnn_sequential_encoder.1} parent=1 // pred_check_branch
      %115 = sbr.rel (0) target = $region57
    $region56: #{rnn_sequential_encoder.1} parent=1 // pred_region
      %116 = dma.done [#allocation17], 512
    $region57: #{rnn_sequential_encoder.1} parent=1 // pred_fallthru
      _
    %s117 = ssub.s32 0, 0
    %s118 = smul.u32 8, %s117
    %p119 = scmp.lt.s32.totalorder %s118, 7
    %s120 = scalar_select %p119, %s118, 7
    %s121 = smul.addr %s120, 2
    %s122 = scalar_lea.vmem %s9, %s121
    %s123 = ssub.s32 0, 0
    %s124 = smul.u32 2, %s123
    %s125 = ssub.s32 0, 0
    %s126 = smul.u32 8, %s125
    %p127 = scmp.lt.s32.totalorder %s126, 7
    %s128 = scalar_select %p127, %s126, 7
    %s129 = smul.addr %s128, 2
    %s130 = scalar_lea.vmem %s9, %s129
    %s131 = ssub.s32 0, 0
    %s132 = smul.u32 8, %s131
    %p133 = scmp.eq.s32.totalorder 0, 0
    // Predicated region
    $region58: #{rnn_sequential_encoder.1} parent=1 // pred_check
      %p134 = pneg %p133
    $region59: #{rnn_sequential_encoder.1} parent=1 // pred_check_branch
      %136 = sbr.rel (%p134) target = $region61
    $region60: #{rnn_sequential_encoder.1} parent=1 // pred_region
      %vm137 = vcmask 254976
      %138 = vst.msk [vmem:[#allocation4] sm:$0x3] %vm137, 0.0
      %139 = vst.msk [vmem:[#allocation5] sm:$0x3] %vm137, 0.0
      %140 = vst.msk [vmem:[#allocation6] sm:$0x3] %vm137, 0.0
      %141 = vst.msk [vmem:[#allocation7] sm:$0x3] %vm137, 0.0
    $region61: #{rnn_sequential_encoder.1} parent=1 // pred_fallthru
      _
    %v142 = vld [vmem:[#allocation8] sm:$0xff]
    %v143 = vld [vmem:[#allocation8 + $0x8] sm:$0xff]
    %v144 = vld [vmem:[#allocation12] sm:$0xff]
    %v145 = vld [vmem:[#allocation12 + $0x8] sm:$0xff]
    %v146 = vld [vmem:[%s6] sm:$0x1]
    %v148 = vlaneseq
    %v149 = vshrl.u32 %v148, 7
    %v150 = vsub.s32 0, %v149
    %v151 = vrot.slane %v146, %v150
    %vm153 = vcmask 130048
    %v155 = vsel %vm153, %v142, 0
    %v158 = vsel %vm153, %v143, 0
    %160 = vmatprep.subr.mxu0 0.0
    %161 = vmatpush1.msra.mxu0 %v144
    %162 = vmatprep.subr.mxu0 0.0
    %163 = vmatpush1.msra.mxu0 %v145
    %164 = vmatprep.subr.mxu0 0.0
    %165 = vmatpush1.msra.mxu0 0.0
    %166 = vmatprep.subr.mxu0 0.0
    %167 = vmatpush1.msra.mxu0 0.0
    %168 = vmatprep.subr.mxu0 0.0
    %169 = vmatpush1.msra.mxu0 0.0
    %170 = vmatprep.subr.mxu0 0.0
    %171 = vmatpush1.msra.mxu0 0.0
    %172 = vmatprep.subr.mxu0 0.0
    %173 = vmatpush1.msra.mxu0 0.0
    %174 = vmatprep.subr.mxu0 0.0
    %175 = vmatpush1.msra.mxu0 0.0
    %176 = vmatprep.subr.mxu0 0.0
    %177 = vmatpush1.msra.mxu0 0.0
    %178 = vmatprep.subr.mxu0 0.0
    %179 = vmatpush1.msra.mxu0 0.0
    %180 = vmatprep.subr.mxu0 0.0
    %181 = vmatpush1.msra.mxu0 0.0
    %182 = vmatprep.subr.mxu0 0.0
    %183 = vmatpush1.msra.mxu0 0.0
    %184 = vmatprep.subr.mxu0 0.0
    %185 = vmatpush1.msra.mxu0 0.0
    %186 = vmatprep.subr.mxu0 0.0
    %187 = vmatpush1.msra.mxu0 0.0
    %188 = vmatprep.subr.mxu0 0.0
    %189 = vmatpush1.msra.mxu0 0.0
    %190 = vmatprep.subr.mxu0 0.0
    %191 = vmatpush1.msra.mxu0 0.0
    %192 = vmatprep.subr.mxu0 0.0
    %193 = vmatpush1.msra.mxu0 0.0
    %194 = vmatprep.subr.mxu0 0.0
    %195 = vmatpush1.msra.mxu0 0.0
    %196 = vmatprep.subr.mxu0 0.0
    %197 = vmatpush1.msra.mxu0 0.0
    %198 = vmatprep.subr.mxu0 0.0
    %199 = vmatpush1.msra.mxu0 0.0
    %200 = vmatprep.subr.mxu0 0.0
    %201 = vmatpush1.msra.mxu0 0.0
    %202 = vmatprep.subr.mxu0 0.0
    %203 = vmatpush1.msra.mxu0 0.0
    %204 = vmatprep.subr.mxu0 0.0
    %205 = vmatpush1.msra.mxu0 0.0
    %206 = vmatprep.subr.mxu0 0.0
    %207 = vmatpush1.msra.mxu0 0.0
    %208 = vmatprep.subr.mxu0 0.0
    %209 = vmatpush1.msra.mxu0 0.0
    %210 = vmatprep.subr.mxu0 0.0
    %211 = vmatpush1.msra.mxu0 0.0
    %212 = vmatprep.subr.mxu0 0.0
    %213 = vmatpush1.msra.mxu0 0.0
    %214 = vmatprep.subr.mxu0 0.0
    %215 = vmatpush1.msra.mxu0 0.0
    %216 = vmatprep.subr.mxu0 0.0
    %217 = vmatpush1.msra.mxu0 0.0
    %218 = vmatprep.subr.mxu0 0.0
    %219 = vmatpush1.msra.mxu0 0.0
    %220 = vmatprep.subr.mxu0 0.0
    %221 = vmatpush1.msra.mxu0 0.0
    %222 = vmatprep.subr.mxu0 0.0
    %223 = vmatpush1.msra.mxu0 0.0
    %224 = vmatprep.mubr.f32.mxu0 0.0
    %225 = vmatmul.mubr.f32.gmra.mrb[0].mxu0 %v155
    %v226 = vpop.f32.mrb[0].mxu0
    %v227 = vadd.f32 %v151, %v226
    %v228 = vpop.f32.mrb[0].mxu0
    %229 = vmatprep.mubr.f32.mxu0 0.0
    %230 = vmatmul.mubr.f32.gmra.mrb[0].mxu0 %v158
    %v231 = vpop.f32.mrb[0].mxu0
    %v232 = vadd.f32 %v151, %v231
    %v233 = vpop.f32.mrb[0].mxu0
    %234 = vdwg.mxu0
    %235 = vst [vmem:[#allocation2] sm:$0xff] %v227
    %236 = vst [vmem:[#allocation2 + $0x8] sm:$0xff] %v232
    %v237 = vld [vmem:[#allocation10] sm:$0xff]
    %v238 = vld [vmem:[#allocation10 + $0x8] sm:$0xff]
    %v239 = vld [vmem:[#allocation13] sm:$0xff]
    %v240 = vld [vmem:[#allocation13 + $0x8] sm:$0xff]
    %v241 = vld [vmem:[%s7] sm:$0x1]
    %v243 = vlaneseq
    %v244 = vshrl.u32 %v243, 7
    %v245 = vsub.s32 0, %v244
    %v246 = vrot.slane %v241, %v245
    %v249 = vsel %vm153, %v237, 0
    %v252 = vsel %vm153, %v238, 0
    %254 = vmatprep.subr.mxu0 0.0
    %255 = vmatpush1.msra.mxu0 %v239
    %256 = vmatprep.subr.mxu0 0.0
    %257 = vmatpush1.msra.mxu0 %v240
    %258 = vmatprep.subr.mxu0 0.0
    %259 = vmatpush1.msra.mxu0 0.0
    %260 = vmatprep.subr.mxu0 0.0
    %261 = vmatpush1.msra.mxu0 0.0
    %262 = vmatprep.subr.mxu0 0.0
    %263 = vmatpush1.msra.mxu0 0.0
    %264 = vmatprep.subr.mxu0 0.0
    %265 = vmatpush1.msra.mxu0 0.0
    %266 = vmatprep.subr.mxu0 0.0
    %267 = vmatpush1.msra.mxu0 0.0
    %268 = vmatprep.subr.mxu0 0.0
    %269 = vmatpush1.msra.mxu0 0.0
    %270 = vmatprep.subr.mxu0 0.0
    %271 = vmatpush1.msra.mxu0 0.0
    %272 = vmatprep.subr.mxu0 0.0
    %273 = vmatpush1.msra.mxu0 0.0
    %274 = vmatprep.subr.mxu0 0.0
    %275 = vmatpush1.msra.mxu0 0.0
    %276 = vmatprep.subr.mxu0 0.0
    %277 = vmatpush1.msra.mxu0 0.0
    %278 = vmatprep.subr.mxu0 0.0
    %279 = vmatpush1.msra.mxu0 0.0
    %280 = vmatprep.subr.mxu0 0.0
    %281 = vmatpush1.msra.mxu0 0.0
    %282 = vmatprep.subr.mxu0 0.0
    %283 = vmatpush1.msra.mxu0 0.0
    %284 = vmatprep.subr.mxu0 0.0
    %285 = vmatpush1.msra.mxu0 0.0
    %286 = vmatprep.subr.mxu0 0.0
    %287 = vmatpush1.msra.mxu0 0.0
    %288 = vmatprep.subr.mxu0 0.0
    %289 = vmatpush1.msra.mxu0 0.0
    %290 = vmatprep.subr.mxu0 0.0
    %291 = vmatpush1.msra.mxu0 0.0
    %292 = vmatprep.subr.mxu0 0.0
    %293 = vmatpush1.msra.mxu0 0.0
    %294 = vmatprep.subr.mxu0 0.0
    %295 = vmatpush1.msra.mxu0 0.0
    %296 = vmatprep.subr.mxu0 0.0
    %297 = vmatpush1.msra.mxu0 0.0
    %298 = vmatprep.subr.mxu0 0.0
    %299 = vmatpush1.msra.mxu0 0.0
    %300 = vmatprep.subr.mxu0 0.0
    %301 = vmatpush1.msra.mxu0 0.0
    %302 = vmatprep.subr.mxu0 0.0
    %303 = vmatpush1.msra.mxu0 0.0
    %304 = vmatprep.subr.mxu0 0.0
    %305 = vmatpush1.msra.mxu0 0.0
    %306 = vmatprep.subr.mxu0 0.0
    %307 = vmatpush1.msra.mxu0 0.0
    %308 = vmatprep.subr.mxu0 0.0
    %309 = vmatpush1.msra.mxu0 0.0
    %310 = vmatprep.subr.mxu0 0.0
    %311 = vmatpush1.msra.mxu0 0.0
    %312 = vmatprep.subr.mxu0 0.0
    %313 = vmatpush1.msra.mxu0 0.0
    %314 = vmatprep.subr.mxu0 0.0
    %315 = vmatpush1.msra.mxu0 0.0
    %316 = vmatprep.subr.mxu0 0.0
    %317 = vmatpush1.msra.mxu0 0.0
    %318 = vmatprep.mubr.f32.mxu0 0.0
    %319 = vmatmul.mubr.f32.gmra.mrb[0].mxu0 %v249
    %v320 = vpop.f32.mrb[0].mxu0
    %v321 = vadd.f32 %v246, %v320
    %v322 = vpop.f32.mrb[0].mxu0
    %323 = vmatprep.mubr.f32.mxu0 0.0
    %324 = vmatmul.mubr.f32.gmra.mrb[0].mxu0 %v252
    %v325 = vpop.f32.mrb[0].mxu0
    %v326 = vadd.f32 %v246, %v325
    %v327 = vpop.f32.mrb[0].mxu0
    %328 = vdwg.mxu0
    %329 = vst [vmem:[#allocation3] sm:$0xff] %v321
    %330 = vst [vmem:[#allocation3 + $0x8] sm:$0xff] %v326
    %v331 = vld [vmem:[#allocation15] sm:$0xff]
    %v332 = vld [vmem:[#allocation15 + $0x8] sm:$0xff]
    %v333 = vld [vmem:[#allocation15 + $0x10] sm:$0xff]
    %v334 = vld [vmem:[#allocation15 + $0x18] sm:$0xff]
    %v335 = vld [vmem:[#allocation16] sm:$0xff]
    %v336 = vld [vmem:[#allocation16 + $0x8] sm:$0xff]
    %v337 = vld [vmem:[#allocation16 + $0x10] sm:$0xff]
    %v338 = vld [vmem:[#allocation16 + $0x18] sm:$0xff]
    %v339 = vld [vmem:[#allocation4] sm:$0x3]
    %v340 = vld [vmem:[#allocation5] sm:$0x3]
    %v341 = vld [vmem:[#allocation6] sm:$0x3]
    %v342 = vld [vmem:[#allocation7] sm:$0x3]
    %v343 = vld [vmem:[#allocation2] sm:$0x3]
    %vm344 = vcmask 261120
    %v346 = vsel %vm344, %v339, 0
    %348 = vmatprep.subr.mxu0 0.0
    %349 = vmatpush1.msra.mxu0 %v331
    %350 = vmatprep.subr.mxu0 0.0
    %351 = vmatpush1.msra.mxu0 %v332
    %352 = vmatprep.subr.mxu0 0.0
    %353 = vmatpush1.msra.mxu0 %v333
    %354 = vmatprep.subr.mxu0 0.0
    %355 = vmatpush1.msra.mxu0 %v334
    %356 = vmatprep.subr.mxu0 0.0
    %357 = vmatpush1.msra.mxu0 0.0
    %358 = vmatprep.subr.mxu0 0.0
    %359 = vmatpush1.msra.mxu0 0.0
    %360 = vmatprep.subr.mxu0 0.0
    %361 = vmatpush1.msra.mxu0 0.0
    %362 = vmatprep.subr.mxu0 0.0
    %363 = vmatpush1.msra.mxu0 0.0
    %364 = vmatprep.subr.mxu0 0.0
    %365 = vmatpush1.msra.mxu0 0.0
    %366 = vmatprep.subr.mxu0 0.0
    %367 = vmatpush1.msra.mxu0 0.0
    %368 = vmatprep.subr.mxu0 0.0
    %369 = vmatpush1.msra.mxu0 0.0
    %370 = vmatprep.subr.mxu0 0.0
    %371 = vmatpush1.msra.mxu0 0.0
    %372 = vmatprep.subr.mxu0 0.0
    %373 = vmatpush1.msra.mxu0 0.0
    %374 = vmatprep.subr.mxu0 0.0
    %375 = vmatpush1.msra.mxu0 0.0
    %376 = vmatprep.subr.mxu0 0.0
    %377 = vmatpush1.msra.mxu0 0.0
    %378 = vmatprep.subr.mxu0 0.0
    %379 = vmatpush1.msra.mxu0 0.0
    %380 = vmatprep.subr.mxu0 0.0
    %381 = vmatpush1.msra.mxu0 0.0
    %382 = vmatprep.subr.mxu0 0.0
    %383 = vmatpush1.msra.mxu0 0.0
    %384 = vmatprep.subr.mxu0 0.0
    %385 = vmatpush1.msra.mxu0 0.0
    %386 = vmatprep.subr.mxu0 0.0
    %387 = vmatpush1.msra.mxu0 0.0
    %388 = vmatprep.subr.mxu0 0.0
    %389 = vmatpush1.msra.mxu0 0.0
    %390 = vmatprep.subr.mxu0 0.0
    %391 = vmatpush1.msra.mxu0 0.0
    %392 = vmatprep.subr.mxu0 0.0
    %393 = vmatpush1.msra.mxu0 0.0
    %394 = vmatprep.subr.mxu0 0.0
    %395 = vmatpush1.msra.mxu0 0.0
    %396 = vmatprep.subr.mxu0 0.0
    %397 = vmatpush1.msra.mxu0 0.0
    %398 = vmatprep.subr.mxu0 0.0
    %399 = vmatpush1.msra.mxu0 0.0
    %400 = vmatprep.subr.mxu0 0.0
    %401 = vmatpush1.msra.mxu0 0.0
    %402 = vmatprep.subr.mxu0 0.0
    %403 = vmatpush1.msra.mxu0 0.0
    %404 = vmatprep.subr.mxu0 0.0
    %405 = vmatpush1.msra.mxu0 0.0
    %406 = vmatprep.subr.mxu0 0.0
    %407 = vmatpush1.msra.mxu0 0.0
    %408 = vmatprep.subr.mxu0 0.0
    %409 = vmatpush1.msra.mxu0 0.0
    %410 = vmatprep.subr.mxu0 0.0
    %411 = vmatpush1.msra.mxu0 0.0
    %412 = vmatprep.mubr.f32.mxu0 0.0
    %413 = vmatmul.mubr.f32.gmra.mrb[0].mxu0 %v346
    %v414 = vpop.f32.mrb[0].mxu0
    %v415 = vadd.f32 0.0, %v414
    %v416 = vpop.f32.mrb[0].mxu0
    %417 = vdwg.mxu0
    %v418 = vadd.f32 %v343, %v415
    %v419 = vxor.u32 %v418, 2147483648
    %v420 = vmul.f32 %v419, 1.442695
    %v421 = vpow.pop %v420
    %v422 = vadd.f32 %v421, 1.0
    %v423 = vrcp.pop %v422
    %v424 = vmul.f32 1.0, %v423
    %v425 = vtanh.pop %v418
    %427 = vrot.lane.b32.xlu0 %v340, 32
    %v428 = vpop.permute.xlu0 %427
    %v430 = vmul.f32 %v424, %v428
    %432 = vrot.lane.b32.xlu0 %v425, 64
    %v433 = vpop.permute.xlu0 %432
    %v435 = vmul.f32 %v424, %v433
    %437 = vrot.lane.b32.xlu0 %v435, 32
    %v438 = vpop.permute.xlu0 %437
    %v440 = vadd.f32 %v430, %v438
    %v441 = vtanh.pop %v440
    %443 = vrot.lane.b32.xlu0 %v441, 64
    %v444 = vpop.permute.xlu0 %443
    %v446 = vmul.f32 %v424, %v444
    %448 = vrot.lane.b32.xlu0 %v446, 32
    %v449 = vpop.permute.xlu0 %448
    %vm451 = vcmask 254976
    %452 = vst.msk [vmem:[%s8] sm:$0x3] %vm451, %v449
    %v453 = vld [vmem:[#allocation3 + $0xe] sm:$0x3]
    %v455 = vsel %vm344, %v341, 0
    %457 = vmatprep.subr.mxu0 0.0
    %458 = vmatpush1.msra.mxu0 %v335
    %459 = vmatprep.subr.mxu0 0.0
    %460 = vmatpush1.msra.mxu0 %v336
    %461 = vmatprep.subr.mxu0 0.0
    %462 = vmatpush1.msra.mxu0 %v337
    %463 = vmatprep.subr.mxu0 0.0
    %464 = vmatpush1.msra.mxu0 %v338
    %465 = vmatprep.subr.mxu0 0.0
    %466 = vmatpush1.msra.mxu0 0.0
    %467 = vmatprep.subr.mxu0 0.0
    %468 = vmatpush1.msra.mxu0 0.0
    %469 = vmatprep.subr.mxu0 0.0
    %470 = vmatpush1.msra.mxu0 0.0
    %471 = vmatprep.subr.mxu0 0.0
    %472 = vmatpush1.msra.mxu0 0.0
    %473 = vmatprep.subr.mxu0 0.0
    %474 = vmatpush1.msra.mxu0 0.0
    %475 = vmatprep.subr.mxu0 0.0
    %476 = vmatpush1.msra.mxu0 0.0
    %477 = vmatprep.subr.mxu0 0.0
    %478 = vmatpush1.msra.mxu0 0.0
    %479 = vmatprep.subr.mxu0 0.0
    %480 = vmatpush1.msra.mxu0 0.0
    %481 = vmatprep.subr.mxu0 0.0
    %482 = vmatpush1.msra.mxu0 0.0
    %483 = vmatprep.subr.mxu0 0.0
    %484 = vmatpush1.msra.mxu0 0.0
    %485 = vmatprep.subr.mxu0 0.0
    %486 = vmatpush1.msra.mxu0 0.0
    %487 = vmatprep.subr.mxu0 0.0
    %488 = vmatpush1.msra.mxu0 0.0
    %489 = vmatprep.subr.mxu0 0.0
    %490 = vmatpush1.msra.mxu0 0.0
    %491 = vmatprep.subr.mxu0 0.0
    %492 = vmatpush1.msra.mxu0 0.0
    %493 = vmatprep.subr.mxu0 0.0
    %494 = vmatpush1.msra.mxu0 0.0
    %495 = vmatprep.subr.mxu0 0.0
    %496 = vmatpush1.msra.mxu0 0.0
    %497 = vmatprep.subr.mxu0 0.0
    %498 = vmatpush1.msra.mxu0 0.0
    %499 = vmatprep.subr.mxu0 0.0
    %500 = vmatpush1.msra.mxu0 0.0
    %501 = vmatprep.subr.mxu0 0.0
    %502 = vmatpush1.msra.mxu0 0.0
    %503 = vmatprep.subr.mxu0 0.0
    %504 = vmatpush1.msra.mxu0 0.0
    %505 = vmatprep.subr.mxu0 0.0
    %506 = vmatpush1.msra.mxu0 0.0
    %507 = vmatprep.subr.mxu0 0.0
    %508 = vmatpush1.msra.mxu0 0.0
    %509 = vmatprep.subr.mxu0 0.0
    %510 = vmatpush1.msra.mxu0 0.0
    %511 = vmatprep.subr.mxu0 0.0
    %512 = vmatpush1.msra.mxu0 0.0
    %513 = vmatprep.subr.mxu0 0.0
    %514 = vmatpush1.msra.mxu0 0.0
    %515 = vmatprep.subr.mxu0 0.0
    %516 = vmatpush1.msra.mxu0 0.0
    %517 = vmatprep.subr.mxu0 0.0
    %518 = vmatpush1.msra.mxu0 0.0
    %519 = vmatprep.subr.mxu0 0.0
    %520 = vmatpush1.msra.mxu0 0.0
    %521 = vmatprep.mubr.f32.mxu0 0.0
    %522 = vmatmul.mubr.f32.gmra.mrb[0].mxu0 %v455
    %v523 = vpop.f32.mrb[0].mxu0
    %v524 = vadd.f32 0.0, %v523
    %v525 = vpop.f32.mrb[0].mxu0
    %526 = vdwg.mxu0
    %v527 = vadd.f32 %v453, %v524
    %v528 = vxor.u32 %v527, 2147483648
    %v529 = vmul.f32 %v528, 1.442695
    %v530 = vpow.pop %v529
    %v531 = vadd.f32 %v530, 1.0
    %v532 = vrcp.pop %v531
    %v533 = vmul.f32 1.0, %v532
    %v534 = vtanh.pop %v527
    %536 = vrot.lane.b32.xlu0 %v342, 32
    %v537 = vpop.permute.xlu0 %536
    %v539 = vmul.f32 %v533, %v537
    %541 = vrot.lane.b32.xlu0 %v534, 64
    %v542 = vpop.permute.xlu0 %541
    %v544 = vmul.f32 %v533, %v542
    %546 = vrot.lane.b32.xlu0 %v544, 32
    %v547 = vpop.permute.xlu0 %546
    %v549 = vadd.f32 %v539, %v547
    %v550 = vtanh.pop %v549
    %552 = vrot.lane.b32.xlu0 %v550, 64
    %v553 = vpop.permute.xlu0 %552
    %v555 = vmul.f32 %v533, %v553
    %557 = vrot.lane.b32.xlu0 %v555, 32
    %v558 = vpop.permute.xlu0 %557
    %s560 = scalar_lea.vmem %s130, 14
    %561 = vst.msk [vmem:[%s560] sm:$0x3] %vm451, %v558
    %v562 = vld [vmem:[#allocation2 + $0x2] sm:$0x3]
    %v563 = vsel %vm344, %v449, 0
    %565 = vmatprep.subr.mxu0 0.0
    %566 = vmatpush1.msra.mxu0 %v331
    %567 = vmatprep.subr.mxu0 0.0
    %568 = vmatpush1.msra.mxu0 %v332
    %569 = vmatprep.subr.mxu0 0.0
    %570 = vmatpush1.msra.mxu0 %v333
    %571 = vmatprep.subr.mxu0 0.0
    %572 = vmatpush1.msra.mxu0 %v334
    %573 = vmatprep.subr.mxu0 0.0
    %574 = vmatpush1.msra.mxu0 0.0
    %575 = vmatprep.subr.mxu0 0.0
    %576 = vmatpush1.msra.mxu0 0.0
    %577 = vmatprep.subr.mxu0 0.0
    %578 = vmatpush1.msra.mxu0 0.0
    %579 = vmatprep.subr.mxu0 0.0
    %580 = vmatpush1.msra.mxu0 0.0
    %581 = vmatprep.subr.mxu0 0.0
    %582 = vmatpush1.msra.mxu0 0.0
    %583 = vmatprep.subr.mxu0 0.0
    %584 = vmatpush1.msra.mxu0 0.0
    %585 = vmatprep.subr.mxu0 0.0
    %586 = vmatpush1.msra.mxu0 0.0
    %587 = vmatprep.subr.mxu0 0.0
    %588 = vmatpush1.msra.mxu0 0.0
    %589 = vmatprep.subr.mxu0 0.0
    %590 = vmatpush1.msra.mxu0 0.0
    %591 = vmatprep.subr.mxu0 0.0
    %592 = vmatpush1.msra.mxu0 0.0
    %593 = vmatprep.subr.mxu0 0.0
    %594 = vmatpush1.msra.mxu0 0.0
    %595 = vmatprep.subr.mxu0 0.0
    %596 = vmatpush1.msra.mxu0 0.0
    %597 = vmatprep.subr.mxu0 0.0
    %598 = vmatpush1.msra.mxu0 0.0
    %599 = vmatprep.subr.mxu0 0.0
    %600 = vmatpush1.msra.mxu0 0.0
    %601 = vmatprep.subr.mxu0 0.0
    %602 = vmatpush1.msra.mxu0 0.0
    %603 = vmatprep.subr.mxu0 0.0
    %604 = vmatpush1.msra.mxu0 0.0
    %605 = vmatprep.subr.mxu0 0.0
    %606 = vmatpush1.msra.mxu0 0.0
    %607 = vmatprep.subr.mxu0 0.0
    %608 = vmatpush1.msra.mxu0 0.0
    %609 = vmatprep.subr.mxu0 0.0
    %610 = vmatpush1.msra.mxu0 0.0
    %611 = vmatprep.subr.mxu0 0.0
    %612 = vmatpush1.msra.mxu0 0.0
    %613 = vmatprep.subr.mxu0 0.0
    %614 = vmatpush1.msra.mxu0 0.0
    %615 = vmatprep.subr.mxu0 0.0
    %616 = vmatpush1.msra.mxu0 0.0
    %617 = vmatprep.subr.mxu0 0.0
    %618 = vmatpush1.msra.mxu0 0.0
    %619 = vmatprep.subr.mxu0 0.0
    %620 = vmatpush1.msra.mxu0 0.0
    %621 = vmatprep.subr.mxu0 0.0
    %622 = vmatpush1.msra.mxu0 0.0
    %623 = vmatprep.subr.mxu0 0.0
    %624 = vmatpush1.msra.mxu0 0.0
    %625 = vmatprep.subr.mxu0 0.0
    %626 = vmatpush1.msra.mxu0 0.0
    %627 = vmatprep.subr.mxu0 0.0
    %628 = vmatpush1.msra.mxu0 0.0
    %629 = vmatprep.mubr.f32.mxu0 0.0
    %630 = vmatmul.mubr.f32.gmra.mrb[0].mxu0 %v563
    %v631 = vpop.f32.mrb[0].mxu0
    %v632 = vadd.f32 0.0, %v631
    %v633 = vpop.f32.mrb[0].mxu0
    %634 = vdwg.mxu0
    %v635 = vadd.f32 %v562, %v632
    %v636 = vxor.u32 %v635, 2147483648
    %v637 = vmul.f32 %v636, 1.442695
    %v638 = vpow.pop %v637
    %v639 = vadd.f32 %v638, 1.0
    %v640 = vrcp.pop %v639
    %v641 = vmul.f32 1.0, %v640
    %v642 = vtanh.pop %v635
    %v643 = vmul.f32 %v641, %v440
    %645 = vrot.lane.b32.xlu0 %v642, 64
    %v646 = vpop.permute.xlu0 %645
    %v648 = vmul.f32 %v641, %v646
    %650 = vrot.lane.b32.xlu0 %v648, 32
    %v651 = vpop.permute.xlu0 %650
    %v653 = vadd.f32 %v643, %v651
    %v654 = vtanh.pop %v653
    %656 = vrot.lane.b32.xlu0 %v654, 64
    %v657 = vpop.permute.xlu0 %656
    %v659 = vmul.f32 %v641, %v657
    %661 = vrot.lane.b32.xlu0 %v659, 32
    %v662 = vpop.permute.xlu0 %661
    %s664 = scalar_lea.vmem %s8, 2
    %665 = vst.msk [vmem:[%s664] sm:$0x3] %vm451, %v662
    %v666 = vld [vmem:[#allocation3 + $0xc] sm:$0x3]
    %v667 = vsel %vm344, %v558, 0
    %669 = vmatprep.subr.mxu0 0.0
    %670 = vmatpush1.msra.mxu0 %v335
    %671 = vmatprep.subr.mxu0 0.0
    %672 = vmatpush1.msra.mxu0 %v336
    %673 = vmatprep.subr.mxu0 0.0
    %674 = vmatpush1.msra.mxu0 %v337
    %675 = vmatprep.subr.mxu0 0.0
    %676 = vmatpush1.msra.mxu0 %v338
    %677 = vmatprep.subr.mxu0 0.0
    %678 = vmatpush1.msra.mxu0 0.0
    %679 = vmatprep.subr.mxu0 0.0
    %680 = vmatpush1.msra.mxu0 0.0
    %681 = vmatprep.subr.mxu0 0.0
    %682 = vmatpush1.msra.mxu0 0.0
    %683 = vmatprep.subr.mxu0 0.0
    %684 = vmatpush1.msra.mxu0 0.0
    %685 = vmatprep.subr.mxu0 0.0
    %686 = vmatpush1.msra.mxu0 0.0
    %687 = vmatprep.subr.mxu0 0.0
    %688 = vmatpush1.msra.mxu0 0.0
    %689 = vmatprep.subr.mxu0 0.0
    %690 = vmatpush1.msra.mxu0 0.0
    %691 = vmatprep.subr.mxu0 0.0
    %692 = vmatpush1.msra.mxu0 0.0
    %693 = vmatprep.subr.mxu0 0.0
    %694 = vmatpush1.msra.mxu0 0.0
    %695 = vmatprep.subr.mxu0 0.0
    %696 = vmatpush1.msra.mxu0 0.0
    %697 = vmatprep.subr.mxu0 0.0
    %698 = vmatpush1.msra.mxu0 0.0
    %699 = vmatprep.subr.mxu0 0.0
    %700 = vmatpush1.msra.mxu0 0.0
    %701 = vmatprep.subr.mxu0 0.0
    %702 = vmatpush1.msra.mxu0 0.0
    %703 = vmatprep.subr.mxu0 0.0
    %704 = vmatpush1.msra.mxu0 0.0
    %705 = vmatprep.subr.mxu0 0.0
    %706 = vmatpush1.msra.mxu0 0.0
    %707 = vmatprep.subr.mxu0 0.0
    %708 = vmatpush1.msra.mxu0 0.0
    %709 = vmatprep.subr.mxu0 0.0
    %710 = vmatpush1.msra.mxu0 0.0
    %711 = vmatprep.subr.mxu0 0.0
    %712 = vmatpush1.msra.mxu0 0.0
    %713 = vmatprep.subr.mxu0 0.0
    %714 = vmatpush1.msra.mxu0 0.0
    %715 = vmatprep.subr.mxu0 0.0
    %716 = vmatpush1.msra.mxu0 0.0
    %717 = vmatprep.subr.mxu0 0.0
    %718 = vmatpush1.msra.mxu0 0.0
    %719 = vmatprep.subr.mxu0 0.0
    %720 = vmatpush1.msra.mxu0 0.0
    %721 = vmatprep.subr.mxu0 0.0
    %722 = vmatpush1.msra.mxu0 0.0
    %723 = vmatprep.subr.mxu0 0.0
    %724 = vmatpush1.msra.mxu0 0.0
    %725 = vmatprep.subr.mxu0 0.0
    %726 = vmatpush1.msra.mxu0 0.0
    %727 = vmatprep.subr.mxu0 0.0
    %728 = vmatpush1.msra.mxu0 0.0
    %729 = vmatprep.subr.mxu0 0.0
    %730 = vmatpush1.msra.mxu0 0.0
    %731 = vmatprep.subr.mxu0 0.0
    %732 = vmatpush1.msra.mxu0 0.0
    %733 = vmatprep.mubr.f32.mxu0 0.0
    %734 = vmatmul.mubr.f32.gmra.mrb[0].mxu0 %v667
    %v735 = vpop.f32.mrb[0].mxu0
    %v736 = vadd.f32 0.0, %v735
    %v737 = vpop.f32.mrb[0].mxu0
    %738 = vdwg.mxu0
    %v739 = vadd.f32 %v666, %v736
    %v740 = vxor.u32 %v739, 2147483648
    %v741 = vmul.f32 %v740, 1.442695
    %v742 = vpow.pop %v741
    %v743 = vadd.f32 %v742, 1.0
    %v744 = vrcp.pop %v743
    %v745 = vmul.f32 1.0, %v744
    %v746 = vtanh.pop %v739
    %v747 = vmul.f32 %v745, %v549
    %749 = vrot.lane.b32.xlu0 %v746, 64
    %v750 = vpop.permute.xlu0 %749
    %v752 = vmul.f32 %v745, %v750
    %754 = vrot.lane.b32.xlu0 %v752, 32
    %v755 = vpop.permute.xlu0 %754
    %v757 = vadd.f32 %v747, %v755
    %v758 = vtanh.pop %v757
    %760 = vrot.lane.b32.xlu0 %v758, 64
    %v761 = vpop.permute.xlu0 %760
    %v763 = vmul.f32 %v745, %v761
    %765 = vrot.lane.b32.xlu0 %v763, 32
    %v766 = vpop.permute.xlu0 %765
    %s768 = scalar_lea.vmem %s130, 12
    %769 = vst.msk [vmem:[%s768] sm:$0x3] %vm451, %v766
    %v770 = vld [vmem:[#allocation2 + $0x4] sm:$0x3]
    %v771 = vsel %vm344, %v662, 0
    %773 = vmatprep.subr.mxu0 0.0
    %774 = vmatpush1.msra.mxu0 %v331
    %775 = vmatprep.subr.mxu0 0.0
    %776 = vmatpush1.msra.mxu0 %v332
    %777 = vmatprep.subr.mxu0 0.0
    %778 = vmatpush1.msra.mxu0 %v333
    %779 = vmatprep.subr.mxu0 0.0
    %780 = vmatpush1.msra.mxu0 %v334
    %781 = vmatprep.subr.mxu0 0.0
    %782 = vmatpush1.msra.mxu0 0.0
    %783 = vmatprep.subr.mxu0 0.0
    %784 = vmatpush1.msra.mxu0 0.0
    %785 = vmatprep.subr.mxu0 0.0
    %786 = vmatpush1.msra.mxu0 0.0
    %787 = vmatprep.subr.mxu0 0.0
    %788 = vmatpush1.msra.mxu0 0.0
    %789 = vmatprep.subr.mxu0 0.0
    %790 = vmatpush1.msra.mxu0 0.0
    %791 = vmatprep.subr.mxu0 0.0
    %792 = vmatpush1.msra.mxu0 0.0
    %793 = vmatprep.subr.mxu0 0.0
    %794 = vmatpush1.msra.mxu0 0.0
    %795 = vmatprep.subr.mxu0 0.0
    %796 = vmatpush1.msra.mxu0 0.0
    %797 = vmatprep.subr.mxu0 0.0
    %798 = vmatpush1.msra.mxu0 0.0
    %799 = vmatprep.subr.mxu0 0.0
    %800 = vmatpush1.msra.mxu0 0.0
    %801 = vmatprep.subr.mxu0 0.0
    %802 = vmatpush1.msra.mxu0 0.0
    %803 = vmatprep.subr.mxu0 0.0
    %804 = vmatpush1.msra.mxu0 0.0
    %805 = vmatprep.subr.mxu0 0.0
    %806 = vmatpush1.msra.mxu0 0.0
    %807 = vmatprep.subr.mxu0 0.0
    %808 = vmatpush1.msra.mxu0 0.0
    %809 = vmatprep.subr.mxu0 0.0
    %810 = vmatpush1.msra.mxu0 0.0
    %811 = vmatprep.subr.mxu0 0.0
    %812 = vmatpush1.msra.mxu0 0.0
    %813 = vmatprep.subr.mxu0 0.0
    %814 = vmatpush1.msra.mxu0 0.0
    %815 = vmatprep.subr.mxu0 0.0
    %816 = vmatpush1.msra.mxu0 0.0
    %817 = vmatprep.subr.mxu0 0.0
    %818 = vmatpush1.msra.mxu0 0.0
    %819 = vmatprep.subr.mxu0 0.0
    %820 = vmatpush1.msra.mxu0 0.0
    %821 = vmatprep.subr.mxu0 0.0
    %822 = vmatpush1.msra.mxu0 0.0
    %823 = vmatprep.subr.mxu0 0.0
    %824 = vmatpush1.msra.mxu0 0.0
    %825 = vmatprep.subr.mxu0 0.0
    %826 = vmatpush1.msra.mxu0 0.0
    %827 = vmatprep.subr.mxu0 0.0
    %828 = vmatpush1.msra.mxu0 0.0
    %829 = vmatprep.subr.mxu0 0.0
    %830 = vmatpush1.msra.mxu0 0.0
    %831 = vmatprep.subr.mxu0 0.0
    %832 = vmatpush1.msra.mxu0 0.0
    %833 = vmatprep.subr.mxu0 0.0
    %834 = vmatpush1.msra.mxu0 0.0
    %835 = vmatprep.subr.mxu0 0.0
    %836 = vmatpush1.msra.mxu0 0.0
    %837 = vmatprep.mubr.f32.mxu0 0.0
    %838 = vmatmul.mubr.f32.gmra.mrb[0].mxu0 %v771
    %v839 = vpop.f32.mrb[0].mxu0
    %v840 = vadd.f32 0.0, %v839
    %v841 = vpop.f32.mrb[0].mxu0
    %842 = vdwg.mxu0
    %v843 = vadd.f32 %v770, %v840
    %v844 = vxor.u32 %v843, 2147483648
    %v845 = vmul.f32 %v844, 1.442695
    %v846 = vpow.pop %v845
    %v847 = vadd.f32 %v846, 1.0
    %v848 = vrcp.pop %v847
    %v849 = vmul.f32 1.0, %v848
    %v850 = vtanh.pop %v843
    %v851 = vmul.f32 %v849, %v653
    %853 = vrot.lane.b32.xlu0 %v850, 64
    %v854 = vpop.permute.xlu0 %853
    %v856 = vmul.f32 %v849, %v854
    %858 = vrot.lane.b32.xlu0 %v856, 32
    %v859 = vpop.permute.xlu0 %858
    %v861 = vadd.f32 %v851, %v859
    %v862 = vtanh.pop %v861
    %864 = vrot.lane.b32.xlu0 %v862, 64
    %v865 = vpop.permute.xlu0 %864
    %v867 = vmul.f32 %v849, %v865
    %869 = vrot.lane.b32.xlu0 %v867, 32
    %v870 = vpop.permute.xlu0 %869
    %s872 = scalar_lea.vmem %s8, 4
    %873 = vst.msk [vmem:[%s872] sm:$0x3] %vm451, %v870
    %v874 = vld [vmem:[#allocation3 + $0xa] sm:$0x3]
    %v875 = vsel %vm344, %v766, 0
    %877 = vmatprep.subr.mxu0 0.0
    %878 = vmatpush1.msra.mxu0 %v335
    %879 = vmatprep.subr.mxu0 0.0
    %880 = vmatpush1.msra.mxu0 %v336
    %881 = vmatprep.subr.mxu0 0.0
    %882 = vmatpush1.msra.mxu0 %v337
    %883 = vmatprep.subr.mxu0 0.0
    %884 = vmatpush1.msra.mxu0 %v338
    %885 = vmatprep.subr.mxu0 0.0
    %886 = vmatpush1.msra.mxu0 0.0
    %887 = vmatprep.subr.mxu0 0.0
    %888 = vmatpush1.msra.mxu0 0.0
    %889 = vmatprep.subr.mxu0 0.0
    %890 = vmatpush1.msra.mxu0 0.0
    %891 = vmatprep.subr.mxu0 0.0
    %892 = vmatpush1.msra.mxu0 0.0
    %893 = vmatprep.subr.mxu0 0.0
    %894 = vmatpush1.msra.mxu0 0.0
    %895 = vmatprep.subr.mxu0 0.0
    %896 = vmatpush1.msra.mxu0 0.0
    %897 = vmatprep.subr.mxu0 0.0
    %898 = vmatpush1.msra.mxu0 0.0
    %899 = vmatprep.subr.mxu0 0.0
    %900 = vmatpush1.msra.mxu0 0.0
    %901 = vmatprep.subr.mxu0 0.0
    %902 = vmatpush1.msra.mxu0 0.0
    %903 = vmatprep.subr.mxu0 0.0
    %904 = vmatpush1.msra.mxu0 0.0
    %905 = vmatprep.subr.mxu0 0.0
    %906 = vmatpush1.msra.mxu0 0.0
    %907 = vmatprep.subr.mxu0 0.0
    %908 = vmatpush1.msra.mxu0 0.0
    %909 = vmatprep.subr.mxu0 0.0
    %910 = vmatpush1.msra.mxu0 0.0
    %911 = vmatprep.subr.mxu0 0.0
    %912 = vmatpush1.msra.mxu0 0.0
    %913 = vmatprep.subr.mxu0 0.0
    %914 = vmatpush1.msra.mxu0 0.0
    %915 = vmatprep.subr.mxu0 0.0
    %916 = vmatpush1.msra.mxu0 0.0
    %917 = vmatprep.subr.mxu0 0.0
    %918 = vmatpush1.msra.mxu0 0.0
    %919 = vmatprep.subr.mxu0 0.0
    %920 = vmatpush1.msra.mxu0 0.0
    %921 = vmatprep.subr.mxu0 0.0
    %922 = vmatpush1.msra.mxu0 0.0
    %923 = vmatprep.subr.mxu0 0.0
    %924 = vmatpush1.msra.mxu0 0.0
    %925 = vmatprep.subr.mxu0 0.0
    %926 = vmatpush1.msra.mxu0 0.0
    %927 = vmatprep.subr.mxu0 0.0
    %928 = vmatpush1.msra.mxu0 0.0
    %929 = vmatprep.subr.mxu0 0.0
    %930 = vmatpush1.msra.mxu0 0.0
    %931 = vmatprep.subr.mxu0 0.0
    %932 = vmatpush1.msra.mxu0 0.0
    %933 = vmatprep.subr.mxu0 0.0
    %934 = vmatpush1.msra.mxu0 0.0
    %935 = vmatprep.subr.mxu0 0.0
    %936 = vmatpush1.msra.mxu0 0.0
    %937 = vmatprep.subr.mxu0 0.0
    %938 = vmatpush1.msra.mxu0 0.0
    %939 = vmatprep.subr.mxu0 0.0
    %940 = vmatpush1.msra.mxu0 0.0
    %941 = vmatprep.mubr.f32.mxu0 0.0
    %942 = vmatmul.mubr.f32.gmra.mrb[0].mxu0 %v875
    %v943 = vpop.f32.mrb[0].mxu0
    %v944 = vadd.f32 0.0, %v943
    %v945 = vpop.f32.mrb[0].mxu0
    %946 = vdwg.mxu0
    %v947 = vadd.f32 %v874, %v944
    %v948 = vxor.u32 %v947, 2147483648
    %v949 = vmul.f32 %v948, 1.442695
    %v950 = vpow.pop %v949
    %v951 = vadd.f32 %v950, 1.0
    %v952 = vrcp.pop %v951
    %v953 = vmul.f32 1.0, %v952
    %v954 = vtanh.pop %v947
    %v955 = vmul.f32 %v953, %v757
    %957 = vrot.lane.b32.xlu0 %v954, 64
    %v958 = vpop.permute.xlu0 %957
    %v960 = vmul.f32 %v953, %v958
    %962 = vrot.lane.b32.xlu0 %v960, 32
    %v963 = vpop.permute.xlu0 %962
    %v965 = vadd.f32 %v955, %v963
    %v966 = vtanh.pop %v965
    %968 = vrot.lane.b32.xlu0 %v966, 64
    %v969 = vpop.permute.xlu0 %968
    %v971 = vmul.f32 %v953, %v969
    %973 = vrot.lane.b32.xlu0 %v971, 32
    %v974 = vpop.permute.xlu0 %973
    %s976 = scalar_lea.vmem %s130, 10
    %977 = vst.msk [vmem:[%s976] sm:$0x3] %vm451, %v974
    %v978 = vld [vmem:[#allocation2 + $0x6] sm:$0x3]
    %v979 = vsel %vm344, %v870, 0
    %981 = vmatprep.subr.mxu0 0.0
    %982 = vmatpush1.msra.mxu0 %v331
    %983 = vmatprep.subr.mxu0 0.0
    %984 = vmatpush1.msra.mxu0 %v332
    %985 = vmatprep.subr.mxu0 0.0
    %986 = vmatpush1.msra.mxu0 %v333
    %987 = vmatprep.subr.mxu0 0.0
    %988 = vmatpush1.msra.mxu0 %v334
    %989 = vmatprep.subr.mxu0 0.0
    %990 = vmatpush1.msra.mxu0 0.0
    %991 = vmatprep.subr.mxu0 0.0
    %992 = vmatpush1.msra.mxu0 0.0
    %993 = vmatprep.subr.mxu0 0.0
    %994 = vmatpush1.msra.mxu0 0.0
    %995 = vmatprep.subr.mxu0 0.0
    %996 = vmatpush1.msra.mxu0 0.0
    %997 = vmatprep.subr.mxu0 0.0
    %998 = vmatpush1.msra.mxu0 0.0
    %999 = vmatprep.subr.mxu0 0.0
    %1000 = vmatpush1.msra.mxu0 0.0
    %1001 = vmatprep.subr.mxu0 0.0
    %1002 = vmatpush1.msra.mxu0 0.0
    %1003 = vmatprep.subr.mxu0 0.0
    %1004 = vmatpush1.msra.mxu0 0.0
    %1005 = vmatprep.subr.mxu0 0.0
    %1006 = vmatpush1.msra.mxu0 0.0
    %1007 = vmatprep.subr.mxu0 0.0
    %1008 = vmatpush1.msra.mxu0 0.0
    %1009 = vmatprep.subr.mxu0 0.0
    %1010 = vmatpush1.msra.mxu0 0.0
    %1011 = vmatprep.subr.mxu0 0.0
    %1012 = vmatpush1.msra.mxu0 0.0
    %1013 = vmatprep.subr.mxu0 0.0
    %1014 = vmatpush1.msra.mxu0 0.0
    %1015 = vmatprep.subr.mxu0 0.0
    %1016 = vmatpush1.msra.mxu0 0.0
    %1017 = vmatprep.subr.mxu0 0.0
    %1018 = vmatpush1.msra.mxu0 0.0
    %1019 = vmatprep.subr.mxu0 0.0
    %1020 = vmatpush1.msra.mxu0 0.0
    %1021 = vmatprep.subr.mxu0 0.0
    %1022 = vmatpush1.msra.mxu0 0.0
    %1023 = vmatprep.subr.mxu0 0.0
    %1024 = vmatpush1.msra.mxu0 0.0
    %1025 = vmatprep.subr.mxu0 0.0
    %1026 = vmatpush1.msra.mxu0 0.0
    %1027 = vmatprep.subr.mxu0 0.0
    %1028 = vmatpush1.msra.mxu0 0.0
    %1029 = vmatprep.subr.mxu0 0.0
    %1030 = vmatpush1.msra.mxu0 0.0
    %1031 = vmatprep.subr.mxu0 0.0
    %1032 = vmatpush1.msra.mxu0 0.0
    %1033 = vmatprep.subr.mxu0 0.0
    %1034 = vmatpush1.msra.mxu0 0.0
    %1035 = vmatprep.subr.mxu0 0.0
    %1036 = vmatpush1.msra.mxu0 0.0
    %1037 = vmatprep.subr.mxu0 0.0
    %1038 = vmatpush1.msra.mxu0 0.0
    %1039 = vmatprep.subr.mxu0 0.0
    %1040 = vmatpush1.msra.mxu0 0.0
    %1041 = vmatprep.subr.mxu0 0.0
    %1042 = vmatpush1.msra.mxu0 0.0
    %1043 = vmatprep.subr.mxu0 0.0
    %1044 = vmatpush1.msra.mxu0 0.0
    %1045 = vmatprep.mubr.f32.mxu0 0.0
    %1046 = vmatmul.mubr.f32.gmra.mrb[0].mxu0 %v979
    %v1047 = vpop.f32.mrb[0].mxu0
    %v1048 = vadd.f32 0.0, %v1047
    %v1049 = vpop.f32.mrb[0].mxu0
    %1050 = vdwg.mxu0
    %v1051 = vadd.f32 %v978, %v1048
    %v1052 = vxor.u32 %v1051, 2147483648
    %v1053 = vmul.f32 %v1052, 1.442695
    %v1054 = vpow.pop %v1053
    %v1055 = vadd.f32 %v1054, 1.0
    %v1056 = vrcp.pop %v1055
    %v1057 = vmul.f32 1.0, %v1056
    %v1058 = vtanh.pop %v1051
    %v1059 = vmul.f32 %v1057, %v861
    %1061 = vrot.lane.b32.xlu0 %v1058, 64
    %v1062 = vpop.permute.xlu0 %1061
    %v1064 = vmul.f32 %v1057, %v1062
    %1066 = vrot.lane.b32.xlu0 %v1064, 32
    %v1067 = vpop.permute.xlu0 %1066
    %v1069 = vadd.f32 %v1059, %v1067
    %v1070 = vtanh.pop %v1069
    %1072 = vrot.lane.b32.xlu0 %v1070, 64
    %v1073 = vpop.permute.xlu0 %1072
    %v1075 = vmul.f32 %v1057, %v1073
    %1077 = vrot.lane.b32.xlu0 %v1075, 32
    %v1078 = vpop.permute.xlu0 %1077
    %s1080 = scalar_lea.vmem %s8, 6
    %1081 = vst.msk [vmem:[%s1080] sm:$0x3] %vm451, %v1078
    %v1082 = vld [vmem:[#allocation3 + $0x8] sm:$0x3]
    %v1083 = vsel %vm344, %v974, 0
    %1085 = vmatprep.subr.mxu0 0.0
    %1086 = vmatpush1.msra.mxu0 %v335
    %1087 = vmatprep.subr.mxu0 0.0
    %1088 = vmatpush1.msra.mxu0 %v336
    %1089 = vmatprep.subr.mxu0 0.0
    %1090 = vmatpush1.msra.mxu0 %v337
    %1091 = vmatprep.subr.mxu0 0.0
    %1092 = vmatpush1.msra.mxu0 %v338
    %1093 = vmatprep.subr.mxu0 0.0
    %1094 = vmatpush1.msra.mxu0 0.0
    %1095 = vmatprep.subr.mxu0 0.0
    %1096 = vmatpush1.msra.mxu0 0.0
    %1097 = vmatprep.subr.mxu0 0.0
    %1098 = vmatpush1.msra.mxu0 0.0
    %1099 = vmatprep.subr.mxu0 0.0
    %1100 = vmatpush1.msra.mxu0 0.0
    %1101 = vmatprep.subr.mxu0 0.0
    %1102 = vmatpush1.msra.mxu0 0.0
    %1103 = vmatprep.subr.mxu0 0.0
    %1104 = vmatpush1.msra.mxu0 0.0
    %1105 = vmatprep.subr.mxu0 0.0
    %1106 = vmatpush1.msra.mxu0 0.0
    %1107 = vmatprep.subr.mxu0 0.0
    %1108 = vmatpush1.msra.mxu0 0.0
    %1109 = vmatprep.subr.mxu0 0.0
    %1110 = vmatpush1.msra.mxu0 0.0
    %1111 = vmatprep.subr.mxu0 0.0
    %1112 = vmatpush1.msra.mxu0 0.0
    %1113 = vmatprep.subr.mxu0 0.0
    %1114 = vmatpush1.msra.mxu0 0.0
    %1115 = vmatprep.subr.mxu0 0.0
    %1116 = vmatpush1.msra.mxu0 0.0
    %1117 = vmatprep.subr.mxu0 0.0
    %1118 = vmatpush1.msra.mxu0 0.0
    %1119 = vmatprep.subr.mxu0 0.0
    %1120 = vmatpush1.msra.mxu0 0.0
    %1121 = vmatprep.subr.mxu0 0.0
    %1122 = vmatpush1.msra.mxu0 0.0
    %1123 = vmatprep.subr.mxu0 0.0
    %1124 = vmatpush1.msra.mxu0 0.0
    %1125 = vmatprep.subr.mxu0 0.0
    %1126 = vmatpush1.msra.mxu0 0.0
    %1127 = vmatprep.subr.mxu0 0.0
    %1128 = vmatpush1.msra.mxu0 0.0
    %1129 = vmatprep.subr.mxu0 0.0
    %1130 = vmatpush1.msra.mxu0 0.0
    %1131 = vmatprep.subr.mxu0 0.0
    %1132 = vmatpush1.msra.mxu0 0.0
    %1133 = vmatprep.subr.mxu0 0.0
    %1134 = vmatpush1.msra.mxu0 0.0
    %1135 = vmatprep.subr.mxu0 0.0
    %1136 = vmatpush1.msra.mxu0 0.0
    %1137 = vmatprep.subr.mxu0 0.0
    %1138 = vmatpush1.msra.mxu0 0.0
    %1139 = vmatprep.subr.mxu0 0.0
    %1140 = vmatpush1.msra.mxu0 0.0
    %1141 = vmatprep.subr.mxu0 0.0
    %1142 = vmatpush1.msra.mxu0 0.0
    %1143 = vmatprep.subr.mxu0 0.0
    %1144 = vmatpush1.msra.mxu0 0.0
    %1145 = vmatprep.subr.mxu0 0.0
    %1146 = vmatpush1.msra.mxu0 0.0
    %1147 = vmatprep.subr.mxu0 0.0
    %1148 = vmatpush1.msra.mxu0 0.0
    %1149 = vmatprep.mubr.f32.mxu0 0.0
    %1150 = vmatmul.mubr.f32.gmra.mrb[0].mxu0 %v1083
    %v1151 = vpop.f32.mrb[0].mxu0
    %v1152 = vadd.f32 0.0, %v1151
    %v1153 = vpop.f32.mrb[0].mxu0
    %1154 = vdwg.mxu0
    %v1155 = vadd.f32 %v1082, %v1152
    %v1156 = vxor.u32 %v1155, 2147483648
    %v1157 = vmul.f32 %v1156, 1.442695
    %v1158 = vpow.pop %v1157
    %v1159 = vadd.f32 %v1158, 1.0
    %v1160 = vrcp.pop %v1159
    %v1161 = vmul.f32 1.0, %v1160
    %v1162 = vtanh.pop %v1155
    %v1163 = vmul.f32 %v1161, %v965
    %1165 = vrot.lane.b32.xlu0 %v1162, 64
    %v1166 = vpop.permute.xlu0 %1165
    %v1168 = vmul.f32 %v1161, %v1166
    %1170 = vrot.lane.b32.xlu0 %v1168, 32
    %v1171 = vpop.permute.xlu0 %1170
    %v1173 = vadd.f32 %v1163, %v1171
    %v1174 = vtanh.pop %v1173
    %1176 = vrot.lane.b32.xlu0 %v1174, 64
    %v1177 = vpop.permute.xlu0 %1176
    %v1179 = vmul.f32 %v1161, %v1177
    %1181 = vrot.lane.b32.xlu0 %v1179, 32
    %v1182 = vpop.permute.xlu0 %1181
    %s1184 = scalar_lea.vmem %s130, 8
    %1185 = vst.msk [vmem:[%s1184] sm:$0x3] %vm451, %v1182
    %v1186 = vld [vmem:[#allocation2 + $0x8] sm:$0x3]
    %v1187 = vsel %vm344, %v1078, 0
    %1189 = vmatprep.subr.mxu0 0.0
    %1190 = vmatpush1.msra.mxu0 %v331
    %1191 = vmatprep.subr.mxu0 0.0
    %1192 = vmatpush1.msra.mxu0 %v332
    %1193 = vmatprep.subr.mxu0 0.0
    %1194 = vmatpush1.msra.mxu0 %v333
    %1195 = vmatprep.subr.mxu0 0.0
    %1196 = vmatpush1.msra.mxu0 %v334
    %1197 = vmatprep.subr.mxu0 0.0
    %1198 = vmatpush1.msra.mxu0 0.0
    %1199 = vmatprep.subr.mxu0 0.0
    %1200 = vmatpush1.msra.mxu0 0.0
    %1201 = vmatprep.subr.mxu0 0.0
    %1202 = vmatpush1.msra.mxu0 0.0
    %1203 = vmatprep.subr.mxu0 0.0
    %1204 = vmatpush1.msra.mxu0 0.0
    %1205 = vmatprep.subr.mxu0 0.0
    %1206 = vmatpush1.msra.mxu0 0.0
    %1207 = vmatprep.subr.mxu0 0.0
    %1208 = vmatpush1.msra.mxu0 0.0
    %1209 = vmatprep.subr.mxu0 0.0
    %1210 = vmatpush1.msra.mxu0 0.0
    %1211 = vmatprep.subr.mxu0 0.0
    %1212 = vmatpush1.msra.mxu0 0.0
    %1213 = vmatprep.subr.mxu0 0.0
    %1214 = vmatpush1.msra.mxu0 0.0
    %1215 = vmatprep.subr.mxu0 0.0
    %1216 = vmatpush1.msra.mxu0 0.0
    %1217 = vmatprep.subr.mxu0 0.0
    %1218 = vmatpush1.msra.mxu0 0.0
    %1219 = vmatprep.subr.mxu0 0.0
    %1220 = vmatpush1.msra.mxu0 0.0
    %1221 = vmatprep.subr.mxu0 0.0
    %1222 = vmatpush1.msra.mxu0 0.0
    %1223 = vmatprep.subr.mxu0 0.0
    %1224 = vmatpush1.msra.mxu0 0.0
    %1225 = vmatprep.subr.mxu0 0.0
    %1226 = vmatpush1.msra.mxu0 0.0
    %1227 = vmatprep.subr.mxu0 0.0
    %1228 = vmatpush1.msra.mxu0 0.0
    %1229 = vmatprep.subr.mxu0 0.0
    %1230 = vmatpush1.msra.mxu0 0.0
    %1231 = vmatprep.subr.mxu0 0.0
    %1232 = vmatpush1.msra.mxu0 0.0
    %1233 = vmatprep.subr.mxu0 0.0
    %1234 = vmatpush1.msra.mxu0 0.0
    %1235 = vmatprep.subr.mxu0 0.0
    %1236 = vmatpush1.msra.mxu0 0.0
    %1237 = vmatprep.subr.mxu0 0.0
    %1238 = vmatpush1.msra.mxu0 0.0
    %1239 = vmatprep.subr.mxu0 0.0
    %1240 = vmatpush1.msra.mxu0 0.0
    %1241 = vmatprep.subr.mxu0 0.0
    %1242 = vmatpush1.msra.mxu0 0.0
    %1243 = vmatprep.subr.mxu0 0.0
    %1244 = vmatpush1.msra.mxu0 0.0
    %1245 = vmatprep.subr.mxu0 0.0
    %1246 = vmatpush1.msra.mxu0 0.0
    %1247 = vmatprep.subr.mxu0 0.0
    %1248 = vmatpush1.msra.mxu0 0.0
    %1249 = vmatprep.subr.mxu0 0.0
    %1250 = vmatpush1.msra.mxu0 0.0
    %1251 = vmatprep.subr.mxu0 0.0
    %1252 = vmatpush1.msra.mxu0 0.0
    %1253 = vmatprep.mubr.f32.mxu0 0.0
    %1254 = vmatmul.mubr.f32.gmra.mrb[0].mxu0 %v1187
    %v1255 = vpop.f32.mrb[0].mxu0
    %v1256 = vadd.f32 0.0, %v1255
    %v1257 = vpop.f32.mrb[0].mxu0
    %1258 = vdwg.mxu0
    %v1259 = vadd.f32 %v1186, %v1256
    %v1260 = vxor.u32 %v1259, 2147483648
    %v1261 = vmul.f32 %v1260, 1.442695
    %v1262 = vpow.pop %v1261
    %v1263 = vadd.f32 %v1262, 1.0
    %v1264 = vrcp.pop %v1263
    %v1265 = vmul.f32 1.0, %v1264
    %v1266 = vtanh.pop %v1259
    %v1267 = vmul.f32 %v1265, %v1069
    %1269 = vrot.lane.b32.xlu0 %v1266, 64
    %v1270 = vpop.permute.xlu0 %1269
    %v1272 = vmul.f32 %v1265, %v1270
    %1274 = vrot.lane.b32.xlu0 %v1272, 32
    %v1275 = vpop.permute.xlu0 %1274
    %v1277 = vadd.f32 %v1267, %v1275
    %v1278 = vtanh.pop %v1277
    %1280 = vrot.lane.b32.xlu0 %v1278, 64
    %v1281 = vpop.permute.xlu0 %1280
    %v1283 = vmul.f32 %v1265, %v1281
    %1285 = vrot.lane.b32.xlu0 %v1283, 32
    %v1286 = vpop.permute.xlu0 %1285
    %s1288 = scalar_lea.vmem %s8, 8
    %1289 = vst.msk [vmem:[%s1288] sm:$0x3] %vm451, %v1286
    %v1290 = vld [vmem:[#allocation3 + $0x6] sm:$0x3]
    %v1291 = vsel %vm344, %v1182, 0
    %1293 = vmatprep.subr.mxu0 0.0
    %1294 = vmatpush1.msra.mxu0 %v335
    %1295 = vmatprep.subr.mxu0 0.0
    %1296 = vmatpush1.msra.mxu0 %v336
    %1297 = vmatprep.subr.mxu0 0.0
    %1298 = vmatpush1.msra.mxu0 %v337
    %1299 = vmatprep.subr.mxu0 0.0
    %1300 = vmatpush1.msra.mxu0 %v338
    %1301 = vmatprep.subr.mxu0 0.0
    %1302 = vmatpush1.msra.mxu0 0.0
    %1303 = vmatprep.subr.mxu0 0.0
    %1304 = vmatpush1.msra.mxu0 0.0
    %1305 = vmatprep.subr.mxu0 0.0
    %1306 = vmatpush1.msra.mxu0 0.0
    %1307 = vmatprep.subr.mxu0 0.0
    %1308 = vmatpush1.msra.mxu0 0.0
    %1309 = vmatprep.subr.mxu0 0.0
    %1310 = vmatpush1.msra.mxu0 0.0
    %1311 = vmatprep.subr.mxu0 0.0
    %1312 = vmatpush1.msra.mxu0 0.0
    %1313 = vmatprep.subr.mxu0 0.0
    %1314 = vmatpush1.msra.mxu0 0.0
    %1315 = vmatprep.subr.mxu0 0.0
    %1316 = vmatpush1.msra.mxu0 0.0
    %1317 = vmatprep.subr.mxu0 0.0
    %1318 = vmatpush1.msra.mxu0 0.0
    %1319 = vmatprep.subr.mxu0 0.0
    %1320 = vmatpush1.msra.mxu0 0.0
    %1321 = vmatprep.subr.mxu0 0.0
    %1322 = vmatpush1.msra.mxu0 0.0
    %1323 = vmatprep.subr.mxu0 0.0
    %1324 = vmatpush1.msra.mxu0 0.0
    %1325 = vmatprep.subr.mxu0 0.0
    %1326 = vmatpush1.msra.mxu0 0.0
    %1327 = vmatprep.subr.mxu0 0.0
    %1328 = vmatpush1.msra.mxu0 0.0
    %1329 = vmatprep.subr.mxu0 0.0
    %1330 = vmatpush1.msra.mxu0 0.0
    %1331 = vmatprep.subr.mxu0 0.0
    %1332 = vmatpush1.msra.mxu0 0.0
    %1333 = vmatprep.subr.mxu0 0.0
    %1334 = vmatpush1.msra.mxu0 0.0
    %1335 = vmatprep.subr.mxu0 0.0
    %1336 = vmatpush1.msra.mxu0 0.0
    %1337 = vmatprep.subr.mxu0 0.0
    %1338 = vmatpush1.msra.mxu0 0.0
    %1339 = vmatprep.subr.mxu0 0.0
    %1340 = vmatpush1.msra.mxu0 0.0
    %1341 = vmatprep.subr.mxu0 0.0
    %1342 = vmatpush1.msra.mxu0 0.0
    %1343 = vmatprep.subr.mxu0 0.0
    %1344 = vmatpush1.msra.mxu0 0.0
    %1345 = vmatprep.subr.mxu0 0.0
    %1346 = vmatpush1.msra.mxu0 0.0
    %1347 = vmatprep.subr.mxu0 0.0
    %1348 = vmatpush1.msra.mxu0 0.0
    %1349 = vmatprep.subr.mxu0 0.0
    %1350 = vmatpush1.msra.mxu0 0.0
    %1351 = vmatprep.subr.mxu0 0.0
    %1352 = vmatpush1.msra.mxu0 0.0
    %1353 = vmatprep.subr.mxu0 0.0
    %1354 = vmatpush1.msra.mxu0 0.0
    %1355 = vmatprep.subr.mxu0 0.0
    %1356 = vmatpush1.msra.mxu0 0.0
    %1357 = vmatprep.mubr.f32.mxu0 0.0
    %1358 = vmatmul.mubr.f32.gmra.mrb[0].mxu0 %v1291
    %v1359 = vpop.f32.mrb[0].mxu0
    %v1360 = vadd.f32 0.0, %v1359
    %v1361 = vpop.f32.mrb[0].mxu0
    %1362 = vdwg.mxu0
    %v1363 = vadd.f32 %v1290, %v1360
    %v1364 = vxor.u32 %v1363, 2147483648
    %v1365 = vmul.f32 %v1364, 1.442695
    %v1366 = vpow.pop %v1365
    %v1367 = vadd.f32 %v1366, 1.0
    %v1368 = vrcp.pop %v1367
    %v1369 = vmul.f32 1.0, %v1368
    %v1370 = vtanh.pop %v1363
    %v1371 = vmul.f32 %v1369, %v1173
    %1373 = vrot.lane.b32.xlu0 %v1370, 64
    %v1374 = vpop.permute.xlu0 %1373
    %v1376 = vmul.f32 %v1369, %v1374
    %1378 = vrot.lane.b32.xlu0 %v1376, 32
    %v1379 = vpop.permute.xlu0 %1378
    %v1381 = vadd.f32 %v1371, %v1379
    %v1382 = vtanh.pop %v1381
    %1384 = vrot.lane.b32.xlu0 %v1382, 64
    %v1385 = vpop.permute.xlu0 %1384
    %v1387 = vmul.f32 %v1369, %v1385
    %1389 = vrot.lane.b32.xlu0 %v1387, 32
    %v1390 = vpop.permute.xlu0 %1389
    %s1392 = scalar_lea.vmem %s130, 6
    %1393 = vst.msk [vmem:[%s1392] sm:$0x3] %vm451, %v1390
    %v1394 = vld [vmem:[#allocation2 + $0xa] sm:$0x3]
    %v1395 = vsel %vm344, %v1286, 0
    %1397 = vmatprep.subr.mxu0 0.0
    %1398 = vmatpush1.msra.mxu0 %v331
    %1399 = vmatprep.subr.mxu0 0.0
    %1400 = vmatpush1.msra.mxu0 %v332
    %1401 = vmatprep.subr.mxu0 0.0
    %1402 = vmatpush1.msra.mxu0 %v333
    %1403 = vmatprep.subr.mxu0 0.0
    %1404 = vmatpush1.msra.mxu0 %v334
    %1405 = vmatprep.subr.mxu0 0.0
    %1406 = vmatpush1.msra.mxu0 0.0
    %1407 = vmatprep.subr.mxu0 0.0
    %1408 = vmatpush1.msra.mxu0 0.0
    %1409 = vmatprep.subr.mxu0 0.0
    %1410 = vmatpush1.msra.mxu0 0.0
    %1411 = vmatprep.subr.mxu0 0.0
    %1412 = vmatpush1.msra.mxu0 0.0
    %1413 = vmatprep.subr.mxu0 0.0
    %1414 = vmatpush1.msra.mxu0 0.0
    %1415 = vmatprep.subr.mxu0 0.0
    %1416 = vmatpush1.msra.mxu0 0.0
    %1417 = vmatprep.subr.mxu0 0.0
    %1418 = vmatpush1.msra.mxu0 0.0
    %1419 = vmatprep.subr.mxu0 0.0
    %1420 = vmatpush1.msra.mxu0 0.0
    %1421 = vmatprep.subr.mxu0 0.0
    %1422 = vmatpush1.msra.mxu0 0.0
    %1423 = vmatprep.subr.mxu0 0.0
    %1424 = vmatpush1.msra.mxu0 0.0
    %1425 = vmatprep.subr.mxu0 0.0
    %1426 = vmatpush1.msra.mxu0 0.0
    %1427 = vmatprep.subr.mxu0 0.0
    %1428 = vmatpush1.msra.mxu0 0.0
    %1429 = vmatprep.subr.mxu0 0.0
    %1430 = vmatpush1.msra.mxu0 0.0
    %1431 = vmatprep.subr.mxu0 0.0
    %1432 = vmatpush1.msra.mxu0 0.0
    %1433 = vmatprep.subr.mxu0 0.0
    %1434 = vmatpush1.msra.mxu0 0.0
    %1435 = vmatprep.subr.mxu0 0.0
    %1436 = vmatpush1.msra.mxu0 0.0
    %1437 = vmatprep.subr.mxu0 0.0
    %1438 = vmatpush1.msra.mxu0 0.0
    %1439 = vmatprep.subr.mxu0 0.0
    %1440 = vmatpush1.msra.mxu0 0.0
    %1441 = vmatprep.subr.mxu0 0.0
    %1442 = vmatpush1.msra.mxu0 0.0
    %1443 = vmatprep.subr.mxu0 0.0
    %1444 = vmatpush1.msra.mxu0 0.0
    %1445 = vmatprep.subr.mxu0 0.0
    %1446 = vmatpush1.msra.mxu0 0.0
    %1447 = vmatprep.subr.mxu0 0.0
    %1448 = vmatpush1.msra.mxu0 0.0
    %1449 = vmatprep.subr.mxu0 0.0
    %1450 = vmatpush1.msra.mxu0 0.0
    %1451 = vmatprep.subr.mxu0 0.0
    %1452 = vmatpush1.msra.mxu0 0.0
    %1453 = vmatprep.subr.mxu0 0.0
    %1454 = vmatpush1.msra.mxu0 0.0
    %1455 = vmatprep.subr.mxu0 0.0
    %1456 = vmatpush1.msra.mxu0 0.0
    %1457 = vmatprep.subr.mxu0 0.0
    %1458 = vmatpush1.msra.mxu0 0.0
    %1459 = vmatprep.subr.mxu0 0.0
    %1460 = vmatpush1.msra.mxu0 0.0
    %1461 = vmatprep.mubr.f32.mxu0 0.0
    %1462 = vmatmul.mubr.f32.gmra.mrb[0].mxu0 %v1395
    %v1463 = vpop.f32.mrb[0].mxu0
    %v1464 = vadd.f32 0.0, %v1463
    %v1465 = vpop.f32.mrb[0].mxu0
    %1466 = vdwg.mxu0
    %v1467 = vadd.f32 %v1394, %v1464
    %v1468 = vxor.u32 %v1467, 2147483648
    %v1469 = vmul.f32 %v1468, 1.442695
    %v1470 = vpow.pop %v1469
    %v1471 = vadd.f32 %v1470, 1.0
    %v1472 = vrcp.pop %v1471
    %v1473 = vmul.f32 1.0, %v1472
    %v1474 = vtanh.pop %v1467
    %v1475 = vmul.f32 %v1473, %v1277
    %1477 = vrot.lane.b32.xlu0 %v1474, 64
    %v1478 = vpop.permute.xlu0 %1477
    %v1480 = vmul.f32 %v1473, %v1478
    %1482 = vrot.lane.b32.xlu0 %v1480, 32
    %v1483 = vpop.permute.xlu0 %1482
    %v1485 = vadd.f32 %v1475, %v1483
    %v1486 = vtanh.pop %v1485
    %1488 = vrot.lane.b32.xlu0 %v1486, 64
    %v1489 = vpop.permute.xlu0 %1488
    %v1491 = vmul.f32 %v1473, %v1489
    %1493 = vrot.lane.b32.xlu0 %v1491, 32
    %v1494 = vpop.permute.xlu0 %1493
    %s1496 = scalar_lea.vmem %s8, 10
    %1497 = vst.msk [vmem:[%s1496] sm:$0x3] %vm451, %v1494
    %v1498 = vld [vmem:[#allocation3 + $0x4] sm:$0x3]
    %v1499 = vsel %vm344, %v1390, 0
    %1501 = vmatprep.subr.mxu0 0.0
    %1502 = vmatpush1.msra.mxu0 %v335
    %1503 = vmatprep.subr.mxu0 0.0
    %1504 = vmatpush1.msra.mxu0 %v336
    %1505 = vmatprep.subr.mxu0 0.0
    %1506 = vmatpush1.msra.mxu0 %v337
    %1507 = vmatprep.subr.mxu0 0.0
    %1508 = vmatpush1.msra.mxu0 %v338
    %1509 = vmatprep.subr.mxu0 0.0
    %1510 = vmatpush1.msra.mxu0 0.0
    %1511 = vmatprep.subr.mxu0 0.0
    %1512 = vmatpush1.msra.mxu0 0.0
    %1513 = vmatprep.subr.mxu0 0.0
    %1514 = vmatpush1.msra.mxu0 0.0
    %1515 = vmatprep.subr.mxu0 0.0
    %1516 = vmatpush1.msra.mxu0 0.0
    %1517 = vmatprep.subr.mxu0 0.0
    %1518 = vmatpush1.msra.mxu0 0.0
    %1519 = vmatprep.subr.mxu0 0.0
    %1520 = vmatpush1.msra.mxu0 0.0
    %1521 = vmatprep.subr.mxu0 0.0
    %1522 = vmatpush1.msra.mxu0 0.0
    %1523 = vmatprep.subr.mxu0 0.0
    %1524 = vmatpush1.msra.mxu0 0.0
    %1525 = vmatprep.subr.mxu0 0.0
    %1526 = vmatpush1.msra.mxu0 0.0
    %1527 = vmatprep.subr.mxu0 0.0
    %1528 = vmatpush1.msra.mxu0 0.0
    %1529 = vmatprep.subr.mxu0 0.0
    %1530 = vmatpush1.msra.mxu0 0.0
    %1531 = vmatprep.subr.mxu0 0.0
    %1532 = vmatpush1.msra.mxu0 0.0
    %1533 = vmatprep.subr.mxu0 0.0
    %1534 = vmatpush1.msra.mxu0 0.0
    %1535 = vmatprep.subr.mxu0 0.0
    %1536 = vmatpush1.msra.mxu0 0.0
    %1537 = vmatprep.subr.mxu0 0.0
    %1538 = vmatpush1.msra.mxu0 0.0
    %1539 = vmatprep.subr.mxu0 0.0
    %1540 = vmatpush1.msra.mxu0 0.0
    %1541 = vmatprep.subr.mxu0 0.0
    %1542 = vmatpush1.msra.mxu0 0.0
    %1543 = vmatprep.subr.mxu0 0.0
    %1544 = vmatpush1.msra.mxu0 0.0
    %1545 = vmatprep.subr.mxu0 0.0
    %1546 = vmatpush1.msra.mxu0 0.0
    %1547 = vmatprep.subr.mxu0 0.0
    %1548 = vmatpush1.msra.mxu0 0.0
    %1549 = vmatprep.subr.mxu0 0.0
    %1550 = vmatpush1.msra.mxu0 0.0
    %1551 = vmatprep.subr.mxu0 0.0
    %1552 = vmatpush1.msra.mxu0 0.0
    %1553 = vmatprep.subr.mxu0 0.0
    %1554 = vmatpush1.msra.mxu0 0.0
    %1555 = vmatprep.subr.mxu0 0.0
    %1556 = vmatpush1.msra.mxu0 0.0
    %1557 = vmatprep.subr.mxu0 0.0
    %1558 = vmatpush1.msra.mxu0 0.0
    %1559 = vmatprep.subr.mxu0 0.0
    %1560 = vmatpush1.msra.mxu0 0.0
    %1561 = vmatprep.subr.mxu0 0.0
    %1562 = vmatpush1.msra.mxu0 0.0
    %1563 = vmatprep.subr.mxu0 0.0
    %1564 = vmatpush1.msra.mxu0 0.0
    %1565 = vmatprep.mubr.f32.mxu0 0.0
    %1566 = vmatmul.mubr.f32.gmra.mrb[0].mxu0 %v1499
    %v1567 = vpop.f32.mrb[0].mxu0
    %v1568 = vadd.f32 0.0, %v1567
    %v1569 = vpop.f32.mrb[0].mxu0
    %1570 = vdwg.mxu0
    %v1571 = vadd.f32 %v1498, %v1568
    %v1572 = vxor.u32 %v1571, 2147483648
    %v1573 = vmul.f32 %v1572, 1.442695
    %v1574 = vpow.pop %v1573
    %v1575 = vadd.f32 %v1574, 1.0
    %v1576 = vrcp.pop %v1575
    %v1577 = vmul.f32 1.0, %v1576
    %v1578 = vtanh.pop %v1571
    %v1579 = vmul.f32 %v1577, %v1381
    %1581 = vrot.lane.b32.xlu0 %v1578, 64
    %v1582 = vpop.permute.xlu0 %1581
    %v1584 = vmul.f32 %v1577, %v1582
    %1586 = vrot.lane.b32.xlu0 %v1584, 32
    %v1587 = vpop.permute.xlu0 %1586
    %v1589 = vadd.f32 %v1579, %v1587
    %v1590 = vtanh.pop %v1589
    %1592 = vrot.lane.b32.xlu0 %v1590, 64
    %v1593 = vpop.permute.xlu0 %1592
    %v1595 = vmul.f32 %v1577, %v1593
    %1597 = vrot.lane.b32.xlu0 %v1595, 32
    %v1598 = vpop.permute.xlu0 %1597
    %s1600 = scalar_lea.vmem %s130, 4
    %1601 = vst.msk [vmem:[%s1600] sm:$0x3] %vm451, %v1598
    %v1602 = vld [vmem:[#allocation2 + $0xc] sm:$0x3]
    %v1603 = vsel %vm344, %v1494, 0
    %1605 = vmatprep.subr.mxu0 0.0
    %1606 = vmatpush1.msra.mxu0 %v331
    %1607 = vmatprep.subr.mxu0 0.0
    %1608 = vmatpush1.msra.mxu0 %v332
    %1609 = vmatprep.subr.mxu0 0.0
    %1610 = vmatpush1.msra.mxu0 %v333
    %1611 = vmatprep.subr.mxu0 0.0
    %1612 = vmatpush1.msra.mxu0 %v334
    %1613 = vmatprep.subr.mxu0 0.0
    %1614 = vmatpush1.msra.mxu0 0.0
    %1615 = vmatprep.subr.mxu0 0.0
    %1616 = vmatpush1.msra.mxu0 0.0
    %1617 = vmatprep.subr.mxu0 0.0
    %1618 = vmatpush1.msra.mxu0 0.0
    %1619 = vmatprep.subr.mxu0 0.0
    %1620 = vmatpush1.msra.mxu0 0.0
    %1621 = vmatprep.subr.mxu0 0.0
    %1622 = vmatpush1.msra.mxu0 0.0
    %1623 = vmatprep.subr.mxu0 0.0
    %1624 = vmatpush1.msra.mxu0 0.0
    %1625 = vmatprep.subr.mxu0 0.0
    %1626 = vmatpush1.msra.mxu0 0.0
    %1627 = vmatprep.subr.mxu0 0.0
    %1628 = vmatpush1.msra.mxu0 0.0
    %1629 = vmatprep.subr.mxu0 0.0
    %1630 = vmatpush1.msra.mxu0 0.0
    %1631 = vmatprep.subr.mxu0 0.0
    %1632 = vmatpush1.msra.mxu0 0.0
    %1633 = vmatprep.subr.mxu0 0.0
    %1634 = vmatpush1.msra.mxu0 0.0
    %1635 = vmatprep.subr.mxu0 0.0
    %1636 = vmatpush1.msra.mxu0 0.0
    %1637 = vmatprep.subr.mxu0 0.0
    %1638 = vmatpush1.msra.mxu0 0.0
    %1639 = vmatprep.subr.mxu0 0.0
    %1640 = vmatpush1.msra.mxu0 0.0
    %1641 = vmatprep.subr.mxu0 0.0
    %1642 = vmatpush1.msra.mxu0 0.0
    %1643 = vmatprep.subr.mxu0 0.0
    %1644 = vmatpush1.msra.mxu0 0.0
    %1645 = vmatprep.subr.mxu0 0.0
    %1646 = vmatpush1.msra.mxu0 0.0
    %1647 = vmatprep.subr.mxu0 0.0
    %1648 = vmatpush1.msra.mxu0 0.0
    %1649 = vmatprep.subr.mxu0 0.0
    %1650 = vmatpush1.msra.mxu0 0.0
    %1651 = vmatprep.subr.mxu0 0.0
    %1652 = vmatpush1.msra.mxu0 0.0
    %1653 = vmatprep.subr.mxu0 0.0
    %1654 = vmatpush1.msra.mxu0 0.0
    %1655 = vmatprep.subr.mxu0 0.0
    %1656 = vmatpush1.msra.mxu0 0.0
    %1657 = vmatprep.subr.mxu0 0.0
    %1658 = vmatpush1.msra.mxu0 0.0
    %1659 = vmatprep.subr.mxu0 0.0
    %1660 = vmatpush1.msra.mxu0 0.0
    %1661 = vmatprep.subr.mxu0 0.0
    %1662 = vmatpush1.msra.mxu0 0.0
    %1663 = vmatprep.subr.mxu0 0.0
    %1664 = vmatpush1.msra.mxu0 0.0
    %1665 = vmatprep.subr.mxu0 0.0
    %1666 = vmatpush1.msra.mxu0 0.0
    %1667 = vmatprep.subr.mxu0 0.0
    %1668 = vmatpush1.msra.mxu0 0.0
    %1669 = vmatprep.mubr.f32.mxu0 0.0
    %1670 = vmatmul.mubr.f32.gmra.mrb[0].mxu0 %v1603
    %v1671 = vpop.f32.mrb[0].mxu0
    %v1672 = vadd.f32 0.0, %v1671
    %v1673 = vpop.f32.mrb[0].mxu0
    %1674 = vdwg.mxu0
    %v1675 = vadd.f32 %v1602, %v1672
    %v1676 = vxor.u32 %v1675, 2147483648
    %v1677 = vmul.f32 %v1676, 1.442695
    %v1678 = vpow.pop %v1677
    %v1679 = vadd.f32 %v1678, 1.0
    %v1680 = vrcp.pop %v1679
    %v1681 = vmul.f32 1.0, %v1680
    %v1682 = vtanh.pop %v1675
    %v1683 = vmul.f32 %v1681, %v1485
    %1685 = vrot.lane.b32.xlu0 %v1682, 64
    %v1686 = vpop.permute.xlu0 %1685
    %v1688 = vmul.f32 %v1681, %v1686
    %1690 = vrot.lane.b32.xlu0 %v1688, 32
    %v1691 = vpop.permute.xlu0 %1690
    %v1693 = vadd.f32 %v1683, %v1691
    %v1694 = vtanh.pop %v1693
    %1696 = vrot.lane.b32.xlu0 %v1694, 64
    %v1697 = vpop.permute.xlu0 %1696
    %v1699 = vmul.f32 %v1681, %v1697
    %1701 = vrot.lane.b32.xlu0 %v1699, 32
    %v1702 = vpop.permute.xlu0 %1701
    %s1704 = scalar_lea.vmem %s8, 12
    %1705 = vst.msk [vmem:[%s1704] sm:$0x3] %vm451, %v1702
    %v1706 = vld [vmem:[#allocation3 + $0x2] sm:$0x3]
    %v1707 = vsel %vm344, %v1598, 0
    %1709 = vmatprep.subr.mxu0 0.0
    %1710 = vmatpush1.msra.mxu0 %v335
    %1711 = vmatprep.subr.mxu0 0.0
    %1712 = vmatpush1.msra.mxu0 %v336
    %1713 = vmatprep.subr.mxu0 0.0
    %1714 = vmatpush1.msra.mxu0 %v337
    %1715 = vmatprep.subr.mxu0 0.0
    %1716 = vmatpush1.msra.mxu0 %v338
    %1717 = vmatprep.subr.mxu0 0.0
    %1718 = vmatpush1.msra.mxu0 0.0
    %1719 = vmatprep.subr.mxu0 0.0
    %1720 = vmatpush1.msra.mxu0 0.0
    %1721 = vmatprep.subr.mxu0 0.0
    %1722 = vmatpush1.msra.mxu0 0.0
    %1723 = vmatprep.subr.mxu0 0.0
    %1724 = vmatpush1.msra.mxu0 0.0
    %1725 = vmatprep.subr.mxu0 0.0
    %1726 = vmatpush1.msra.mxu0 0.0
    %1727 = vmatprep.subr.mxu0 0.0
    %1728 = vmatpush1.msra.mxu0 0.0
    %1729 = vmatprep.subr.mxu0 0.0
    %1730 = vmatpush1.msra.mxu0 0.0
    %1731 = vmatprep.subr.mxu0 0.0
    %1732 = vmatpush1.msra.mxu0 0.0
    %1733 = vmatprep.subr.mxu0 0.0
    %1734 = vmatpush1.msra.mxu0 0.0
    %1735 = vmatprep.subr.mxu0 0.0
    %1736 = vmatpush1.msra.mxu0 0.0
    %1737 = vmatprep.subr.mxu0 0.0
    %1738 = vmatpush1.msra.mxu0 0.0
    %1739 = vmatprep.subr.mxu0 0.0
    %1740 = vmatpush1.msra.mxu0 0.0
    %1741 = vmatprep.subr.mxu0 0.0
    %1742 = vmatpush1.msra.mxu0 0.0
    %1743 = vmatprep.subr.mxu0 0.0
    %1744 = vmatpush1.msra.mxu0 0.0
    %1745 = vmatprep.subr.mxu0 0.0
    %1746 = vmatpush1.msra.mxu0 0.0
    %1747 = vmatprep.subr.mxu0 0.0
    %1748 = vmatpush1.msra.mxu0 0.0
    %1749 = vmatprep.subr.mxu0 0.0
    %1750 = vmatpush1.msra.mxu0 0.0
    %1751 = vmatprep.subr.mxu0 0.0
    %1752 = vmatpush1.msra.mxu0 0.0
    %1753 = vmatprep.subr.mxu0 0.0
    %1754 = vmatpush1.msra.mxu0 0.0
    %1755 = vmatprep.subr.mxu0 0.0
    %1756 = vmatpush1.msra.mxu0 0.0
    %1757 = vmatprep.subr.mxu0 0.0
    %1758 = vmatpush1.msra.mxu0 0.0
    %1759 = vmatprep.subr.mxu0 0.0
    %1760 = vmatpush1.msra.mxu0 0.0
    %1761 = vmatprep.subr.mxu0 0.0
    %1762 = vmatpush1.msra.mxu0 0.0
    %1763 = vmatprep.subr.mxu0 0.0
    %1764 = vmatpush1.msra.mxu0 0.0
    %1765 = vmatprep.subr.mxu0 0.0
    %1766 = vmatpush1.msra.mxu0 0.0
    %1767 = vmatprep.subr.mxu0 0.0
    %1768 = vmatpush1.msra.mxu0 0.0
    %1769 = vmatprep.subr.mxu0 0.0
    %1770 = vmatpush1.msra.mxu0 0.0
    %1771 = vmatprep.subr.mxu0 0.0
    %1772 = vmatpush1.msra.mxu0 0.0
    %1773 = vmatprep.mubr.f32.mxu0 0.0
    %1774 = vmatmul.mubr.f32.gmra.mrb[0].mxu0 %v1707
    %v1775 = vpop.f32.mrb[0].mxu0
    %v1776 = vadd.f32 0.0, %v1775
    %v1777 = vpop.f32.mrb[0].mxu0
    %1778 = vdwg.mxu0
    %v1779 = vadd.f32 %v1706, %v1776
    %v1780 = vxor.u32 %v1779, 2147483648
    %v1781 = vmul.f32 %v1780, 1.442695
    %v1782 = vpow.pop %v1781
    %v1783 = vadd.f32 %v1782, 1.0
    %v1784 = vrcp.pop %v1783
    %v1785 = vmul.f32 1.0, %v1784
    %v1786 = vtanh.pop %v1779
    %v1787 = vmul.f32 %v1785, %v1589
    %1789 = vrot.lane.b32.xlu0 %v1786, 64
    %v1790 = vpop.permute.xlu0 %1789
    %v1792 = vmul.f32 %v1785, %v1790
    %1794 = vrot.lane.b32.xlu0 %v1792, 32
    %v1795 = vpop.permute.xlu0 %1794
    %v1797 = vadd.f32 %v1787, %v1795
    %v1798 = vtanh.pop %v1797
    %1800 = vrot.lane.b32.xlu0 %v1798, 64
    %v1801 = vpop.permute.xlu0 %1800
    %v1803 = vmul.f32 %v1785, %v1801
    %1805 = vrot.lane.b32.xlu0 %v1803, 32
    %v1806 = vpop.permute.xlu0 %1805
    %s1808 = scalar_lea.vmem %s130, 2
    %1809 = vst.msk [vmem:[%s1808] sm:$0x3] %vm451, %v1806
    %v1810 = vld [vmem:[#allocation2 + $0xe] sm:$0x3]
    %v1811 = vsel %vm344, %v1702, 0
    %1813 = vmatprep.subr.mxu0 0.0
    %1814 = vmatpush1.msra.mxu0 %v331
    %1815 = vmatprep.subr.mxu0 0.0
    %1816 = vmatpush1.msra.mxu0 %v332
    %1817 = vmatprep.subr.mxu0 0.0
    %1818 = vmatpush1.msra.mxu0 %v333
    %1819 = vmatprep.subr.mxu0 0.0
    %1820 = vmatpush1.msra.mxu0 %v334
    %1821 = vmatprep.subr.mxu0 0.0
    %1822 = vmatpush1.msra.mxu0 0.0
    %1823 = vmatprep.subr.mxu0 0.0
    %1824 = vmatpush1.msra.mxu0 0.0
    %1825 = vmatprep.subr.mxu0 0.0
    %1826 = vmatpush1.msra.mxu0 0.0
    %1827 = vmatprep.subr.mxu0 0.0
    %1828 = vmatpush1.msra.mxu0 0.0
    %1829 = vmatprep.subr.mxu0 0.0
    %1830 = vmatpush1.msra.mxu0 0.0
    %1831 = vmatprep.subr.mxu0 0.0
    %1832 = vmatpush1.msra.mxu0 0.0
    %1833 = vmatprep.subr.mxu0 0.0
    %1834 = vmatpush1.msra.mxu0 0.0
    %1835 = vmatprep.subr.mxu0 0.0
    %1836 = vmatpush1.msra.mxu0 0.0
    %1837 = vmatprep.subr.mxu0 0.0
    %1838 = vmatpush1.msra.mxu0 0.0
    %1839 = vmatprep.subr.mxu0 0.0
    %1840 = vmatpush1.msra.mxu0 0.0
    %1841 = vmatprep.subr.mxu0 0.0
    %1842 = vmatpush1.msra.mxu0 0.0
    %1843 = vmatprep.subr.mxu0 0.0
    %1844 = vmatpush1.msra.mxu0 0.0
    %1845 = vmatprep.subr.mxu0 0.0
    %1846 = vmatpush1.msra.mxu0 0.0
    %1847 = vmatprep.subr.mxu0 0.0
    %1848 = vmatpush1.msra.mxu0 0.0
    %1849 = vmatprep.subr.mxu0 0.0
    %1850 = vmatpush1.msra.mxu0 0.0
    %1851 = vmatprep.subr.mxu0 0.0
    %1852 = vmatpush1.msra.mxu0 0.0
    %1853 = vmatprep.subr.mxu0 0.0
    %1854 = vmatpush1.msra.mxu0 0.0
    %1855 = vmatprep.subr.mxu0 0.0
    %1856 = vmatpush1.msra.mxu0 0.0
    %1857 = vmatprep.subr.mxu0 0.0
    %1858 = vmatpush1.msra.mxu0 0.0
    %1859 = vmatprep.subr.mxu0 0.0
    %1860 = vmatpush1.msra.mxu0 0.0
    %1861 = vmatprep.subr.mxu0 0.0
    %1862 = vmatpush1.msra.mxu0 0.0
    %1863 = vmatprep.subr.mxu0 0.0
    %1864 = vmatpush1.msra.mxu0 0.0
    %1865 = vmatprep.subr.mxu0 0.0
    %1866 = vmatpush1.msra.mxu0 0.0
    %1867 = vmatprep.subr.mxu0 0.0
    %1868 = vmatpush1.msra.mxu0 0.0
    %1869 = vmatprep.subr.mxu0 0.0
    %1870 = vmatpush1.msra.mxu0 0.0
    %1871 = vmatprep.subr.mxu0 0.0
    %1872 = vmatpush1.msra.mxu0 0.0
    %1873 = vmatprep.subr.mxu0 0.0
    %1874 = vmatpush1.msra.mxu0 0.0
    %1875 = vmatprep.subr.mxu0 0.0
    %1876 = vmatpush1.msra.mxu0 0.0
    %1877 = vmatprep.mubr.f32.mxu0 0.0
    %1878 = vmatmul.mubr.f32.gmra.mrb[0].mxu0 %v1811
    %v1879 = vpop.f32.mrb[0].mxu0
    %v1880 = vadd.f32 0.0, %v1879
    %v1881 = vpop.f32.mrb[0].mxu0
    %1882 = vdwg.mxu0
    %v1883 = vadd.f32 %v1810, %v1880
    %v1884 = vxor.u32 %v1883, 2147483648
    %v1885 = vmul.f32 %v1884, 1.442695
    %v1886 = vpow.pop %v1885
    %v1887 = vadd.f32 %v1886, 1.0
    %v1888 = vrcp.pop %v1887
    %v1889 = vmul.f32 1.0, %v1888
    %v1890 = vtanh.pop %v1883
    %v1891 = vmul.f32 %v1889, %v1693
    %1893 = vrot.lane.b32.xlu0 %v1890, 64
    %v1894 = vpop.permute.xlu0 %1893
    %v1896 = vmul.f32 %v1889, %v1894
    %1898 = vrot.lane.b32.xlu0 %v1896, 32
    %v1899 = vpop.permute.xlu0 %1898
    %v1901 = vadd.f32 %v1891, %v1899
    %v1902 = vtanh.pop %v1901
    %1904 = vrot.lane.b32.xlu0 %v1902, 64
    %v1905 = vpop.permute.xlu0 %1904
    %v1907 = vmul.f32 %v1889, %v1905
    %1909 = vrot.lane.b32.xlu0 %v1907, 32
    %v1910 = vpop.permute.xlu0 %1909
    %s1912 = scalar_lea.vmem %s8, 14
    %1913 = vst.msk [vmem:[%s1912] sm:$0x3] %vm451, %v1910
    %v1914 = vld [vmem:[#allocation3] sm:$0x3]
    %v1915 = vsel %vm344, %v1806, 0
    %1917 = vmatprep.subr.mxu0 0.0
    %1918 = vmatpush1.msra.mxu0 %v335
    %1919 = vmatprep.subr.mxu0 0.0
    %1920 = vmatpush1.msra.mxu0 %v336
    %1921 = vmatprep.subr.mxu0 0.0
    %1922 = vmatpush1.msra.mxu0 %v337
    %1923 = vmatprep.subr.mxu0 0.0
    %1924 = vmatpush1.msra.mxu0 %v338
    %1925 = vmatprep.subr.mxu0 0.0
    %1926 = vmatpush1.msra.mxu0 0.0
    %1927 = vmatprep.subr.mxu0 0.0
    %1928 = vmatpush1.msra.mxu0 0.0
    %1929 = vmatprep.subr.mxu0 0.0
    %1930 = vmatpush1.msra.mxu0 0.0
    %1931 = vmatprep.subr.mxu0 0.0
    %1932 = vmatpush1.msra.mxu0 0.0
    %1933 = vmatprep.subr.mxu0 0.0
    %1934 = vmatpush1.msra.mxu0 0.0
    %1935 = vmatprep.subr.mxu0 0.0
    %1936 = vmatpush1.msra.mxu0 0.0
    %1937 = vmatprep.subr.mxu0 0.0
    %1938 = vmatpush1.msra.mxu0 0.0
    %1939 = vmatprep.subr.mxu0 0.0
    %1940 = vmatpush1.msra.mxu0 0.0
    %1941 = vmatprep.subr.mxu0 0.0
    %1942 = vmatpush1.msra.mxu0 0.0
    %1943 = vmatprep.subr.mxu0 0.0
    %1944 = vmatpush1.msra.mxu0 0.0
    %1945 = vmatprep.subr.mxu0 0.0
    %1946 = vmatpush1.msra.mxu0 0.0
    %1947 = vmatprep.subr.mxu0 0.0
    %1948 = vmatpush1.msra.mxu0 0.0
    %1949 = vmatprep.subr.mxu0 0.0
    %1950 = vmatpush1.msra.mxu0 0.0
    %1951 = vmatprep.subr.mxu0 0.0
    %1952 = vmatpush1.msra.mxu0 0.0
    %1953 = vmatprep.subr.mxu0 0.0
    %1954 = vmatpush1.msra.mxu0 0.0
    %1955 = vmatprep.subr.mxu0 0.0
    %1956 = vmatpush1.msra.mxu0 0.0
    %1957 = vmatprep.subr.mxu0 0.0
    %1958 = vmatpush1.msra.mxu0 0.0
    %1959 = vmatprep.subr.mxu0 0.0
    %1960 = vmatpush1.msra.mxu0 0.0
    %1961 = vmatprep.subr.mxu0 0.0
    %1962 = vmatpush1.msra.mxu0 0.0
    %1963 = vmatprep.subr.mxu0 0.0
    %1964 = vmatpush1.msra.mxu0 0.0
    %1965 = vmatprep.subr.mxu0 0.0
    %1966 = vmatpush1.msra.mxu0 0.0
    %1967 = vmatprep.subr.mxu0 0.0
    %1968 = vmatpush1.msra.mxu0 0.0
    %1969 = vmatprep.subr.mxu0 0.0
    %1970 = vmatpush1.msra.mxu0 0.0
    %1971 = vmatprep.subr.mxu0 0.0
    %1972 = vmatpush1.msra.mxu0 0.0
    %1973 = vmatprep.subr.mxu0 0.0
    %1974 = vmatpush1.msra.mxu0 0.0
    %1975 = vmatprep.subr.mxu0 0.0
    %1976 = vmatpush1.msra.mxu0 0.0
    %1977 = vmatprep.subr.mxu0 0.0
    %1978 = vmatpush1.msra.mxu0 0.0
    %1979 = vmatprep.subr.mxu0 0.0
    %1980 = vmatpush1.msra.mxu0 0.0
    %1981 = vmatprep.mubr.f32.mxu0 0.0
    %1982 = vmatmul.mubr.f32.gmra.mrb[0].mxu0 %v1915
    %v1983 = vpop.f32.mrb[0].mxu0
    %v1984 = vadd.f32 0.0, %v1983
    %v1985 = vpop.f32.mrb[0].mxu0
    %1986 = vdwg.mxu0
    %v1987 = vadd.f32 %v1914, %v1984
    %v1988 = vxor.u32 %v1987, 2147483648
    %v1989 = vmul.f32 %v1988, 1.442695
    %v1990 = vpow.pop %v1989
    %v1991 = vadd.f32 %v1990, 1.0
    %v1992 = vrcp.pop %v1991
    %v1993 = vmul.f32 1.0, %v1992
    %v1994 = vtanh.pop %v1987
    %v1995 = vmul.f32 %v1993, %v1797
    %1997 = vrot.lane.b32.xlu0 %v1994, 64
    %v1998 = vpop.permute.xlu0 %1997
    %v2000 = vmul.f32 %v1993, %v1998
    %2002 = vrot.lane.b32.xlu0 %v2000, 32
    %v2003 = vpop.permute.xlu0 %2002
    %v2005 = vadd.f32 %v1995, %v2003
    %v2006 = vtanh.pop %v2005
    %2008 = vrot.lane.b32.xlu0 %v2006, 64
    %v2009 = vpop.permute.xlu0 %2008
    %v2011 = vmul.f32 %v1993, %v2009
    %2013 = vrot.lane.b32.xlu0 %v2011, 32
    %v2014 = vpop.permute.xlu0 %2013
    %2016 = vst.msk [vmem:[%s130] sm:$0x3] %vm451, %v2014
    %2017 = vst.msk [vmem:[#allocation4] sm:$0x3] %vm451, %v1910
    %2019 = vrot.lane.b32.xlu0 %v1901, 96
    %v2020 = vpop.permute.xlu0 %2019
    %2022 = vst.msk [vmem:[#allocation5] sm:$0x3] %vm451, %v2020
    %2023 = vst.msk [vmem:[#allocation6] sm:$0x3] %vm451, %v2014
    %2025 = vrot.lane.b32.xlu0 %v2005, 96
    %v2026 = vpop.permute.xlu0 %2025
    %2028 = vst.msk [vmem:[#allocation7] sm:$0x3] %vm451, %v2026
    %s2029 = ssub.s32 0, 0
    %s2030 = smul.u32 8, %s2029
    %p2031 = scmp.lt.s32.totalorder %s2030, 7
    %s2032 = scalar_select %p2031, %s2030, 7
    %s2033 = smul.addr %s2032, 2
    %s2034 = scalar_lea.vmem %s9, %s2033
    // Predicated region
    $region62: #{rnn_sequential_encoder.1} parent=1 // pred_check
      _
    $region63: #{rnn_sequential_encoder.1} parent=1 // pred_check_branch
      %2036 = sbr.rel (0) target = $region65
    $region64: #{rnn_sequential_encoder.1} parent=1 // pred_region
      _
    $region65: #{rnn_sequential_encoder.1} parent=1 // pred_fallthru
      _
    // Predicated region
    $region66: #{rnn_sequential_encoder.1} parent=1 // pred_check
      _
    $region67: #{rnn_sequential_encoder.1} parent=1 // pred_check_branch
      %2038 = sbr.rel (0) target = $region69
    $region68: #{rnn_sequential_encoder.1} parent=1 // pred_region
      %s2039 = ssub.s32 0, 0
      %s2040 = smul.u32 8, %s2039
    $region69: #{rnn_sequential_encoder.1} parent=1 // pred_fallthru
      _
    // Predicated region
    $region70: #{rnn_sequential_encoder.1} parent=1 // pred_check
      _
    $region71: #{rnn_sequential_encoder.1} parent=1 // pred_check_branch
      %2042 = sbr.rel (0) target = $region73
    $region72: #{rnn_sequential_encoder.1} parent=1 // pred_region
      _
    $region73: #{rnn_sequential_encoder.1} parent=1 // pred_fallthru
      _
    // Predicated region
    $region74: #{rnn_sequential_encoder.1} parent=1 // pred_check
      _
    $region75: #{rnn_sequential_encoder.1} parent=1 // pred_check_branch
      %2044 = sbr.rel (0) target = $region77
    $region76: #{rnn_sequential_encoder.1} parent=1 // pred_region
      %s2045 = ssub.s32 0, 0
      %s2046 = smul.u32 8, %s2045
      %p2047 = scmp.lt.s32.totalorder %s2046, 7
      %s2048 = scalar_select %p2047, %s2046, 7
      %s2049 = smul.addr %s2048, 2
      %s2050 = scalar_lea.vmem %s9, %s2049
    $region77: #{rnn_sequential_encoder.1} parent=1 // pred_fallthru
      _
    %2051 = vsyncpa [#allocation9], 1
    %2052 = vsyncpa [#allocation11], 1
    %2053 = vsyncpa [#allocation14], 1
    %2054 = vsyncpa [#allocation17], 1

</llo_original>
